<compile_context>
chip_gen: v7x
topology: tpu7x:2x2x1
jax: 0.10.0
libtpu: 0.0.40
codegen_flags: <defaults>
</compile_context>

<pallas_src>
import functools

import jax
import jax.numpy as jnp
from jax import lax
from jax.experimental import pallas as pl
from jax.experimental.pallas import tpu as pltpu

EPSILON = 0.0005
RADIUS = 3
STRIDE = 3
BCE_WEIGHT = 0.5
WITH_LOGITS = True


def _round_up(x, m):
    return (x + m - 1) // m * m


def _max_pool3d(x, k, s, p):
    return lax.reduce_window(
        x, -jnp.inf, lax.max,
        window_dimensions=(1, 1, k, k, k),
        window_strides=(1, 1, s, s, s),
        padding=((0, 0), (0, 0), (p, p), (p, p), (p, p)))


# ---------------------------------------------------------------------------
# Pallas kernel: fused unfold + centered Gram for a block of bblk (b,c) slices.
#
#   mask_ref : (1, Lz)       1.0 at valid region-origin positions, else 0.0
#   y_ref    : (bblk, Lext)  flattened, zero-padded downsampled target slices
#   p_ref    : (bblk, Lext)  flattened, zero-padded downsampled pred slices
#   out_ref  : (TVP, bblk*TVP) lane-dense slab of per-slice Gram matrices
#
# Z rows are interleaved (y_off0, p_off0, y_off1, p_off1, ...); row 2V holds the
# mask so row/col sums come out of the single MXU matmul; remaining rows are 0.
# ---------------------------------------------------------------------------
def _rmi_gram_kernel(mask_ref, y_ref, p_ref, out_ref, *, shifts, two_v, inv_l):
    mask = mask_ref[...]                       # (1, Lz)
    lz = mask.shape[1]
    bblk = y_ref.shape[0]
    tvp = out_ref.shape[0]
    pad_after = tvp - (two_v + 1)

    grams = []
    for b in range(bblk):                      # static unroll over batched slices
        yp = jnp.concatenate([y_ref[b:b + 1, :], p_ref[b:b + 1, :]], axis=0)  # (2, Lext)
        # In-kernel unfold: each region-vector row is a static lane-offset slice
        # of the flat volume, masked to the valid region-origin positions.
        rows = [mask * yp[:, off:off + lz] for off in shifts]                 # 27 x (2, Lz)
        rows.append(mask)                                                     # sum row
        if pad_after > 0:
            rows.append(jnp.zeros((pad_after, lz), jnp.float32))
        z = jnp.concatenate(rows, axis=0)                                     # (TVP, Lz)

        # Single MXU matmul gives the uncentered Gram AND (via the mask row)
        # the per-row sums needed for the centering correction.
        g = lax.dot_general(z, z, (((1,), (1,)), ((), ())),
                            preferred_element_type=jnp.float32)               # (TVP, TVP)
        s_col = g[:, two_v:two_v + 1]                                         # (TVP, 1)
        s_row = g[two_v:two_v + 1, :]                                         # (1, TVP)
        grams.append(g - (s_col * s_row) * inv_l)                             # centered

    out_ref[...] = jnp.concatenate(grams, axis=1)                             # (TVP, bblk*TVP)


def rmi_covariances_pallas(y_ds, p_ds, radius=RADIUS, bblk=2):
    """Returns centered (y_cov, p_cov, y_p_cov), each (N, C, V, V), V=radius**3."""
    n, c, dd, hd, wd = y_ds.shape
    v = radius ** 3
    two_v = 2 * v
    ld, lh, lw = dd - radius + 1, hd - radius + 1, wd - radius + 1
    l_count = ld * lh * lw                       # number of regions
    lfull = dd * hd * wd
    lz = _round_up(lfull, 128)                   # lane-aligned flat length
    maxoff = (radius - 1) * (hd * wd + wd + 1)   # largest flat shift
    lext = _round_up(lz + maxoff, 128)           # input length incl. slice slack
    tvp = _round_up(two_v + 1, 64)               # padded Z rows (54+mask -> 64)

    nc = n * c
    bblk = max(1, min(bblk, nc))
    nc_pad = _round_up(nc, bblk)
    nblk = nc_pad // bblk

    # flat offsets for the radius^3 region-vector components (kd, kh, kw order)
    shifts = tuple(kd * hd * wd + kh * wd + kw
                   for kd in range(radius) for kh in range(radius) for kw in range(radius))

    # validity mask over flattened (lane-padded) positions: region origins only
    pos = jnp.arange(lz, dtype=jnp.int32)
    di = pos // (hd * wd)
    hj = (pos // wd) % hd
    wk = pos % wd
    mask = ((pos < lfull) & (di < ld) & (hj < lh) & (wk < lw)).astype(jnp.float32)[None, :]

    def prep(x):  # (N,C,Dd,Hd,Wd) -> (nblk, bblk, Lext), zero padded
        xf = x.reshape(nc, lfull).astype(jnp.float32)
        xf = jnp.pad(xf, ((0, nc_pad - nc), (0, lext - lfull)))
        return xf.reshape(nblk, bblk, lext)

    yf = prep(y_ds)
    pf = prep(p_ds)

    kernel = functools.partial(_rmi_gram_kernel, shifts=shifts, two_v=two_v,
                               inv_l=1.0 / float(l_count))

    g_slab = pl.pallas_call(
        kernel,
        out_shape=jax.ShapeDtypeStruct((nblk, tvp, bblk * tvp), jnp.float32),
        grid=(nblk,),
        in_specs=[
            pl.BlockSpec((1, lz), lambda i: (0, 0)),               # mask (resident)
            pl.BlockSpec((None, bblk, lext), lambda i: (i, 0, 0)),  # y slices
            pl.BlockSpec((None, bblk, lext), lambda i: (i, 0, 0)),  # p slices
        ],
        out_specs=pl.BlockSpec((None, tvp, bblk * tvp), lambda i: (i, 0, 0)),
        compiler_params=pltpu.CompilerParams(
            dimension_semantics=("parallel",)),                    # megacore / 2-TC shardable
    )(mask, yf, pf)

    # de-interleave the lane-dense slab back to per-slice Gram matrices
    g = g_slab.reshape(nblk, tvp, bblk, tvp).transpose(0, 2, 1, 3)
    g = g.reshape(nc_pad, tvp, tvp)[:nc].reshape(n, c, tvp, tvp)
    gv = g[..., :two_v, :two_v]                  # valid (interleaved y/p) block
    y_cov = gv[..., 0::2, 0::2]
    p_cov = gv[..., 1::2, 1::2]
    y_p_cov = gv[..., 0::2, 1::2]
    return y_cov, p_cov, y_p_cov


# ---------------------------------------------------------------------------
# Full forward pass (matches RMILoss_3D.forward return value).
# ---------------------------------------------------------------------------
def rmi_loss_3d(pred, target, with_logits=WITH_LOGITS, radius=RADIUS,
                stride=STRIDE, bce_weight=BCE_WEIGHT, epsilon=EPSILON, bblk=2):
    # NOTE: reference forward() computes BCE(pred, target) * bce_weight but never
    # adds it to the returned loss -> intentionally omitted (dead code).
    if with_logits:
        pred = jax.nn.sigmoid(pred)

    v = radius ** 3
    y_ds = _max_pool3d(target, stride, stride, stride // 2)
    p_ds = _max_pool3d(pred, stride, stride, stride // 2)

    y_cov, p_cov, y_p_cov = rmi_covariances_pallas(y_ds, p_ds, radius=radius, bblk=bblk)

    eps = epsilon * jnp.eye(v, dtype=jnp.float32)
    # m = y_cov - y_p_cov @ inv(p_cov + eps) @ y_p_cov^T   (solve instead of inv)
    x = jnp.linalg.solve(p_cov + eps, jnp.swapaxes(y_p_cov, -2, -1))
    m = y_cov - y_p_cov @ x
    m = 0.5 * (m + jnp.swapaxes(m, -2, -1))      # symmetrize for f32 Cholesky stability

    # log_trace: 2 * sum(log(diag(chol(m + eps)) + 1e-8))
    chol = jnp.linalg.cholesky(m + eps)
    diag = jnp.diagonal(chol, axis1=-2, axis2=-1)
    rmi = 0.5 * (2.0 * jnp.sum(jnp.log(diag + 1e-8), axis=-1)) / float(v)  # (N, C)
    rmi = jnp.mean(jnp.sum(rmi, axis=1), axis=0)                            # scalar
    return rmi * (1.0 - bce_weight)


# ---------------------------------------------------------------------------
# Pure-XLA reference for the covariance path (used only for validation).
# ---------------------------------------------------------------------------
def _covariances_reference(y_ds, p_ds, radius):
    def unfold(x):
        n_, c_, d_, h_, w_ = x.shape
        ld, lh, lw = d_ - radius + 1, h_ - radius + 1, w_ - radius + 1
        pats = [x[:, :, kd:kd + ld, kh:kh + lh, kw:kw + lw]
                for kd in range(radius) for kh in range(radius) for kw in range(radius)]
        return jnp.stack(pats, axis=2).reshape(n_, c_, radius ** 3, ld * lh * lw)

    hp = lax.Precision.HIGHEST
    y = unfold(y_ds.astype(jnp.float32))
    p = unfold(p_ds.astype(jnp.float32))
    y = y - y.mean(axis=-1, keepdims=True)
    p = p - p.mean(axis=-1, keepdims=True)
    y_cov = jnp.einsum('ncvl,ncwl->ncvw', y, y, precision=hp)
    p_cov = jnp.einsum('ncvl,ncwl->ncvw', p, p, precision=hp)
    y_p_cov = jnp.einsum('ncvl,ncwl->ncvw', y, p, precision=hp)
    return y_cov, p_cov, y_p_cov


if __name__ == "__main__":
    key = jax.random.PRNGKey(0)
    k1, k2 = jax.random.split(key)
    # small 3D volumes: N=2, C=2, D=H=W=15 -> downsampled 5^3 -> V=27, L=27
    N, C, D, H, W = 2, 2, 15, 15, 15
    pred = jax.random.normal(k1, (N, C, D, H, W), dtype=jnp.float32)      # logits
    target = (jax.random.uniform(k2, (N, C, D, H, W)) > 0.5).astype(jnp.float32)

    loss = jax.jit(rmi_loss_3d)(pred, target)
    jax.block_until_ready(loss)
    assert loss.shape == () and bool(jnp.isfinite(loss))

    # sanity-check the Pallas covariance path against the plain-XLA reference
    p_sig = jax.nn.sigmoid(pred)
    y_ds = _max_pool3d(target, STRIDE, STRIDE, STRIDE // 2)
    p_ds = _max_pool3d(p_sig, STRIDE, STRIDE, STRIDE // 2)
    covs_kernel = jax.jit(rmi_covariances_pallas)(y_ds, p_ds)
    covs_ref = _covariances_reference(y_ds, p_ds, RADIUS)
    for a, b in zip(covs_kernel, covs_ref):
        err = float(jnp.max(jnp.abs(a - b)))
        scale = float(jnp.max(jnp.abs(b)))
        assert err <= 0.02 * scale + 0.02, (err, scale)

    print("KERNEL_OK")
</pallas_src>

<mosaic_0001>
module attributes {stable_mosaic.version = 11 : i64} {
  func.func @_rmi_gram_kernel(%arg0: i32, %arg1: memref<1x128xf32, #tpu.memory_space<vmem>>, %arg2: memref<1x2x256xf32, #tpu.memory_space<vmem>>, %arg3: memref<1x2x256xf32, #tpu.memory_space<vmem>>, %arg4: memref<1x64x128xf32, #tpu.memory_space<vmem>>) attributes {dimension_semantics = [#tpu.dimension_semantics<parallel>], iteration_bounds = array<i64: 2>, scalar_prefetch = 0 : i64, scratch_operands = 0 : i64, tpu.core_type = #tpu.core_type<tc>, window_params = [{pipeline_mode = #tpu.pipeline_mode<synchronous>, transform_indices = @transform_0, window_bounds = array<i64: 1, 128>}, {transform_indices = @transform_1, window_bounds = array<i64: 1, 2, 256>}, {transform_indices = @transform_2, window_bounds = array<i64: 1, 2, 256>}, {transform_indices = @transform_3, window_bounds = array<i64: 1, 64, 128>}]} {
    %c0 = arith.constant 0 : index
    %c0_0 = arith.constant 0 : index
    %0 = vector.load %arg1[%c0, %c0_0] : memref<1x128xf32, #tpu.memory_space<vmem>>, vector<1x128xf32>
    %c0_1 = arith.constant 0 : index
    %c0_2 = arith.constant 0 : index
    %c0_3 = arith.constant 0 : index
    %1 = vector.load %arg2[%c0_1, %c0_2, %c0_3] : memref<1x2x256xf32, #tpu.memory_space<vmem>>, vector<1x1x256xf32>
    %2 = vector.shape_cast %1 : vector<1x1x256xf32> to vector<1x256xf32>
    %c0_4 = arith.constant 0 : index
    %c0_5 = arith.constant 0 : index
    %c0_6 = arith.constant 0 : index
    %3 = vector.load %arg3[%c0_4, %c0_5, %c0_6] : memref<1x2x256xf32, #tpu.memory_space<vmem>>, vector<1x1x256xf32>
    %4 = vector.shape_cast %3 : vector<1x1x256xf32> to vector<1x256xf32>
    %5 = tpu.concatenate %2, %4 in 0 : vector<1x256xf32>, vector<1x256xf32> -> vector<2x256xf32>
    %6 = vector.extract_strided_slice %5 {offsets = [0, 0], sizes = [2, 128], strides = [1, 1]} : vector<2x256xf32> to vector<2x128xf32>
    %7 = vector.broadcast %0 : vector<1x128xf32> to vector<2x128xf32>
    %8 = arith.mulf %7, %6 : vector<2x128xf32>
    %9 = vector.extract_strided_slice %5 {offsets = [0, 1], sizes = [2, 128], strides = [1, 1]} : vector<2x256xf32> to vector<2x128xf32>
    %10 = vector.broadcast %0 : vector<1x128xf32> to vector<2x128xf32>
    %11 = arith.mulf %10, %9 : vector<2x128xf32>
    %12 = vector.extract_strided_slice %5 {offsets = [0, 2], sizes = [2, 128], strides = [1, 1]} : vector<2x256xf32> to vector<2x128xf32>
    %13 = vector.broadcast %0 : vector<1x128xf32> to vector<2x128xf32>
    %14 = arith.mulf %13, %12 : vector<2x128xf32>
    %15 = vector.extract_strided_slice %5 {offsets = [0, 5], sizes = [2, 128], strides = [1, 1]} : vector<2x256xf32> to vector<2x128xf32>
    %16 = vector.broadcast %0 : vector<1x128xf32> to vector<2x128xf32>
    %17 = arith.mulf %16, %15 : vector<2x128xf32>
    %18 = vector.extract_strided_slice %5 {offsets = [0, 6], sizes = [2, 128], strides = [1, 1]} : vector<2x256xf32> to vector<2x128xf32>
    %19 = vector.broadcast %0 : vector<1x128xf32> to vector<2x128xf32>
    %20 = arith.mulf %19, %18 : vector<2x128xf32>
    %21 = vector.extract_strided_slice %5 {offsets = [0, 7], sizes = [2, 128], strides = [1, 1]} : vector<2x256xf32> to vector<2x128xf32>
    %22 = vector.broadcast %0 : vector<1x128xf32> to vector<2x128xf32>
    %23 = arith.mulf %22, %21 : vector<2x128xf32>
    %24 = vector.extract_strided_slice %5 {offsets = [0, 10], sizes = [2, 128], strides = [1, 1]} : vector<2x256xf32> to vector<2x128xf32>
    %25 = vector.broadcast %0 : vector<1x128xf32> to vector<2x128xf32>
    %26 = arith.mulf %25, %24 : vector<2x128xf32>
    %27 = vector.extract_strided_slice %5 {offsets = [0, 11], sizes = [2, 128], strides = [1, 1]} : vector<2x256xf32> to vector<2x128xf32>
    %28 = vector.broadcast %0 : vector<1x128xf32> to vector<2x128xf32>
    %29 = arith.mulf %28, %27 : vector<2x128xf32>
    %30 = vector.extract_strided_slice %5 {offsets = [0, 12], sizes = [2, 128], strides = [1, 1]} : vector<2x256xf32> to vector<2x128xf32>
    %31 = vector.broadcast %0 : vector<1x128xf32> to vector<2x128xf32>
    %32 = arith.mulf %31, %30 : vector<2x128xf32>
    %33 = vector.extract_strided_slice %5 {offsets = [0, 25], sizes = [2, 128], strides = [1, 1]} : vector<2x256xf32> to vector<2x128xf32>
    %34 = vector.broadcast %0 : vector<1x128xf32> to vector<2x128xf32>
    %35 = arith.mulf %34, %33 : vector<2x128xf32>
    %36 = vector.extract_strided_slice %5 {offsets = [0, 26], sizes = [2, 128], strides = [1, 1]} : vector<2x256xf32> to vector<2x128xf32>
    %37 = vector.broadcast %0 : vector<1x128xf32> to vector<2x128xf32>
    %38 = arith.mulf %37, %36 : vector<2x128xf32>
    %39 = vector.extract_strided_slice %5 {offsets = [0, 27], sizes = [2, 128], strides = [1, 1]} : vector<2x256xf32> to vector<2x128xf32>
    %40 = vector.broadcast %0 : vector<1x128xf32> to vector<2x128xf32>
    %41 = arith.mulf %40, %39 : vector<2x128xf32>
    %42 = vector.extract_strided_slice %5 {offsets = [0, 30], sizes = [2, 128], strides = [1, 1]} : vector<2x256xf32> to vector<2x128xf32>
    %43 = vector.broadcast %0 : vector<1x128xf32> to vector<2x128xf32>
    %44 = arith.mulf %43, %42 : vector<2x128xf32>
    %45 = vector.extract_strided_slice %5 {offsets = [0, 31], sizes = [2, 128], strides = [1, 1]} : vector<2x256xf32> to vector<2x128xf32>
    %46 = vector.broadcast %0 : vector<1x128xf32> to vector<2x128xf32>
    %47 = arith.mulf %46, %45 : vector<2x128xf32>
    %48 = vector.extract_strided_slice %5 {offsets = [0, 32], sizes = [2, 128], strides = [1, 1]} : vector<2x256xf32> to vector<2x128xf32>
    %49 = vector.broadcast %0 : vector<1x128xf32> to vector<2x128xf32>
    %50 = arith.mulf %49, %48 : vector<2x128xf32>
    %51 = vector.extract_strided_slice %5 {offsets = [0, 35], sizes = [2, 128], strides = [1, 1]} : vector<2x256xf32> to vector<2x128xf32>
    %52 = vector.broadcast %0 : vector<1x128xf32> to vector<2x128xf32>
    %53 = arith.mulf %52, %51 : vector<2x128xf32>
    %54 = vector.extract_strided_slice %5 {offsets = [0, 36], sizes = [2, 128], strides = [1, 1]} : vector<2x256xf32> to vector<2x128xf32>
    %55 = vector.broadcast %0 : vector<1x128xf32> to vector<2x128xf32>
    %56 = arith.mulf %55, %54 : vector<2x128xf32>
    %57 = vector.extract_strided_slice %5 {offsets = [0, 37], sizes = [2, 128], strides = [1, 1]} : vector<2x256xf32> to vector<2x128xf32>
    %58 = vector.broadcast %0 : vector<1x128xf32> to vector<2x128xf32>
    %59 = arith.mulf %58, %57 : vector<2x128xf32>
    %60 = vector.extract_strided_slice %5 {offsets = [0, 50], sizes = [2, 128], strides = [1, 1]} : vector<2x256xf32> to vector<2x128xf32>
    %61 = vector.broadcast %0 : vector<1x128xf32> to vector<2x128xf32>
    %62 = arith.mulf %61, %60 : vector<2x128xf32>
    %63 = vector.extract_strided_slice %5 {offsets = [0, 51], sizes = [2, 128], strides = [1, 1]} : vector<2x256xf32> to vector<2x128xf32>
    %64 = vector.broadcast %0 : vector<1x128xf32> to vector<2x128xf32>
    %65 = arith.mulf %64, %63 : vector<2x128xf32>
    %66 = vector.extract_strided_slice %5 {offsets = [0, 52], sizes = [2, 128], strides = [1, 1]} : vector<2x256xf32> to vector<2x128xf32>
    %67 = vector.broadcast %0 : vector<1x128xf32> to vector<2x128xf32>
    %68 = arith.mulf %67, %66 : vector<2x128xf32>
    %69 = vector.extract_strided_slice %5 {offsets = [0, 55], sizes = [2, 128], strides = [1, 1]} : vector<2x256xf32> to vector<2x128xf32>
    %70 = vector.broadcast %0 : vector<1x128xf32> to vector<2x128xf32>
    %71 = arith.mulf %70, %69 : vector<2x128xf32>
    %72 = vector.extract_strided_slice %5 {offsets = [0, 56], sizes = [2, 128], strides = [1, 1]} : vector<2x256xf32> to vector<2x128xf32>
    %73 = vector.broadcast %0 : vector<1x128xf32> to vector<2x128xf32>
    %74 = arith.mulf %73, %72 : vector<2x128xf32>
    %75 = vector.extract_strided_slice %5 {offsets = [0, 57], sizes = [2, 128], strides = [1, 1]} : vector<2x256xf32> to vector<2x128xf32>
    %76 = vector.broadcast %0 : vector<1x128xf32> to vector<2x128xf32>
    %77 = arith.mulf %76, %75 : vector<2x128xf32>
    %78 = vector.extract_strided_slice %5 {offsets = [0, 60], sizes = [2, 128], strides = [1, 1]} : vector<2x256xf32> to vector<2x128xf32>
    %79 = vector.broadcast %0 : vector<1x128xf32> to vector<2x128xf32>
    %80 = arith.mulf %79, %78 : vector<2x128xf32>
    %81 = vector.extract_strided_slice %5 {offsets = [0, 61], sizes = [2, 128], strides = [1, 1]} : vector<2x256xf32> to vector<2x128xf32>
    %82 = vector.broadcast %0 : vector<1x128xf32> to vector<2x128xf32>
    %83 = arith.mulf %82, %81 : vector<2x128xf32>
    %84 = vector.extract_strided_slice %5 {offsets = [0, 62], sizes = [2, 128], strides = [1, 1]} : vector<2x256xf32> to vector<2x128xf32>
    %85 = vector.broadcast %0 : vector<1x128xf32> to vector<2x128xf32>
    %86 = arith.mulf %85, %84 : vector<2x128xf32>
    %cst = arith.constant 0.000000e+00 : f32
    %87 = vector.broadcast %cst : f32 to vector<9x128xf32>
    %88 = tpu.concatenate %8, %11, %14, %17, %20, %23, %26, %29, %32, %35, %38, %41, %44, %47, %50, %53 in 0 : vector<2x128xf32>, vector<2x128xf32>, vector<2x128xf32>, vector<2x128xf32>, vector<2x128xf32>, vector<2x128xf32>, vector<2x128xf32>, vector<2x128xf32>, vector<2x128xf32>, vector<2x128xf32>, vector<2x128xf32>, vector<2x128xf32>, vector<2x128xf32>, vector<2x128xf32>, vector<2x128xf32>, vector<2x128xf32> -> vector<32x128xf32>
    %89 = tpu.concatenate %56, %59, %62, %65, %68, %71, %74, %77, %80, %83, %86, %0, %87 in 0 : vector<2x128xf32>, vector<2x128xf32>, vector<2x128xf32>, vector<2x128xf32>, vector<2x128xf32>, vector<2x128xf32>, vector<2x128xf32>, vector<2x128xf32>, vector<2x128xf32>, vector<2x128xf32>, vector<2x128xf32>, vector<1x128xf32>, vector<9x128xf32> -> vector<32x128xf32>
    %90 = tpu.concatenate %88, %89 in 0 : vector<32x128xf32>, vector<32x128xf32> -> vector<64x128xf32>
    %cst_7 = arith.constant dense<0.000000e+00> : vector<64x64xf32>
    %91 = tpu.matmul %90, %90, %cst_7 {dimension_numbers = #tpu.dot_dimension_numbers<[1], [1], [0], [0], [0, 0, 1, 0], [], []>} : vector<64x128xf32>, vector<64x128xf32>, vector<64x64xf32> -> vector<64x64xf32>
    %92 = vector.extract_strided_slice %91 {offsets = [0, 54], sizes = [64, 1], strides = [1, 1]} : vector<64x64xf32> to vector<64x1xf32>
    %93 = vector.extract_strided_slice %91 {offsets = [54, 0], sizes = [1, 64], strides = [1, 1]} : vector<64x64xf32> to vector<1x64xf32>
    %94 = vector.broadcast %92 : vector<64x1xf32> to vector<64x64xf32>
    %95 = vector.broadcast %93 : vector<1x64xf32> to vector<64x64xf32>
    %96 = arith.mulf %94, %95 : vector<64x64xf32>
    %cst_8 = arith.constant 0.0370370373 : f32
    %97 = vector.broadcast %cst_8 : f32 to vector<64x64xf32>
    %98 = arith.mulf %96, %97 : vector<64x64xf32>
    %99 = arith.subf %91, %98 : vector<64x64xf32>
    %c0_9 = arith.constant 0 : index
    %c1 = arith.constant 1 : index
    %c0_10 = arith.constant 0 : index
    %100 = vector.load %arg2[%c0_9, %c1, %c0_10] : memref<1x2x256xf32, #tpu.memory_space<vmem>>, vector<1x1x256xf32>
    %101 = vector.shape_cast %100 : vector<1x1x256xf32> to vector<1x256xf32>
    %c0_11 = arith.constant 0 : index
    %c1_12 = arith.constant 1 : index
    %c0_13 = arith.constant 0 : index
    %102 = vector.load %arg3[%c0_11, %c1_12, %c0_13] : memref<1x2x256xf32, #tpu.memory_space<vmem>>, vector<1x1x256xf32>
    %103 = vector.shape_cast %102 : vector<1x1x256xf32> to vector<1x256xf32>
    %104 = tpu.concatenate %101, %103 in 0 : vector<1x256xf32>, vector<1x256xf32> -> vector<2x256xf32>
    %105 = vector.extract_strided_slice %104 {offsets = [0, 0], sizes = [2, 128], strides = [1, 1]} : vector<2x256xf32> to vector<2x128xf32>
    %106 = vector.broadcast %0 : vector<1x128xf32> to vector<2x128xf32>
    %107 = arith.mulf %106, %105 : vector<2x128xf32>
    %108 = vector.extract_strided_slice %104 {offsets = [0, 1], sizes = [2, 128], strides = [1, 1]} : vector<2x256xf32> to vector<2x128xf32>
    %109 = vector.broadcast %0 : vector<1x128xf32> to vector<2x128xf32>
    %110 = arith.mulf %109, %108 : vector<2x128xf32>
    %111 = vector.extract_strided_slice %104 {offsets = [0, 2], sizes = [2, 128], strides = [1, 1]} : vector<2x256xf32> to vector<2x128xf32>
    %112 = vector.broadcast %0 : vector<1x128xf32> to vector<2x128xf32>
    %113 = arith.mulf %112, %111 : vector<2x128xf32>
    %114 = vector.extract_strided_slice %104 {offsets = [0, 5], sizes = [2, 128], strides = [1, 1]} : vector<2x256xf32> to vector<2x128xf32>
    %115 = vector.broadcast %0 : vector<1x128xf32> to vector<2x128xf32>
    %116 = arith.mulf %115, %114 : vector<2x128xf32>
    %117 = vector.extract_strided_slice %104 {offsets = [0, 6], sizes = [2, 128], strides = [1, 1]} : vector<2x256xf32> to vector<2x128xf32>
    %118 = vector.broadcast %0 : vector<1x128xf32> to vector<2x128xf32>
    %119 = arith.mulf %118, %117 : vector<2x128xf32>
    %120 = vector.extract_strided_slice %104 {offsets = [0, 7], sizes = [2, 128], strides = [1, 1]} : vector<2x256xf32> to vector<2x128xf32>
    %121 = vector.broadcast %0 : vector<1x128xf32> to vector<2x128xf32>
    %122 = arith.mulf %121, %120 : vector<2x128xf32>
    %123 = vector.extract_strided_slice %104 {offsets = [0, 10], sizes = [2, 128], strides = [1, 1]} : vector<2x256xf32> to vector<2x128xf32>
    %124 = vector.broadcast %0 : vector<1x128xf32> to vector<2x128xf32>
    %125 = arith.mulf %124, %123 : vector<2x128xf32>
    %126 = vector.extract_strided_slice %104 {offsets = [0, 11], sizes = [2, 128], strides = [1, 1]} : vector<2x256xf32> to vector<2x128xf32>
    %127 = vector.broadcast %0 : vector<1x128xf32> to vector<2x128xf32>
    %128 = arith.mulf %127, %126 : vector<2x128xf32>
    %129 = vector.extract_strided_slice %104 {offsets = [0, 12], sizes = [2, 128], strides = [1, 1]} : vector<2x256xf32> to vector<2x128xf32>
    %130 = vector.broadcast %0 : vector<1x128xf32> to vector<2x128xf32>
    %131 = arith.mulf %130, %129 : vector<2x128xf32>
    %132 = vector.extract_strided_slice %104 {offsets = [0, 25], sizes = [2, 128], strides = [1, 1]} : vector<2x256xf32> to vector<2x128xf32>
    %133 = vector.broadcast %0 : vector<1x128xf32> to vector<2x128xf32>
    %134 = arith.mulf %133, %132 : vector<2x128xf32>
    %135 = vector.extract_strided_slice %104 {offsets = [0, 26], sizes = [2, 128], strides = [1, 1]} : vector<2x256xf32> to vector<2x128xf32>
    %136 = vector.broadcast %0 : vector<1x128xf32> to vector<2x128xf32>
    %137 = arith.mulf %136, %135 : vector<2x128xf32>
    %138 = vector.extract_strided_slice %104 {offsets = [0, 27], sizes = [2, 128], strides = [1, 1]} : vector<2x256xf32> to vector<2x128xf32>
    %139 = vector.broadcast %0 : vector<1x128xf32> to vector<2x128xf32>
    %140 = arith.mulf %139, %138 : vector<2x128xf32>
    %141 = vector.extract_strided_slice %104 {offsets = [0, 30], sizes = [2, 128], strides = [1, 1]} : vector<2x256xf32> to vector<2x128xf32>
    %142 = vector.broadcast %0 : vector<1x128xf32> to vector<2x128xf32>
    %143 = arith.mulf %142, %141 : vector<2x128xf32>
    %144 = vector.extract_strided_slice %104 {offsets = [0, 31], sizes = [2, 128], strides = [1, 1]} : vector<2x256xf32> to vector<2x128xf32>
    %145 = vector.broadcast %0 : vector<1x128xf32> to vector<2x128xf32>
    %146 = arith.mulf %145, %144 : vector<2x128xf32>
    %147 = vector.extract_strided_slice %104 {offsets = [0, 32], sizes = [2, 128], strides = [1, 1]} : vector<2x256xf32> to vector<2x128xf32>
    %148 = vector.broadcast %0 : vector<1x128xf32> to vector<2x128xf32>
    %149 = arith.mulf %148, %147 : vector<2x128xf32>
    %150 = vector.extract_strided_slice %104 {offsets = [0, 35], sizes = [2, 128], strides = [1, 1]} : vector<2x256xf32> to vector<2x128xf32>
    %151 = vector.broadcast %0 : vector<1x128xf32> to vector<2x128xf32>
    %152 = arith.mulf %151, %150 : vector<2x128xf32>
    %153 = vector.extract_strided_slice %104 {offsets = [0, 36], sizes = [2, 128], strides = [1, 1]} : vector<2x256xf32> to vector<2x128xf32>
    %154 = vector.broadcast %0 : vector<1x128xf32> to vector<2x128xf32>
    %155 = arith.mulf %154, %153 : vector<2x128xf32>
    %156 = vector.extract_strided_slice %104 {offsets = [0, 37], sizes = [2, 128], strides = [1, 1]} : vector<2x256xf32> to vector<2x128xf32>
    %157 = vector.broadcast %0 : vector<1x128xf32> to vector<2x128xf32>
    %158 = arith.mulf %157, %156 : vector<2x128xf32>
    %159 = vector.extract_strided_slice %104 {offsets = [0, 50], sizes = [2, 128], strides = [1, 1]} : vector<2x256xf32> to vector<2x128xf32>
    %160 = vector.broadcast %0 : vector<1x128xf32> to vector<2x128xf32>
    %161 = arith.mulf %160, %159 : vector<2x128xf32>
    %162 = vector.extract_strided_slice %104 {offsets = [0, 51], sizes = [2, 128], strides = [1, 1]} : vector<2x256xf32> to vector<2x128xf32>
    %163 = vector.broadcast %0 : vector<1x128xf32> to vector<2x128xf32>
    %164 = arith.mulf %163, %162 : vector<2x128xf32>
    %165 = vector.extract_strided_slice %104 {offsets = [0, 52], sizes = [2, 128], strides = [1, 1]} : vector<2x256xf32> to vector<2x128xf32>
    %166 = vector.broadcast %0 : vector<1x128xf32> to vector<2x128xf32>
    %167 = arith.mulf %166, %165 : vector<2x128xf32>
    %168 = vector.extract_strided_slice %104 {offsets = [0, 55], sizes = [2, 128], strides = [1, 1]} : vector<2x256xf32> to vector<2x128xf32>
    %169 = vector.broadcast %0 : vector<1x128xf32> to vector<2x128xf32>
    %170 = arith.mulf %169, %168 : vector<2x128xf32>
    %171 = vector.extract_strided_slice %104 {offsets = [0, 56], sizes = [2, 128], strides = [1, 1]} : vector<2x256xf32> to vector<2x128xf32>
    %172 = vector.broadcast %0 : vector<1x128xf32> to vector<2x128xf32>
    %173 = arith.mulf %172, %171 : vector<2x128xf32>
    %174 = vector.extract_strided_slice %104 {offsets = [0, 57], sizes = [2, 128], strides = [1, 1]} : vector<2x256xf32> to vector<2x128xf32>
    %175 = vector.broadcast %0 : vector<1x128xf32> to vector<2x128xf32>
    %176 = arith.mulf %175, %174 : vector<2x128xf32>
    %177 = vector.extract_strided_slice %104 {offsets = [0, 60], sizes = [2, 128], strides = [1, 1]} : vector<2x256xf32> to vector<2x128xf32>
    %178 = vector.broadcast %0 : vector<1x128xf32> to vector<2x128xf32>
    %179 = arith.mulf %178, %177 : vector<2x128xf32>
    %180 = vector.extract_strided_slice %104 {offsets = [0, 61], sizes = [2, 128], strides = [1, 1]} : vector<2x256xf32> to vector<2x128xf32>
    %181 = vector.broadcast %0 : vector<1x128xf32> to vector<2x128xf32>
    %182 = arith.mulf %181, %180 : vector<2x128xf32>
    %183 = vector.extract_strided_slice %104 {offsets = [0, 62], sizes = [2, 128], strides = [1, 1]} : vector<2x256xf32> to vector<2x128xf32>
    %184 = vector.broadcast %0 : vector<1x128xf32> to vector<2x128xf32>
    %185 = arith.mulf %184, %183 : vector<2x128xf32>
    %cst_14 = arith.constant 0.000000e+00 : f32
    %186 = vector.broadcast %cst_14 : f32 to vector<9x128xf32>
    %187 = tpu.concatenate %107, %110, %113, %116, %119, %122, %125, %128, %131, %134, %137, %140, %143, %146, %149, %152 in 0 : vector<2x128xf32>, vector<2x128xf32>, vector<2x128xf32>, vector<2x128xf32>, vector<2x128xf32>, vector<2x128xf32>, vector<2x128xf32>, vector<2x128xf32>, vector<2x128xf32>, vector<2x128xf32>, vector<2x128xf32>, vector<2x128xf32>, vector<2x128xf32>, vector<2x128xf32>, vector<2x128xf32>, vector<2x128xf32> -> vector<32x128xf32>
    %188 = tpu.concatenate %155, %158, %161, %164, %167, %170, %173, %176, %179, %182, %185, %0, %186 in 0 : vector<2x128xf32>, vector<2x128xf32>, vector<2x128xf32>, vector<2x128xf32>, vector<2x128xf32>, vector<2x128xf32>, vector<2x128xf32>, vector<2x128xf32>, vector<2x128xf32>, vector<2x128xf32>, vector<2x128xf32>, vector<1x128xf32>, vector<9x128xf32> -> vector<32x128xf32>
    %189 = tpu.concatenate %187, %188 in 0 : vector<32x128xf32>, vector<32x128xf32> -> vector<64x128xf32>
    %cst_15 = arith.constant dense<0.000000e+00> : vector<64x64xf32>
    %190 = tpu.matmul %189, %189, %cst_15 {dimension_numbers = #tpu.dot_dimension_numbers<[1], [1], [0], [0], [0, 0, 1, 0], [], []>} : vector<64x128xf32>, vector<64x128xf32>, vector<64x64xf32> -> vector<64x64xf32>
    %191 = vector.extract_strided_slice %190 {offsets = [0, 54], sizes = [64, 1], strides = [1, 1]} : vector<64x64xf32> to vector<64x1xf32>
    %192 = vector.extract_strided_slice %190 {offsets = [54, 0], sizes = [1, 64], strides = [1, 1]} : vector<64x64xf32> to vector<1x64xf32>
    %193 = vector.broadcast %191 : vector<64x1xf32> to vector<64x64xf32>
    %194 = vector.broadcast %192 : vector<1x64xf32> to vector<64x64xf32>
    %195 = arith.mulf %193, %194 : vector<64x64xf32>
    %cst_16 = arith.constant 0.0370370373 : f32
    %196 = vector.broadcast %cst_16 : f32 to vector<64x64xf32>
    %197 = arith.mulf %195, %196 : vector<64x64xf32>
    %198 = arith.subf %190, %197 : vector<64x64xf32>
    %199 = tpu.concatenate %99, %198 in 1 : vector<64x64xf32>, vector<64x64xf32> -> vector<64x128xf32>
    %c0_17 = arith.constant 0 : index
    %c0_18 = arith.constant 0 : index
    %c0_19 = arith.constant 0 : index
    %200 = vector.load %arg4[%c0_17, %c0_18, %c0_19] : memref<1x64x128xf32, #tpu.memory_space<vmem>>, vector<1x64x128xf32>
    %201 = vector.shape_cast %200 : vector<1x64x128xf32> to vector<64x128xf32>
    %202 = vector.shape_cast %199 : vector<64x128xf32> to vector<1x64x128xf32>
    tpu.vector_store %arg4[%c0_17, %c0_18, %c0_19], %202 {strides = array<i32>} : memref<1x64x128xf32, #tpu.memory_space<vmem>>, vector<1x64x128xf32>,
    return
  }
  func.func @transform_0(%arg0: i32) -> (i32, i32) {
    %c0_i32 = arith.constant 0 : i32
    %c0_i32_0 = arith.constant 0 : i32
    %c0_i32_1 = arith.constant 0 : i32
    return %c0_i32, %c0_i32_0 : i32, i32
  }
  func.func @transform_1(%arg0: i32) -> (i32, i32, i32) {
    %c0_i32 = arith.constant 0 : i32
    %c0_i32_0 = arith.constant 0 : i32
    %c0_i32_1 = arith.constant 0 : i32
    return %arg0, %c0_i32, %c0_i32_0 : i32, i32, i32
  }
  func.func @transform_2(%arg0: i32) -> (i32, i32, i32) {
    %c0_i32 = arith.constant 0 : i32
    %c0_i32_0 = arith.constant 0 : i32
    %c0_i32_1 = arith.constant 0 : i32
    return %arg0, %c0_i32, %c0_i32_0 : i32, i32, i32
  }
  func.func @transform_3(%arg0: i32) -> (i32, i32, i32) {
    %c0_i32 = arith.constant 0 : i32
    %c0_i32_0 = arith.constant 0 : i32
    %c0_i32_1 = arith.constant 0 : i32
    return %arg0, %c0_i32, %c0_i32_0 : i32, i32, i32
  }
}

</mosaic_0001>

<llo_original>
// kernel: custom-call.10
$region0: #{custom-call.10}
  %s0 = inlined_call_operand.vmem [shape: f32[2,2,27,27], index: 0, kind: input, shape index: {}]
  %s1 = inlined_call_operand.vmem [shape: f32[2,2,27,27], index: 1, kind: output, shape index: {0}]
  %s2 = inlined_call_operand.hbm [shape: s32[2,2,27], index: 2, kind: output, shape index: {1}]
  %s3 = inlined_call_operand.vmem [shape: s32[2,2,27], index: 3, kind: output, shape index: {2}]
  %4 = xla_tuple %s1, %s2, %s3
  $region1: #{custom-call.10} parent=0
    #allocation0 [shape = 'u8[32768]{0}', space=vmem, size = 0x8000, scoped, tag = 'operand span for operand 0']
    #allocation1 [shape = 'u8[32768]{0}', space=vmem, size = 0x8000, scoped, tag = 'operand span for operand 1']
    #allocation2 [shape = 'u8[4096]{0}', space=vmem, size = 0x1000, scoped, tag = 'operand span for operand 2']
    #allocation3 [shape = 'u8[2048]{0}', space=vmem, size = 0x800, scoped, tag = 'packed  for operand 2']
    #allocation4 [shape = 's32[2]{0}', space=sflag, size = 0x8, scoped, tag = 'scoped memory for custom-call.10']
    #allocation5 [shape = 'u8[4096]{0}', space=vmem, size = 0x1000, scoped, tag = 'operand span for operand 3']
    #allocation6 [shape = 'u8[2048]{0}', space=vmem, size = 0x800, scoped, tag = 'packed  for operand 3']
    %5 = vsyncpa [#allocation4], 0
    %s6 = scalar_lea.sflag [#allocation4], 1
    %7 = vsyncpa %s6, 0
    loop: start=0, step=1, limit=6
    $region2: #{custom-call.10} parent=1 // loop_pre_header
      _
    $region3: #{custom-call.10} parent=1 // loop_header
      %s9 = sphi 0, %s13
      %p10 = scmp.ge.s32.totalorder %s9, 6
      %s16 = sphi 0, %s28
      %s17 = sphi 0, %s24
      %s18 = sphi 0, %s16
      %s19 = sphi 0, %s17
      %s20 = sphi 0, %s18
      %s21 = sphi 0, %s19
      %s35 = sphi 0, %s37
      %s38 = sphi 0, %s35
      %s39 = sphi 0, %s38
      %s55 = sphi 0, %s39
      %s65 = sphi 0, %s67
      %s68 = sphi 0, %s65
      %s69 = sphi 0, %s68
      %s85 = sphi 0, %s69
    $region4: #{custom-call.10} parent=1 // loop_header_branch
      %12 = sbr.rel (%p10) target = $region8
    $region5: #{custom-call.10} parent=1 // loop_body
      %s14 = ssub.s32 %s9, 1
      %s15 = ssub.s32 %s9, 2
      %s22 = sadd.s32 1, %s17
      %p23 = scmp.ge.s32.totalorder %s22, 2
      %s24 = scalar_select %p23, 0, %s22
      %s25 = sadd.s32 1, %s16
      %s26 = scalar_select %p23, %s25, %s16
      %p27 = scmp.ge.s32.totalorder %s26, 2
      %s28 = scalar_select %p27, 0, %s26
      %s29 = sshrl.u32 %s17, 3
      %s30 = sshrl.u32 %s24, 3
      %s31 = ssub.s32 %s16, %s28
      %s32 = ssub.s32 %s29, %s30
      %s33 = sor.u32 %s31, %s32
      %p34 = scmp.eq.s32.totalorder %s33, 0
      %s36 = sadd.s32 %s35, 1
      %s37 = scalar_select %p34, %s35, %s36
      %p40 = pneg %p34
      %p41 = scmp.eq.s32.totalorder %s9, 3
      %p42 = por %p40, %p41
      %p43 = scmp.ne.s32.totalorder %s35, %s38
      %p44 = scmp.eq.s32.totalorder %s9, 0
      %p45 = por %p43, %p44
      %p46 = scmp.ne.s32.totalorder %s35, %s38
      %p47 = scmp.eq.s32.totalorder %s14, 3
      %p48 = por %p46, %p47
      %p49 = scmp.ne.s32.totalorder %s38, %s39
      %p50 = scmp.eq.s32.totalorder %s14, 0
      %p51 = por %p49, %p50
      %p52 = scmp.ne.s32.totalorder %s38, %s39
      %p53 = scmp.eq.s32.totalorder %s15, 3
      %p54 = por %p52, %p53
      %p56 = scmp.ne.s32.totalorder %s39, %s55
      %p57 = scmp.eq.s32.totalorder %s15, 0
      %p58 = por %p56, %p57
      %s59 = sshrl.u32 %s17, 3
      %s60 = sshrl.u32 %s24, 3
      %s61 = ssub.s32 %s16, %s28
      %s62 = ssub.s32 %s59, %s60
      %s63 = sor.u32 %s61, %s62
      %p64 = scmp.eq.s32.totalorder %s63, 0
      %s66 = sadd.s32 %s65, 1
      %s67 = scalar_select %p64, %s65, %s66
      %p70 = pneg %p64
      %p71 = scmp.eq.s32.totalorder %s9, 3
      %p72 = por %p70, %p71
      %p73 = scmp.ne.s32.totalorder %s65, %s68
      %p74 = scmp.eq.s32.totalorder %s9, 0
      %p75 = por %p73, %p74
      %p76 = scmp.ne.s32.totalorder %s65, %s68
      %p77 = scmp.eq.s32.totalorder %s14, 3
      %p78 = por %p76, %p77
      %p79 = scmp.ne.s32.totalorder %s68, %s69
      %p80 = scmp.eq.s32.totalorder %s14, 0
      %p81 = por %p79, %p80
      %p82 = scmp.ne.s32.totalorder %s68, %s69
      %p83 = scmp.eq.s32.totalorder %s15, 3
      %p84 = por %p82, %p83
      %p86 = scmp.ne.s32.totalorder %s69, %s85
      %p87 = scmp.eq.s32.totalorder %s15, 0
      %p88 = por %p86, %p87
      %p89 = scmp.le.s32.totalorder 1, %s9
      %p90 = scmp.lt.s32.totalorder %s9, 5
      %p91 = pnand %p89, %p90
      %p92 = pneg %p91
      // Predicated region
      $region9: #{custom-call.10} parent=5 // pred_check
        _
      $region10: #{custom-call.10} parent=5 // pred_check_branch
        %94 = sbr.rel (%p91) target = $region12
      $region11: #{custom-call.10} parent=5 // pred_region
        %s95 = ssub.s32 %s9, 1
      $region12: #{custom-call.10} parent=5 // pred_fallthru
        _
      %p96 = scmp.lt.s32.totalorder %s9, 4
      // Predicated region
      $region13: #{custom-call.10} parent=5 // pred_check
        %p97 = pneg %p96
      $region14: #{custom-call.10} parent=5 // pred_check_branch
        %99 = sbr.rel (%p97) target = $region16
      $region15: #{custom-call.10} parent=5 // pred_region
        %s100 = sand.u32 %s9, 1
        %s101 = sand.u32 %s9, 1
        %s102 = smul.addr %s101, 32
        %s103 = scalar_lea.vmem [#allocation0], %s102
        %s104 = smul.addr %s16, 2
        %s105 = sadd.s32 %s17, %s104
        %s106 = smul.addr %s105, 32
        %s107 = scalar_lea.vmem %s0, %s106
        // Predicated region
        $region17: #{custom-call.10} parent=15 // pred_check
          _
        $region18: #{custom-call.10} parent=15 // pred_check_branch
          %109 = sbr.rel (0) target = $region20
        $region19: #{custom-call.10} parent=15 // pred_region
          // Predicated region
          $region21: #{custom-call.10} parent=19 // pred_check
            _
          $region22: #{custom-call.10} parent=19 // pred_check_branch
            %111 = sbr.rel (0) target = $region24
          $region23: #{custom-call.10} parent=19 // pred_region
            loop: start=0, step=1, limit=1
            $region25: #{custom-call.10} parent=23 // loop_pre_header
              _
            $region26: #{custom-call.10} parent=23 // loop_header
              %s113 = sphi 0, %s117
              %p114 = scmp.ge.s32.totalorder %s113, 1
              %s118 = sphi %s107, %s107
              %s119 = sphi %s103, %s103
            $region27: #{custom-call.10} parent=23 // loop_header_branch
              %116 = sbr.rel (%p114) target = $region31
            $region28: #{custom-call.10} parent=23 // loop_body
              %v120 = vld [vmem:[%s118] sm:$0xff]
              %121 = vst [vmem:[%s119] sm:$0xff] %v120
              %v122 = vld [vmem:[%s118 + $0x8] sm:$0xff]
              %123 = vst [vmem:[%s119 + $0x8] sm:$0xff] %v122
              %v124 = vld [vmem:[%s118 + $0x10] sm:$0xff]
              %125 = vst [vmem:[%s119 + $0x10] sm:$0xff] %v124
              %v126 = vld [vmem:[%s118 + $0x18] sm:$0xff]
              %127 = vst [vmem:[%s119 + $0x18] sm:$0xff] %v126
            $region29: #{custom-call.10} parent=23 // loop_footer
              %s117 = sadd.s32 1, %s113
            $region30: #{custom-call.10} parent=23 // loop_footer_branch
              %112 = sbr.rel target = $region26
            $region31: #{custom-call.10} parent=23 // loop_exit
              _
          $region24: #{custom-call.10} parent=19 // pred_fallthru
            _
          // Predicated region
          $region32: #{custom-call.10} parent=19 // pred_check
            _
          $region33: #{custom-call.10} parent=19 // pred_check_branch
            %129 = sbr.rel target = $region35
          $region34: #{custom-call.10} parent=19 // pred_region
            _
          $region35: #{custom-call.10} parent=19 // pred_fallthru
            _
        $region20: #{custom-call.10} parent=15 // pred_fallthru
          _
        %130 = vnop
      $region16: #{custom-call.10} parent=5 // pred_fallthru
        _
      %p131 = scmp.le.s32.totalorder 1, %s9
      %p132 = scmp.lt.s32.totalorder %s9, 5
      %p133 = pnand %p131, %p132
      %p134 = pneg %p133
      // Predicated region
      $region36: #{custom-call.10} parent=5 // pred_check
        _
      $region37: #{custom-call.10} parent=5 // pred_check_branch
        %136 = sbr.rel (%p133) target = $region39
      $region38: #{custom-call.10} parent=5 // pred_region
        #allocation7 [shape = 's32[27,128]{1,0}', space=vmem, size = 0x4000, scoped, tag = 'scratch for permutations']
        %s137 = ssub.s32 %s9, 1
        %s138 = sand.u32 %s14, 1
        %s139 = sand.u32 %s14, 1
        %s140 = smul.addr %s139, 32
        %s141 = scalar_lea.vmem [#allocation0], %s140
        %s142 = sand.u32 %s14, 1
        %s143 = sand.u32 %s14, 1
        %s144 = smul.addr %s143, 32
        %s145 = scalar_lea.vmem [#allocation0], %s144
        %s146 = sand.u32 %s14, 1
        %s147 = sand.u32 %s14, 1
        %s148 = smul.addr %s147, 32
        %s149 = scalar_lea.vmem [#allocation1], %s148
        %p150 = pneg %p51
        %p151 = pneg %p48
        %s152 = sand.u32 %s38, 1
        %s153 = scalar_lea.sflag [#allocation4], %s152
        %s154 = sand.u32 %s38, 1
        %s155 = smul.addr %s154, 2
        %s156 = scalar_lea.vmem [#allocation3], %s155
        %p157 = pneg %p81
        %p158 = pneg %p78
        %s159 = sand.u32 %s68, 1
        %s160 = sand.u32 %s68, 1
        %s161 = smul.addr %s160, 2
        %s162 = scalar_lea.vmem [#allocation6], %s161
        %s163 = sshrl.u32 %s19, 3
        %s164 = sshrl.u32 %s19, 3
        %v165 = vld [vmem:[%s141] sm:$0xff]
        %166 = vst [vmem:[%s149] sm:$0xff] %v165
        %s167 = scalar_lea.vmem %s149, 8 [#allocation1]
        %s168 = scalar_lea.vmem %s141, 8 [#allocation0]
        %v169 = vld [vmem:[%s168] sm:$0xff]
        %170 = vst [vmem:[%s167] sm:$0xff] %v169
        %s171 = scalar_lea.vmem %s149, 16 [#allocation1]
        %s172 = scalar_lea.vmem %s141, 16 [#allocation0]
        %v173 = vld [vmem:[%s172] sm:$0xff]
        %174 = vst [vmem:[%s171] sm:$0xff] %v173
        %s175 = scalar_lea.vmem %s149, 24 [#allocation1]
        %s176 = scalar_lea.vmem %s141, 24 [#allocation0]
        %v177 = vld [vmem:[%s176] sm:$0xff]
        %178 = vst [vmem:[%s175] sm:$0xff] %v177
        %s179 = sand.u32 %s19, 7
        %s180 = scalar_lea.vmem [#allocation2], %s179
        %s181 = sand.u32 %s19, 7
        %s182 = scalar_lea.vmem [#allocation5], %s181
        %183 = vst [vmem:[%s180] sm:$0x1] 0
        %v184 = vlaneseq
        %v185 = vshrl.u32 %v184, 7
        %v186 = vmov %v185
        loop: start=0, step=1, limit=4
        $region40: #{custom-call.10} parent=38 // loop_pre_header
          _
        $region41: #{custom-call.10} parent=38 // loop_header
          %s188 = sphi 0, %s192
          %p189 = scmp.ge.s32.totalorder %s188, 4
        $region42: #{custom-call.10} parent=38 // loop_header_branch
          %191 = sbr.rel (%p189) target = $region46
        $region43: #{custom-call.10} parent=38 // loop_body
          %s193 = smul.addr %s188, 8
          %s194 = scalar_lea.vmem [#allocation7], %s193
          %s195 = smul.u32 %s188, 8
          %v196 = vstv %s195
          %v197 = vadd.s32 %v186, %v196
          %198 = vst [vmem:[%s194] sm:$0xff] %v197
        $region44: #{custom-call.10} parent=38 // loop_footer
          %s192 = sadd.s32 1, %s188
        $region45: #{custom-call.10} parent=38 // loop_footer_branch
          %187 = sbr.rel target = $region41
        $region46: #{custom-call.10} parent=38 // loop_exit
          _
        loop: start=0, step=1, limit=27
        $region47: #{custom-call.10} parent=38 // loop_pre_header
          _
        $region48: #{custom-call.10} parent=38 // loop_header
          %s200 = sphi 0, %s204
          %p201 = scmp.ge.s32.totalorder %s200, 27
        $region49: #{custom-call.10} parent=38 // loop_header_branch
          %203 = sbr.rel (%p201) target = $region53
        $region50: #{custom-call.10} parent=38 // loop_body
          %v205 = vstv %s200
          %v206 = vlaneseq
          %v207 = vshrl.u32 %v206, 7
          %v208 = vmov %v207
          %v209 = vld [vmem:[%s149] sm:$0xff]
          %v210 = vand.u32 2147483647, %v209
          %v212 = vstv %s200
          %vm213 = vcmp.ge.s32.totalorder %v208, %v212
          %vm214 = vcmp.lt.s32.totalorder %v208, 27
          %vm215 = vmand %vm213, %vm214
          %vm216 = vcmp.lt.f32.partialorder -inf, %v210
          %vm217 = vmand %vm215, %vm216
          %v218 = vsel %vm217, %v208, %v205
          %v219 = vsel %vm217, %v210, -inf
          %s220 = scalar_lea.vmem %s149, 8 [#allocation1]
          %v221 = vld [vmem:[%s220] sm:$0xff]
          %v222 = vand.u32 2147483647, %v221
          %v223 = vadd.s32 %v208, 8
          %v224 = vstv %s200
          %vm225 = vcmp.ge.s32.totalorder %v223, %v224
          %vm226 = vcmp.lt.s32.totalorder %v223, 27
          %vm227 = vmand %vm225, %vm226
          %vm228 = vcmp.lt.f32.partialorder %v219, %v222
          %vm229 = vmand %vm227, %vm228
          %v230 = vsel %vm229, %v223, %v218
          %v231 = vsel %vm229, %v222, %v219
          %s232 = scalar_lea.vmem %s149, 16 [#allocation1]
          %v233 = vld [vmem:[%s232] sm:$0xff]
          %v234 = vand.u32 2147483647, %v233
          %v235 = vadd.s32 %v208, 16
          %v236 = vstv %s200
          %vm237 = vcmp.ge.s32.totalorder %v235, %v236
          %vm238 = vcmp.lt.s32.totalorder %v235, 27
          %vm239 = vmand %vm237, %vm238
          %vm240 = vcmp.lt.f32.partialorder %v231, %v234
          %vm241 = vmand %vm239, %vm240
          %v242 = vsel %vm241, %v235, %v230
          %v243 = vsel %vm241, %v234, %v231
          %s244 = scalar_lea.vmem %s149, 24 [#allocation1]
          %v245 = vld [vmem:[%s244] sm:$0xff]
          %v246 = vand.u32 2147483647, %v245
          %v247 = vadd.s32 %v208, 24
          %v248 = vstv %s200
          %vm249 = vcmp.ge.s32.totalorder %v247, %v248
          %vm250 = vcmp.lt.s32.totalorder %v247, 27
          %vm251 = vmand %vm249, %vm250
          %vm252 = vcmp.lt.f32.partialorder %v243, %v246
          %vm253 = vmand %vm251, %vm252
          %v254 = vsel %vm253, %v247, %v242
          %v255 = vsel %vm253, %v246, %v243
          %v256 = vrot.slane %v255, 1
          %v257 = vrot.slane %v254, 1
          %vm258 = vcmp.ge.f32.partialorder %v256, %v255
          %v259 = vsel %vm258, %v256, %v255
          %v260 = vsel %vm258, %v257, %v254
          %v261 = vrot.slane %v256, 1
          %v262 = vrot.slane %v257, 1
          %vm263 = vcmp.ge.f32.partialorder %v261, %v259
          %v264 = vsel %vm263, %v261, %v259
          %v265 = vsel %vm263, %v262, %v260
          %v266 = vrot.slane %v261, 1
          %v267 = vrot.slane %v262, 1
          %vm268 = vcmp.ge.f32.partialorder %v266, %v264
          %v269 = vsel %vm268, %v266, %v264
          %v270 = vsel %vm268, %v267, %v265
          %v271 = vrot.slane %v266, 1
          %v272 = vrot.slane %v267, 1
          %vm273 = vcmp.ge.f32.partialorder %v271, %v269
          %v274 = vsel %vm273, %v271, %v269
          %v275 = vsel %vm273, %v272, %v270
          %v276 = vrot.slane %v271, 1
          %v277 = vrot.slane %v272, 1
          %vm278 = vcmp.ge.f32.partialorder %v276, %v274
          %v279 = vsel %vm278, %v276, %v274
          %v280 = vsel %vm278, %v277, %v275
          %v281 = vrot.slane %v276, 1
          %v282 = vrot.slane %v277, 1
          %vm283 = vcmp.ge.f32.partialorder %v281, %v279
          %v284 = vsel %vm283, %v281, %v279
          %v285 = vsel %vm283, %v282, %v280
          %v286 = vrot.slane %v281, 1
          %v287 = vrot.slane %v282, 1
          %vm288 = vcmp.ge.f32.partialorder %v286, %v284
          %v289 = vsel %vm288, %v286, %v284
          %v290 = vsel %vm288, %v287, %v285
          %s291 = ssub.s32 128, %s200
          %292 = vrot.lane.b32.xlu0 %v290, %s291
          %v293 = vpop.permute.xlu0 %292
          %s294 = vtos %v293
          %v295 = vstv %s200
          %v296 = vlaneseq
          %v297 = vand.u32 %v296, 127
          %vm298 = vcmp.eq.s32.totalorder %v297, %v295
          %v299 = vstv %s294
          %v300 = vld [vmem:[%s180] ss:$0 sm:$0xff]
          %v301 = vsel %vm298, %v299, %v300
          %302 = vst [vmem:[%s180] sm:$0x1] %v301
          %s303 = scalar_lea.vmem %s149, %s200 [#allocation1]
          %s304 = scalar_lea.vmem %s149, %s294 [#allocation1]
          %v305 = vld [vmem:[%s303] ss:$0 sm:$0xff]
          %v306 = vld [vmem:[%s304] ss:$0 sm:$0xff]
          %307 = vst [vmem:[%s304] sm:$0x1] %v305
          %308 = vst [vmem:[%s303] sm:$0x1] %v306
          %s309 = scalar_lea.vmem [#allocation7], %s200
          %s310 = scalar_lea.vmem [#allocation7], %s294
          %v311 = vld [vmem:[%s309] ss:$0 sm:$0xff]
          %v312 = vld [vmem:[%s310] ss:$0 sm:$0xff]
          %313 = vst [vmem:[%s310] sm:$0x1] %v311
          %314 = vst [vmem:[%s309] sm:$0x1] %v312
          %vm315 = vcmp.ne.f32.partialorder %v306, 0.0
          %vm316 = vmand %vm298, %vm315
          %v317 = vsel %vm316, %v306, 1.0
          %v318 = vlaneseq
          %v319 = vand.u32 %v318, 127
          %v320 = vstv %s200
          %vm321 = vcmp.gt.s32.totalorder %v319, %v320
          %v322 = vsel %vm321, %v306, 0.0
          %v323 = vlaneseq
          %v324 = vshrl.u32 %v323, 7
          %v325 = vmov %v324
          %v326 = vld [vmem:[%s149] sm:$0xff]
          %v328 = vstv %s200
          %vm329 = vcmp.gt.s32.totalorder %v325, %v328
          %v330 = vsel %vm329, %v317, 1.0
          %v331 = vrcp.pop %v330
          %v332 = vmul.f32 %v326, %v331
          %vm333 = vmand %vm329, %vm298
          %v334 = vsel %vm333, %v332, 0.0
          %335 = vadd.xlane.f32.xlu0 %v334
          %v336 = vpop.xlane.xlu0 %335
          %v337 = vmul.f32 %v336, %v322
          %v338 = vsub.f32 %v332, %v337
          %339 = vst [vmem:[%s149] sm:$0xff] %v338
          %s340 = scalar_lea.vmem %s149, 8 [#allocation1]
          %v341 = vld [vmem:[%s340] sm:$0xff]
          %v342 = vadd.s32 %v325, 8
          %v343 = vstv %s200
          %vm344 = vcmp.gt.s32.totalorder %v342, %v343
          %v345 = vsel %vm344, %v317, 1.0
          %v346 = vrcp.pop %v345
          %v347 = vmul.f32 %v341, %v346
          %vm348 = vmand %vm344, %vm298
          %v349 = vsel %vm348, %v347, 0.0
          %350 = vadd.xlane.f32.xlu0 %v349
          %v351 = vpop.xlane.xlu0 %350
          %v352 = vmul.f32 %v351, %v322
          %v353 = vsub.f32 %v347, %v352
          %354 = vst [vmem:[%s340] sm:$0xff] %v353
          %s355 = scalar_lea.vmem %s149, 16 [#allocation1]
          %v356 = vld [vmem:[%s355] sm:$0xff]
          %v357 = vadd.s32 %v325, 16
          %v358 = vstv %s200
          %vm359 = vcmp.gt.s32.totalorder %v357, %v358
          %v360 = vsel %vm359, %v317, 1.0
          %v361 = vrcp.pop %v360
          %v362 = vmul.f32 %v356, %v361
          %vm363 = vmand %vm359, %vm298
          %v364 = vsel %vm363, %v362, 0.0
          %365 = vadd.xlane.f32.xlu0 %v364
          %v366 = vpop.xlane.xlu0 %365
          %v367 = vmul.f32 %v366, %v322
          %v368 = vsub.f32 %v362, %v367
          %369 = vst [vmem:[%s355] sm:$0xff] %v368
          %s370 = scalar_lea.vmem %s149, 24 [#allocation1]
          %v371 = vld [vmem:[%s370] sm:$0xff]
          %v372 = vadd.s32 %v325, 24
          %v373 = vstv %s200
          %vm374 = vcmp.gt.s32.totalorder %v372, %v373
          %v375 = vsel %vm374, %v317, 1.0
          %v376 = vrcp.pop %v375
          %v377 = vmul.f32 %v371, %v376
          %vm378 = vmand %vm374, %vm298
          %v379 = vsel %vm378, %v377, 0.0
          %380 = vadd.xlane.f32.xlu0 %v379
          %v381 = vpop.xlane.xlu0 %380
          %v382 = vmul.f32 %v381, %v322
          %v383 = vsub.f32 %v377, %v382
          %384 = vst [vmem:[%s370] sm:$0xff] %v383
        $region51: #{custom-call.10} parent=38 // loop_footer
          %s204 = sadd.s32 1, %s200
        $region52: #{custom-call.10} parent=38 // loop_footer_branch
          %199 = sbr.rel target = $region48
        $region53: #{custom-call.10} parent=38 // loop_exit
          _
        %v385 = vld [vmem:[#allocation7] sm:$0xff]
        %s386 = scalar_lea.vmem [#allocation7], 8
        %v387 = vld [vmem:[%s386] sm:$0xff]
        %s388 = scalar_lea.vmem [#allocation7], 16
        %v389 = vld [vmem:[%s388] sm:$0xff]
        %s390 = scalar_lea.vmem [#allocation7], 24
        %v391 = vld [vmem:[%s390] sm:$0xff]
        %s392 = scalar_lea.vmem [#allocation7], 32
        %s393 = scalar_lea.vmem [#allocation7], 40
        %s394 = scalar_lea.vmem [#allocation7], 48
        %s395 = scalar_lea.vmem [#allocation7], 56
        %s396 = scalar_lea.vmem [#allocation7], 64
        %s397 = scalar_lea.vmem [#allocation7], 72
        %s398 = scalar_lea.vmem [#allocation7], 80
        %s399 = scalar_lea.vmem [#allocation7], 88
        %s400 = scalar_lea.vmem [#allocation7], 96
        %s401 = scalar_lea.vmem [#allocation7], 104
        %s402 = scalar_lea.vmem [#allocation7], 112
        %s403 = scalar_lea.vmem [#allocation7], 120
        %404 = vxpose.xlu0.b32.start [1/16] %v385, 128
        %405 = vxpose.xlu0.b32.cont [2/16] %v387, 128
        %406 = vxpose.xlu0.b32.cont [3/16] %v389, 128
        %407 = vxpose.xlu0.b32.cont [4/16] %v391, 128
        %408 = vxpose.xlu0.b32.cont [5/16] 0, 128
        %409 = vxpose.xlu0.b32.cont [6/16] 0, 128
        %410 = vxpose.xlu0.b32.cont [7/16] 0, 128
        %411 = vxpose.xlu0.b32.cont [8/16] 0, 128
        %412 = vxpose.xlu0.b32.cont [9/16] 0, 128
        %413 = vxpose.xlu0.b32.cont [10/16] 0, 128
        %414 = vxpose.xlu0.b32.cont [11/16] 0, 128
        %415 = vxpose.xlu0.b32.cont [12/16] 0, 128
        %416 = vxpose.xlu0.b32.cont [13/16] 0, 128
        %417 = vxpose.xlu0.b32.cont [14/16] 0, 128
        %418 = vxpose.xlu0.b32.cont [15/16] 0, 128
        %419 = vxpose.xlu0.b32.end [16/16] 0, 128
        %v420 = vpop.trf.xlu0
        %v421 = vpop.trf.xlu0
        %v422 = vpop.trf.xlu0
        %v423 = vpop.trf.xlu0
        %v424 = vpop.trf.xlu0
        %v425 = vpop.trf.xlu0
        %v426 = vpop.trf.xlu0
        %v427 = vpop.trf.xlu0
        %v428 = vpop.trf.xlu0
        %v429 = vpop.trf.xlu0
        %v430 = vpop.trf.xlu0
        %v431 = vpop.trf.xlu0
        %v432 = vpop.trf.xlu0
        %v433 = vpop.trf.xlu0
        %v434 = vpop.trf.xlu0
        %v435 = vpop.trf.xlu0
        %436 = vst [vmem:[%s182] sm:$0x1] %v420
        %s438 = sshllo.u32 0, 2
        %v440 = vld [vmem:[#allocation2] sm:%s438]
        %s441 = sshllo.u32 0, 2
        %442 = vst [vmem:[%s156] sm:%s441] %v440
        %s444 = sshllo.u32 0, 2
        %v446 = vld [vmem:[#allocation5] sm:%s444]
        %s447 = sshllo.u32 0, 2
        %448 = vst [vmem:[%s162] sm:%s447] %v446
        %s449 = sand.u32 %s14, 1
        %s450 = sand.u32 %s14, 1
        %s451 = smul.addr %s450, 32
        %s452 = scalar_lea.vmem [#allocation1], %s451
        %s453 = sand.u32 %s38, 1
        %s454 = scalar_lea.sflag [#allocation4], %s453
        %s455 = sand.u32 %s38, 1
        %s456 = smul.addr %s455, 2
        %s457 = scalar_lea.vmem [#allocation3], %s456
        %s458 = sand.u32 %s68, 1
        %s459 = sand.u32 %s68, 1
        %s460 = smul.addr %s459, 2
        %s461 = scalar_lea.vmem [#allocation6], %s460
        %s462 = smul.addr %s18, 2
        %s463 = sadd.s32 %s19, %s462
        %s464 = smul.addr %s463, 32
        %s465 = scalar_lea.vmem %s1, %s464
        // Predicated region
        $region54: #{custom-call.10} parent=38 // pred_check
          _
        $region55: #{custom-call.10} parent=38 // pred_check_branch
          %467 = sbr.rel (0) target = $region57
        $region56: #{custom-call.10} parent=38 // pred_region
          // Predicated region
          $region58: #{custom-call.10} parent=56 // pred_check
            _
          $region59: #{custom-call.10} parent=56 // pred_check_branch
            %469 = sbr.rel (0) target = $region61
          $region60: #{custom-call.10} parent=56 // pred_region
            loop: start=0, step=1, limit=1
            $region62: #{custom-call.10} parent=60 // loop_pre_header
              _
            $region63: #{custom-call.10} parent=60 // loop_header
              %s471 = sphi 0, %s475
              %p472 = scmp.ge.s32.totalorder %s471, 1
              %s476 = sphi %s452, %s452
              %s477 = sphi %s465, %s465
            $region64: #{custom-call.10} parent=60 // loop_header_branch
              %474 = sbr.rel (%p472) target = $region68
            $region65: #{custom-call.10} parent=60 // loop_body
              %v478 = vld [vmem:[%s476] sm:$0xff]
              %479 = vst [vmem:[%s477] sm:$0xff] %v478
              %v480 = vld [vmem:[%s476 + $0x8] sm:$0xff]
              %481 = vst [vmem:[%s477 + $0x8] sm:$0xff] %v480
              %v482 = vld [vmem:[%s476 + $0x10] sm:$0xff]
              %483 = vst [vmem:[%s477 + $0x10] sm:$0xff] %v482
              %v484 = vld [vmem:[%s476 + $0x18] sm:$0xff]
              %485 = vst [vmem:[%s477 + $0x18] sm:$0xff] %v484
            $region66: #{custom-call.10} parent=60 // loop_footer
              %s475 = sadd.s32 1, %s471
            $region67: #{custom-call.10} parent=60 // loop_footer_branch
              %470 = sbr.rel target = $region63
            $region68: #{custom-call.10} parent=60 // loop_exit
              _
          $region61: #{custom-call.10} parent=56 // pred_fallthru
            _
          // Predicated region
          $region69: #{custom-call.10} parent=56 // pred_check
            _
          $region70: #{custom-call.10} parent=56 // pred_check_branch
            %487 = sbr.rel target = $region72
          $region71: #{custom-call.10} parent=56 // pred_region
            _
          $region72: #{custom-call.10} parent=56 // pred_fallthru
            _
        $region57: #{custom-call.10} parent=38 // pred_fallthru
          _
        %488 = vnop
        // Predicated region
        $region73: #{custom-call.10} parent=38 // pred_check
          %p489 = pneg %p48
        $region74: #{custom-call.10} parent=38 // pred_check_branch
          %491 = sbr.rel (%p489) target = $region76
        $region75: #{custom-call.10} parent=38 // pred_region
          %s492 = sshrl.u32 %s19, 3
          %s494 = ssub.s32 32, 32
          %495 = vsyncadd %s454, %s494
          %s496 = sadd.s32 %s492, %s18
          %s497 = smul.addr %s496, 32
          %s498 = scalar_lea.hbm %s2, %s497
          %s500 = sshll.u32 %s457, 4
          %s501 = int_to_ptr.vmem [resolvable:$true] %s500
          %503 = dma.vmem_to_hbm [thread:$0]  %s501, 32, %s498, %s454
        $region76: #{custom-call.10} parent=38 // pred_fallthru
          _
        // Predicated region
        $region77: #{custom-call.10} parent=38 // pred_check
          %p504 = pneg %p78
        $region78: #{custom-call.10} parent=38 // pred_check_branch
          %506 = sbr.rel (%p504) target = $region80
        $region79: #{custom-call.10} parent=38 // pred_region
          %s507 = sshrl.u32 %s19, 3
          %s508 = sadd.s32 %s507, %s18
          %s509 = smul.addr %s508, 2
          %s510 = scalar_lea.vmem %s3, %s509
          // Predicated region
          $region81: #{custom-call.10} parent=79 // pred_check
            _
          $region82: #{custom-call.10} parent=79 // pred_check_branch
            %512 = sbr.rel (0) target = $region84
          $region83: #{custom-call.10} parent=79 // pred_region
            // Predicated region
            $region85: #{custom-call.10} parent=83 // pred_check
              _
            $region86: #{custom-call.10} parent=83 // pred_check_branch
              %514 = sbr.rel target = $region88
            $region87: #{custom-call.10} parent=83 // pred_region
              // Predicated region
              $region100: #{custom-call.10} parent=87 // pred_check
                _
              $region101: #{custom-call.10} parent=87 // pred_check_branch
                %529 = sbr.rel (0) target = $region103
              $region102: #{custom-call.10} parent=87 // pred_region
                loop: start=0, step=1, limit=1
                $region104: #{custom-call.10} parent=102 // loop_pre_header
                  _
                $region105: #{custom-call.10} parent=102 // loop_header
                  %s532 = sphi 0, %s536
                  %p533 = scmp.ge.s32.totalorder %s532, 1
                  %s537 = sphi %s461, %s461
                  %s538 = sphi %s510, %s510
                $region106: #{custom-call.10} parent=102 // loop_header_branch
                  %535 = sbr.rel (%p533) target = $region110
                $region107: #{custom-call.10} parent=102 // loop_body
                  %v539 = vld [vmem:[%s537] sm:$0x3]
                  %540 = vst [vmem:[%s538] sm:$0x3] %v539
                $region108: #{custom-call.10} parent=102 // loop_footer
                  %s536 = sadd.s32 1, %s532
                $region109: #{custom-call.10} parent=102 // loop_footer_branch
                  %531 = sbr.rel target = $region105
                $region110: #{custom-call.10} parent=102 // loop_exit
                  _
              $region103: #{custom-call.10} parent=87 // pred_fallthru
                _
            $region88: #{custom-call.10} parent=83 // pred_fallthru
              _
            // Predicated region
            $region89: #{custom-call.10} parent=83 // pred_check
              _
            $region90: #{custom-call.10} parent=83 // pred_check_branch
              %516 = sbr.rel (0) target = $region92
            $region91: #{custom-call.10} parent=83 // pred_region
              loop: start=0, step=1, limit=1
              $region93: #{custom-call.10} parent=91 // loop_pre_header
                _
              $region94: #{custom-call.10} parent=91 // loop_header
                %s519 = sphi 0, %s523
                %p520 = scmp.ge.s32.totalorder %s519, 1
                %s524 = sphi %s461, %s461
                %s525 = sphi %s510, %s510
              $region95: #{custom-call.10} parent=91 // loop_header_branch
                %522 = sbr.rel (%p520) target = $region99
              $region96: #{custom-call.10} parent=91 // loop_body
                %v526 = vld [vmem:[%s524] sm:$0x3]
                %527 = vst [vmem:[%s525] sm:$0x3] %v526
              $region97: #{custom-call.10} parent=91 // loop_footer
                %s523 = sadd.s32 1, %s519
              $region98: #{custom-call.10} parent=91 // loop_footer_branch
                %518 = sbr.rel target = $region94
              $region99: #{custom-call.10} parent=91 // loop_exit
                _
            $region92: #{custom-call.10} parent=83 // pred_fallthru
              _
          $region84: #{custom-call.10} parent=79 // pred_fallthru
            _
          %541 = vnop
        $region80: #{custom-call.10} parent=38 // pred_fallthru
          _
      $region39: #{custom-call.10} parent=5 // pred_fallthru
        _
      %p542 = scmp.le.s32.totalorder 2, %s9
      // Predicated region
      $region111: #{custom-call.10} parent=5 // pred_check
        %p543 = pneg %p542
      $region112: #{custom-call.10} parent=5 // pred_check_branch
        %545 = sbr.rel (%p543) target = $region114
      $region113: #{custom-call.10} parent=5 // pred_region
        %s546 = ssub.s32 %s9, 2
        %s547 = sand.u32 %s15, 1
        %s548 = sand.u32 %s15, 1
        %s549 = smul.addr %s548, 32
        %s550 = scalar_lea.vmem [#allocation1], %s549
        // Predicated region
        $region115: #{custom-call.10} parent=113 // pred_check
          %p551 = pneg %p54
        $region116: #{custom-call.10} parent=113 // pred_check_branch
          %553 = sbr.rel (%p551) target = $region118
        $region117: #{custom-call.10} parent=113 // pred_region
          %s554 = sand.u32 %s39, 1
          %s555 = scalar_lea.sflag [#allocation4], %s554
          %s556 = sand.u32 %s39, 1
          %s557 = smul.addr %s556, 2
          %s558 = scalar_lea.vmem [#allocation3], %s557
          %559 = dma.done %s555, 32
        $region118: #{custom-call.10} parent=113 // pred_fallthru
          _
        // Predicated region
        $region119: #{custom-call.10} parent=113 // pred_check
          %p560 = pneg %p84
        $region120: #{custom-call.10} parent=113 // pred_check_branch
          %562 = sbr.rel (%p560) target = $region122
        $region121: #{custom-call.10} parent=113 // pred_region
          %s563 = sand.u32 %s69, 1
          %s564 = sand.u32 %s69, 1
          %s565 = smul.addr %s564, 2
          %s566 = scalar_lea.vmem [#allocation6], %s565
        $region122: #{custom-call.10} parent=113 // pred_fallthru
          _
      $region114: #{custom-call.10} parent=5 // pred_fallthru
        _
    $region6: #{custom-call.10} parent=1 // loop_footer
      %s13 = sadd.s32 1, %s9
    $region7: #{custom-call.10} parent=1 // loop_footer_branch
      %8 = sbr.rel target = $region3
    $region8: #{custom-call.10} parent=1 // loop_exit
      _
    %567 = vsyncpa [#allocation4], 1
    %s568 = scalar_lea.sflag [#allocation4], 1
    %569 = vsyncpa %s568, 1

// kernel: rmi_loss_3d.1
$region0: #{rmi_loss_3d.1}
  #allocation0 [shape = 'u32[]', space=smem, size = 0x4, offset = 0x4, fixed_abs, tag = 'smem constant byte address 0x4 - core index']
  #allocation1 [shape = 'u32[144,128]{1,0:T(1,128)}', space=vmem, size = 0x12000, scoped, tag = 'internal scratch']
  %s0 = inlined_call_operand.vmem [shape: f32[1,128], index: 0, kind: input, shape index: {}]
  %s1 = inlined_call_operand.vmem [shape: f32[2,2,256], index: 1, kind: input, shape index: {}]
  %s2 = inlined_call_operand.vmem [shape: f32[2,2,256], index: 2, kind: input, shape index: {}]
  %s3 = inlined_call_operand.vmem [shape: f32[2,64,128], index: 3, kind: output, shape index: {}]
  %s4 = sld [smem:[#allocation0]]
  $region45: #{rmi_loss_3d.1} parent=0
    _
  %s6 = ssub.s32 1, %s4
  %s7 = scalar_select 0, %s6, %s4
  loop: start=0, step=1, limit=4
  $region2: #{rmi_loss_3d.1} parent=0 // loop_pre_header
    _
  $region3: #{rmi_loss_3d.1} parent=0 // loop_header
    %s9 = sphi 0, %s13
    %p10 = scmp.ge.s32.totalorder %s9, 4
    %s17 = sphi 0, %s17
    %s19 = sphi 0, %s17
    %s20 = sphi 0, %s19
    %s34 = sphi 0, %s20
    %s40 = sphi 0, %s42
    %s43 = sphi 0, %s40
    %s44 = sphi 0, %s43
    %s60 = sphi 0, %s44
    %s66 = sphi 0, %s68
    %s69 = sphi 0, %s66
    %s70 = sphi 0, %s69
    %s86 = sphi 0, %s70
    %s92 = sphi 0, %s94
    %s95 = sphi 0, %s92
    %s96 = sphi 0, %s95
    %s112 = sphi 0, %s96
  $region4: #{rmi_loss_3d.1} parent=0 // loop_header_branch
    %12 = sbr.rel (%p10) target = $region8
  $region5: #{rmi_loss_3d.1} parent=0 // loop_body
    %s14 = ssub.s32 %s9, 1
    %s15 = ssub.s32 %s9, 2
    %s16 = sadd.s32 %s9, 1
    %s18 = sadd.s32 %s17, 1
    %p21 = scmp.eq.s32.totalorder %s9, 1
    %p22 = scmp.ne.s32.totalorder %s17, %s19
    %p23 = scmp.eq.s32.totalorder %s9, 0
    %p24 = por %p22, %p23
    %p25 = scmp.ne.s32.totalorder %s17, %s19
    %p26 = scmp.eq.s32.totalorder %s14, 1
    %p27 = por %p25, %p26
    %p28 = scmp.ne.s32.totalorder %s19, %s20
    %p29 = scmp.eq.s32.totalorder %s14, 0
    %p30 = por %p28, %p29
    %p31 = scmp.ne.s32.totalorder %s19, %s20
    %p32 = scmp.eq.s32.totalorder %s15, 1
    %p33 = por %p31, %p32
    %p35 = scmp.ne.s32.totalorder %s20, %s34
    %p36 = scmp.eq.s32.totalorder %s15, 0
    %p37 = por %p35, %p36
    %s38 = ssub.s32 %s9, %s16
    %p39 = scmp.eq.s32.totalorder %s38, 0
    %s41 = sadd.s32 %s40, 1
    %s42 = scalar_select %p39, %s40, %s41
    %p45 = pneg %p39
    %p46 = scmp.eq.s32.totalorder %s9, 1
    %p47 = por %p45, %p46
    %p48 = scmp.ne.s32.totalorder %s40, %s43
    %p49 = scmp.eq.s32.totalorder %s9, 0
    %p50 = por %p48, %p49
    %p51 = scmp.ne.s32.totalorder %s40, %s43
    %p52 = scmp.eq.s32.totalorder %s14, 1
    %p53 = por %p51, %p52
    %p54 = scmp.ne.s32.totalorder %s43, %s44
    %p55 = scmp.eq.s32.totalorder %s14, 0
    %p56 = por %p54, %p55
    %p57 = scmp.ne.s32.totalorder %s43, %s44
    %p58 = scmp.eq.s32.totalorder %s15, 1
    %p59 = por %p57, %p58
    %p61 = scmp.ne.s32.totalorder %s44, %s60
    %p62 = scmp.eq.s32.totalorder %s15, 0
    %p63 = por %p61, %p62
    %s64 = ssub.s32 %s9, %s16
    %p65 = scmp.eq.s32.totalorder %s64, 0
    %s67 = sadd.s32 %s66, 1
    %s68 = scalar_select %p65, %s66, %s67
    %p71 = pneg %p65
    %p72 = scmp.eq.s32.totalorder %s9, 1
    %p73 = por %p71, %p72
    %p74 = scmp.ne.s32.totalorder %s66, %s69
    %p75 = scmp.eq.s32.totalorder %s9, 0
    %p76 = por %p74, %p75
    %p77 = scmp.ne.s32.totalorder %s66, %s69
    %p78 = scmp.eq.s32.totalorder %s14, 1
    %p79 = por %p77, %p78
    %p80 = scmp.ne.s32.totalorder %s69, %s70
    %p81 = scmp.eq.s32.totalorder %s14, 0
    %p82 = por %p80, %p81
    %p83 = scmp.ne.s32.totalorder %s69, %s70
    %p84 = scmp.eq.s32.totalorder %s15, 1
    %p85 = por %p83, %p84
    %p87 = scmp.ne.s32.totalorder %s70, %s86
    %p88 = scmp.eq.s32.totalorder %s15, 0
    %p89 = por %p87, %p88
    %s90 = ssub.s32 %s9, %s16
    %p91 = scmp.eq.s32.totalorder %s90, 0
    %s93 = sadd.s32 %s92, 1
    %s94 = scalar_select %p91, %s92, %s93
    %p97 = pneg %p91
    %p98 = scmp.eq.s32.totalorder %s9, 1
    %p99 = por %p97, %p98
    %p100 = scmp.ne.s32.totalorder %s92, %s95
    %p101 = scmp.eq.s32.totalorder %s9, 0
    %p102 = por %p100, %p101
    %p103 = scmp.ne.s32.totalorder %s92, %s95
    %p104 = scmp.eq.s32.totalorder %s14, 1
    %p105 = por %p103, %p104
    %p106 = scmp.ne.s32.totalorder %s95, %s96
    %p107 = scmp.eq.s32.totalorder %s14, 0
    %p108 = por %p106, %p107
    %p109 = scmp.ne.s32.totalorder %s95, %s96
    %p110 = scmp.eq.s32.totalorder %s15, 1
    %p111 = por %p109, %p110
    %p113 = scmp.ne.s32.totalorder %s96, %s112
    %p114 = scmp.eq.s32.totalorder %s15, 0
    %p115 = por %p113, %p114
    %p116 = scmp.le.s32.totalorder 1, %s9
    %p117 = scmp.lt.s32.totalorder %s9, 3
    %p118 = pnand %p116, %p117
    %p119 = pneg %p118
    // Predicated region
    $region9: #{rmi_loss_3d.1} parent=5 // pred_check
      _
    $region10: #{rmi_loss_3d.1} parent=5 // pred_check_branch
      %121 = sbr.rel (%p118) target = $region12
    $region11: #{rmi_loss_3d.1} parent=5 // pred_region
      %s122 = ssub.s32 %s9, 1
      // Predicated region
      $region13: #{rmi_loss_3d.1} parent=11 // pred_check
        %p123 = pneg %p30
      $region14: #{rmi_loss_3d.1} parent=11 // pred_check_branch
        %125 = sbr.rel (%p123) target = $region16
      $region15: #{rmi_loss_3d.1} parent=11 // pred_region
        _
      $region16: #{rmi_loss_3d.1} parent=11 // pred_fallthru
        _
    $region12: #{rmi_loss_3d.1} parent=5 // pred_fallthru
      _
    %p126 = scmp.lt.s32.totalorder %s9, 2
    // Predicated region
    $region17: #{rmi_loss_3d.1} parent=5 // pred_check
      %p127 = pneg %p126
    $region18: #{rmi_loss_3d.1} parent=5 // pred_check_branch
      %129 = sbr.rel (%p127) target = $region20
    $region19: #{rmi_loss_3d.1} parent=5 // pred_region
      // Predicated region
      $region21: #{rmi_loss_3d.1} parent=19 // pred_check
        %p130 = pneg %p50
      $region22: #{rmi_loss_3d.1} parent=19 // pred_check_branch
        %132 = sbr.rel (%p130) target = $region24
      $region23: #{rmi_loss_3d.1} parent=19 // pred_region
        %p133 = scmp.lt.s32.totalorder %s9, 1
        %s134 = scalar_select %p133, %s9, 1
        %s135 = smul.addr %s134, 2
        %s136 = smul.addr %s135, 2
        %s137 = scalar_lea.vmem %s1, %s136
      $region24: #{rmi_loss_3d.1} parent=19 // pred_fallthru
        _
      // Predicated region
      $region25: #{rmi_loss_3d.1} parent=19 // pred_check
        %p138 = pneg %p76
      $region26: #{rmi_loss_3d.1} parent=19 // pred_check_branch
        %140 = sbr.rel (%p138) target = $region28
      $region27: #{rmi_loss_3d.1} parent=19 // pred_region
        %p141 = scmp.lt.s32.totalorder %s9, 1
        %s142 = scalar_select %p141, %s9, 1
        %s143 = smul.addr %s142, 2
        %s144 = smul.addr %s143, 2
        %s145 = scalar_lea.vmem %s2, %s144
      $region28: #{rmi_loss_3d.1} parent=19 // pred_fallthru
        _
    $region20: #{rmi_loss_3d.1} parent=5 // pred_fallthru
      _
    %p146 = scmp.le.s32.totalorder 1, %s9
    %p147 = scmp.lt.s32.totalorder %s9, 3
    %p148 = pnand %p146, %p147
    %p149 = pneg %p148
    // Predicated region
    $region29: #{rmi_loss_3d.1} parent=5 // pred_check
      _
    $region30: #{rmi_loss_3d.1} parent=5 // pred_check_branch
      %151 = sbr.rel (%p148) target = $region32
    $region31: #{rmi_loss_3d.1} parent=5 // pred_region
      %s152 = ssub.s32 %s9, 1
      %p153 = pneg %p30
      %p154 = pneg %p27
      %p155 = scmp.lt.s32.totalorder %s14, 1
      %s156 = scalar_select %p155, %s14, 1
      %s157 = smul.addr %s156, 2
      %s158 = smul.addr %s157, 2
      %s159 = scalar_lea.vmem %s1, %s158
      %p160 = pneg %p56
      %p161 = pneg %p53
      %p162 = scmp.lt.s32.totalorder %s14, 1
      %s163 = scalar_select %p162, %s14, 1
      %s164 = smul.addr %s163, 2
      %s165 = smul.addr %s164, 2
      %s166 = scalar_lea.vmem %s2, %s165
      %p167 = pneg %p82
      %p168 = pneg %p79
      %p169 = pneg %p108
      %p170 = pneg %p105
      %p171 = scmp.lt.s32.totalorder %s14, 1
      %s172 = scalar_select %p171, %s14, 1
      %s173 = smul.addr %s172, 8
      %s174 = smul.addr %s173, 8
      %s175 = scalar_lea.vmem %s3, %s174
      %p176 = scmp.lt.s32.totalorder %s14, 1
      %s177 = scalar_select %p176, %s14, 1
      %s178 = smul.addr %s177, 2
      %s179 = smul.addr %s178, 2
      %s180 = scalar_lea.vmem %s1, %s179
      %p181 = scmp.lt.s32.totalorder %s14, 1
      %s182 = scalar_select %p181, %s14, 1
      %s183 = smul.addr %s182, 2
      %s184 = smul.addr %s183, 2
      %s185 = scalar_lea.vmem %s2, %s184
      %p186 = scmp.lt.s32.totalorder %s14, 1
      %s187 = scalar_select %p186, %s14, 1
      %s188 = smul.addr %s187, 8
      %s189 = smul.addr %s188, 8
      %s190 = scalar_lea.vmem %s3, %s189
      %v191 = vld [vmem:[%s0] sm:$0x1]
      %v192 = vld [vmem:[%s180] ss:$2 sm:$0x3]
      %v193 = vld [vmem:[%s185] ss:$2 sm:$0x3]
      %v195 = vlaneseq
      %v196 = vshrl.u32 %v195, 7
      %v197 = vsub.s32 0, %v196
      %v198 = vrot.slane %v192, %v197
      %v199 = vlaneseq
      %v200 = vshrl.u32 %v199, 7
      %v201 = vsub.s32 1, %v200
      %v202 = vrot.slane %v192, %v201
      %v206 = vlaneseq
      %v207 = vshrl.u32 %v206, 7
      %v208 = vsub.s32 0, %v207
      %v209 = vrot.slane %v193, %v208
      %v210 = vlaneseq
      %v211 = vshrl.u32 %v210, 7
      %v212 = vsub.s32 1, %v211
      %v213 = vrot.slane %v193, %v212
      %vm216 = vcmask 1040384
      %v217 = vsel %vm216, %v198, %v209
      %v218 = vsel %vm216, %v202, %v213
      %v220 = vlaneseq
      %v221 = vshrl.u32 %v220, 7
      %v222 = vsub.s32 0, %v221
      %v223 = vrot.slane %v191, %v222
      %v225 = vmul.f32 %v223, %v217
      %228 = vrot.lane.b32.xlu0 %v217, 127
      %v229 = vpop.permute.xlu0 %228
      %230 = vrot.lane.b32.xlu0 %v218, 127
      %v231 = vpop.permute.xlu0 %230
      %vm232 = vcmask 1039360
      %v233 = vsel %vm232, %v229, %v231
      %v235 = vmul.f32 %v223, %v233
      %236 = vrot.lane.b32.xlu0 %v217, 126
      %v237 = vpop.permute.xlu0 %236
      %238 = vrot.lane.b32.xlu0 %v218, 126
      %v239 = vpop.permute.xlu0 %238
      %vm240 = vcmask 1031168
      %v241 = vsel %vm240, %v237, %v239
      %v243 = vmul.f32 %v223, %v241
      %244 = vrot.lane.b32.xlu0 %v217, 123
      %v245 = vpop.permute.xlu0 %244
      %246 = vrot.lane.b32.xlu0 %v218, 123
      %v247 = vpop.permute.xlu0 %246
      %vm248 = vcmask 1006592
      %v249 = vsel %vm248, %v245, %v247
      %v251 = vmul.f32 %v223, %v249
      %252 = vrot.lane.b32.xlu0 %v217, 122
      %v253 = vpop.permute.xlu0 %252
      %254 = vrot.lane.b32.xlu0 %v218, 122
      %v255 = vpop.permute.xlu0 %254
      %vm256 = vcmask 998400
      %v257 = vsel %vm256, %v253, %v255
      %v259 = vmul.f32 %v223, %v257
      %260 = vrot.lane.b32.xlu0 %v217, 121
      %v261 = vpop.permute.xlu0 %260
      %262 = vrot.lane.b32.xlu0 %v218, 121
      %v263 = vpop.permute.xlu0 %262
      %vm264 = vcmask 990208
      %v265 = vsel %vm264, %v261, %v263
      %v267 = vmul.f32 %v223, %v265
      %268 = vrot.lane.b32.xlu0 %v217, 118
      %v269 = vpop.permute.xlu0 %268
      %270 = vrot.lane.b32.xlu0 %v218, 118
      %v271 = vpop.permute.xlu0 %270
      %vm272 = vcmask 965632
      %v273 = vsel %vm272, %v269, %v271
      %v275 = vmul.f32 %v223, %v273
      %276 = vrot.lane.b32.xlu0 %v217, 117
      %v277 = vpop.permute.xlu0 %276
      %278 = vrot.lane.b32.xlu0 %v218, 117
      %v279 = vpop.permute.xlu0 %278
      %vm280 = vcmask 957440
      %v281 = vsel %vm280, %v277, %v279
      %v283 = vmul.f32 %v223, %v281
      %284 = vrot.lane.b32.xlu0 %v217, 116
      %v285 = vpop.permute.xlu0 %284
      %286 = vrot.lane.b32.xlu0 %v218, 116
      %v287 = vpop.permute.xlu0 %286
      %vm288 = vcmask 949248
      %v289 = vsel %vm288, %v285, %v287
      %v291 = vmul.f32 %v223, %v289
      %292 = vrot.lane.b32.xlu0 %v217, 103
      %v293 = vpop.permute.xlu0 %292
      %294 = vrot.lane.b32.xlu0 %v218, 103
      %v295 = vpop.permute.xlu0 %294
      %vm296 = vcmask 842752
      %v297 = vsel %vm296, %v293, %v295
      %v299 = vmul.f32 %v223, %v297
      %300 = vrot.lane.b32.xlu0 %v217, 102
      %v301 = vpop.permute.xlu0 %300
      %302 = vrot.lane.b32.xlu0 %v218, 102
      %v303 = vpop.permute.xlu0 %302
      %vm304 = vcmask 834560
      %v305 = vsel %vm304, %v301, %v303
      %v307 = vmul.f32 %v223, %v305
      %308 = vrot.lane.b32.xlu0 %v217, 101
      %v309 = vpop.permute.xlu0 %308
      %310 = vrot.lane.b32.xlu0 %v218, 101
      %v311 = vpop.permute.xlu0 %310
      %vm312 = vcmask 826368
      %v313 = vsel %vm312, %v309, %v311
      %v315 = vmul.f32 %v223, %v313
      %316 = vrot.lane.b32.xlu0 %v217, 98
      %v317 = vpop.permute.xlu0 %316
      %318 = vrot.lane.b32.xlu0 %v218, 98
      %v319 = vpop.permute.xlu0 %318
      %vm320 = vcmask 801792
      %v321 = vsel %vm320, %v317, %v319
      %v323 = vmul.f32 %v223, %v321
      %324 = vrot.lane.b32.xlu0 %v217, 97
      %v325 = vpop.permute.xlu0 %324
      %326 = vrot.lane.b32.xlu0 %v218, 97
      %v327 = vpop.permute.xlu0 %326
      %vm328 = vcmask 793600
      %v329 = vsel %vm328, %v325, %v327
      %v331 = vmul.f32 %v223, %v329
      %332 = vrot.lane.b32.xlu0 %v217, 96
      %v333 = vpop.permute.xlu0 %332
      %334 = vrot.lane.b32.xlu0 %v218, 96
      %v335 = vpop.permute.xlu0 %334
      %vm336 = vcmask 785408
      %v337 = vsel %vm336, %v333, %v335
      %v339 = vmul.f32 %v223, %v337
      %340 = vrot.lane.b32.xlu0 %v217, 93
      %v341 = vpop.permute.xlu0 %340
      %342 = vrot.lane.b32.xlu0 %v218, 93
      %v343 = vpop.permute.xlu0 %342
      %vm344 = vcmask 760832
      %v345 = vsel %vm344, %v341, %v343
      %v347 = vmul.f32 %v223, %v345
      %348 = vrot.lane.b32.xlu0 %v217, 92
      %v349 = vpop.permute.xlu0 %348
      %350 = vrot.lane.b32.xlu0 %v218, 92
      %v351 = vpop.permute.xlu0 %350
      %vm352 = vcmask 752640
      %v353 = vsel %vm352, %v349, %v351
      %v355 = vmul.f32 %v223, %v353
      %356 = vrot.lane.b32.xlu0 %v217, 91
      %v357 = vpop.permute.xlu0 %356
      %358 = vrot.lane.b32.xlu0 %v218, 91
      %v359 = vpop.permute.xlu0 %358
      %vm360 = vcmask 744448
      %v361 = vsel %vm360, %v357, %v359
      %v363 = vmul.f32 %v223, %v361
      %364 = vrot.lane.b32.xlu0 %v217, 78
      %v365 = vpop.permute.xlu0 %364
      %366 = vrot.lane.b32.xlu0 %v218, 78
      %v367 = vpop.permute.xlu0 %366
      %vm368 = vcmask 637952
      %v369 = vsel %vm368, %v365, %v367
      %v371 = vmul.f32 %v223, %v369
      %372 = vrot.lane.b32.xlu0 %v217, 77
      %v373 = vpop.permute.xlu0 %372
      %374 = vrot.lane.b32.xlu0 %v218, 77
      %v375 = vpop.permute.xlu0 %374
      %vm376 = vcmask 629760
      %v377 = vsel %vm376, %v373, %v375
      %v379 = vmul.f32 %v223, %v377
      %380 = vrot.lane.b32.xlu0 %v217, 76
      %v381 = vpop.permute.xlu0 %380
      %382 = vrot.lane.b32.xlu0 %v218, 76
      %v383 = vpop.permute.xlu0 %382
      %vm384 = vcmask 621568
      %v385 = vsel %vm384, %v381, %v383
      %v387 = vmul.f32 %v223, %v385
      %388 = vrot.lane.b32.xlu0 %v217, 73
      %v389 = vpop.permute.xlu0 %388
      %390 = vrot.lane.b32.xlu0 %v218, 73
      %v391 = vpop.permute.xlu0 %390
      %vm392 = vcmask 596992
      %v393 = vsel %vm392, %v389, %v391
      %v395 = vmul.f32 %v223, %v393
      %396 = vrot.lane.b32.xlu0 %v217, 72
      %v397 = vpop.permute.xlu0 %396
      %398 = vrot.lane.b32.xlu0 %v218, 72
      %v399 = vpop.permute.xlu0 %398
      %vm400 = vcmask 588800
      %v401 = vsel %vm400, %v397, %v399
      %v403 = vmul.f32 %v223, %v401
      %404 = vrot.lane.b32.xlu0 %v217, 71
      %v405 = vpop.permute.xlu0 %404
      %406 = vrot.lane.b32.xlu0 %v218, 71
      %v407 = vpop.permute.xlu0 %406
      %vm408 = vcmask 580608
      %v409 = vsel %vm408, %v405, %v407
      %v411 = vmul.f32 %v223, %v409
      %412 = vrot.lane.b32.xlu0 %v217, 68
      %v413 = vpop.permute.xlu0 %412
      %414 = vrot.lane.b32.xlu0 %v218, 68
      %v415 = vpop.permute.xlu0 %414
      %vm416 = vcmask 556032
      %v417 = vsel %vm416, %v413, %v415
      %v419 = vmul.f32 %v223, %v417
      %420 = vrot.lane.b32.xlu0 %v217, 67
      %v421 = vpop.permute.xlu0 %420
      %422 = vrot.lane.b32.xlu0 %v218, 67
      %v423 = vpop.permute.xlu0 %422
      %vm424 = vcmask 547840
      %v425 = vsel %vm424, %v421, %v423
      %v427 = vmul.f32 %v223, %v425
      %428 = vrot.lane.b32.xlu0 %v217, 66
      %v429 = vpop.permute.xlu0 %428
      %430 = vrot.lane.b32.xlu0 %v218, 66
      %v431 = vpop.permute.xlu0 %430
      %vm432 = vcmask 539648
      %v433 = vsel %vm432, %v429, %v431
      %v435 = vmul.f32 %v223, %v433
      %v437 = vrot.slane %v235, 6
      %v440 = vrot.slane %v243, 4
      %v443 = vrot.slane %v251, 2
      %v446 = vrot.slane %v267, 6
      %v449 = vrot.slane %v275, 4
      %v452 = vrot.slane %v283, 2
      %v455 = vrot.slane %v299, 6
      %v458 = vrot.slane %v307, 4
      %v461 = vrot.slane %v315, 2
      %v464 = vrot.slane %v331, 6
      %v467 = vrot.slane %v339, 4
      %v470 = vrot.slane %v347, 2
      %vm472 = vcmask 1041408
      %v473 = vsel %vm472, %v225, %v437
      %vm474 = vcmask 1043456
      %v475 = vsel %vm474, %v473, %v440
      %vm476 = vcmask 1045504
      %v477 = vsel %vm476, %v475, %v443
      %v478 = vsel %vm472, %v259, %v446
      %v479 = vsel %vm474, %v478, %v449
      %v480 = vsel %vm476, %v479, %v452
      %v481 = vsel %vm472, %v291, %v455
      %v482 = vsel %vm474, %v481, %v458
      %v483 = vsel %vm476, %v482, %v461
      %v484 = vsel %vm472, %v323, %v464
      %v485 = vsel %vm474, %v484, %v467
      %v486 = vsel %vm476, %v485, %v470
      %v488 = vrot.slane %v363, 6
      %v491 = vrot.slane %v371, 4
      %v494 = vrot.slane %v379, 2
      %v497 = vrot.slane %v395, 6
      %v500 = vrot.slane %v403, 4
      %v503 = vrot.slane %v411, 2
      %v506 = vrot.slane %v427, 6
      %v509 = vrot.slane %v435, 4
      %v511 = vsel %vm472, %v355, %v488
      %v512 = vsel %vm474, %v511, %v491
      %v513 = vsel %vm476, %v512, %v494
      %v514 = vsel %vm472, %v387, %v497
      %v515 = vsel %vm474, %v514, %v500
      %v516 = vsel %vm476, %v515, %v503
      %v517 = vsel %vm472, %v419, %v506
      %v518 = vsel %vm474, %v517, %v509
      %v519 = vsel %vm476, %v518, %v223
      %vm520 = vcmask 1046528
      %v521 = vsel %vm520, %v519, 0.0
      %522 = vmatprep.subr.mxu0 0.0
      %523 = vmatpush1.xpose.msra.mxu0 %v477
      %524 = vmatprep.subr.mxu0 0.0
      %525 = vmatpush1.xpose.msra.mxu0 %v480
      %526 = vmatprep.subr.mxu0 0.0
      %527 = vmatpush1.xpose.msra.mxu0 %v483
      %528 = vmatprep.subr.mxu0 0.0
      %529 = vmatpush1.xpose.msra.mxu0 %v486
      %530 = vmatprep.subr.mxu0 0.0
      %531 = vmatpush1.xpose.msra.mxu0 %v513
      %532 = vmatprep.subr.mxu0 0.0
      %533 = vmatpush1.xpose.msra.mxu0 %v516
      %534 = vmatprep.subr.mxu0 0.0
      %535 = vmatpush1.xpose.msra.mxu0 %v521
      %536 = vmatprep.subr.mxu0 0.0
      %537 = vmatpush1.xpose.msra.mxu0 0.0
      %538 = vmatprep.subr.mxu0 0.0
      %539 = vmatpush1.xpose.msra.mxu0 0.0
      %540 = vmatprep.subr.mxu0 0.0
      %541 = vmatpush1.xpose.msra.mxu0 0.0
      %542 = vmatprep.subr.mxu0 0.0
      %543 = vmatpush1.xpose.msra.mxu0 0.0
      %544 = vmatprep.subr.mxu0 0.0
      %545 = vmatpush1.xpose.msra.mxu0 0.0
      %546 = vmatprep.subr.mxu0 0.0
      %547 = vmatpush1.xpose.msra.mxu0 0.0
      %548 = vmatprep.subr.mxu0 0.0
      %549 = vmatpush1.xpose.msra.mxu0 0.0
      %550 = vmatprep.subr.mxu0 0.0
      %551 = vmatpush1.xpose.msra.mxu0 0.0
      %552 = vmatprep.subr.mxu0 0.0
      %553 = vmatpush1.xpose.msra.mxu0 0.0
      %554 = vmatprep.subr.mxu0 0.0
      %555 = vmatpush1.xpose.msra.mxu0 0.0
      %556 = vmatprep.subr.mxu0 0.0
      %557 = vmatpush1.xpose.msra.mxu0 0.0
      %558 = vmatprep.subr.mxu0 0.0
      %559 = vmatpush1.xpose.msra.mxu0 0.0
      %560 = vmatprep.subr.mxu0 0.0
      %561 = vmatpush1.xpose.msra.mxu0 0.0
      %562 = vmatprep.subr.mxu0 0.0
      %563 = vmatpush1.xpose.msra.mxu0 0.0
      %564 = vmatprep.subr.mxu0 0.0
      %565 = vmatpush1.xpose.msra.mxu0 0.0
      %566 = vmatprep.subr.mxu0 0.0
      %567 = vmatpush1.xpose.msra.mxu0 0.0
      %568 = vmatprep.subr.mxu0 0.0
      %569 = vmatpush1.xpose.msra.mxu0 0.0
      %570 = vmatprep.subr.mxu0 0.0
      %571 = vmatpush1.xpose.msra.mxu0 0.0
      %572 = vmatprep.subr.mxu0 0.0
      %573 = vmatpush1.xpose.msra.mxu0 0.0
      %574 = vmatprep.subr.mxu0 0.0
      %575 = vmatpush1.xpose.msra.mxu0 0.0
      %576 = vmatprep.subr.mxu0 0.0
      %577 = vmatpush1.xpose.msra.mxu0 0.0
      %578 = vmatprep.subr.mxu0 0.0
      %579 = vmatpush1.xpose.msra.mxu0 0.0
      %580 = vmatprep.subr.mxu0 0.0
      %581 = vmatpush1.xpose.msra.mxu0 0.0
      %582 = vmatprep.subr.mxu0 0.0
      %583 = vmatpush1.xpose.msra.mxu0 0.0
      %584 = vmatprep.subr.mxu0 0.0
      %585 = vmatpush1.xpose.msra.mxu0 0.0
      %586 = vmatprep.mubr.f32.mxu0 0.0
      %587 = vmatmul.mubr.f32.gmra.mrb[0].mxu0 %v477
      %v588 = vpop.f32.mrb[0].mxu0
      %v589 = vadd.f32 0.0, %v588
      %v590 = vpop.f32.mrb[0].mxu0
      %591 = vmatprep.mubr.f32.mxu0 0.0
      %592 = vmatmul.mubr.f32.gmra.mrb[0].mxu0 %v480
      %v593 = vpop.f32.mrb[0].mxu0
      %v594 = vadd.f32 0.0, %v593
      %v595 = vpop.f32.mrb[0].mxu0
      %596 = vmatprep.mubr.f32.mxu0 0.0
      %597 = vmatmul.mubr.f32.gmra.mrb[0].mxu0 %v483
      %v598 = vpop.f32.mrb[0].mxu0
      %v599 = vadd.f32 0.0, %v598
      %v600 = vpop.f32.mrb[0].mxu0
      %601 = vmatprep.mubr.f32.mxu0 0.0
      %602 = vmatmul.mubr.f32.gmra.mrb[0].mxu0 %v486
      %v603 = vpop.f32.mrb[0].mxu0
      %v604 = vadd.f32 0.0, %v603
      %v605 = vpop.f32.mrb[0].mxu0
      %606 = vmatprep.mubr.f32.mxu0 0.0
      %607 = vmatmul.mubr.f32.gmra.mrb[0].mxu0 %v513
      %v608 = vpop.f32.mrb[0].mxu0
      %v609 = vadd.f32 0.0, %v608
      %v610 = vpop.f32.mrb[0].mxu0
      %611 = vmatprep.mubr.f32.mxu0 0.0
      %612 = vmatmul.mubr.f32.gmra.mrb[0].mxu0 %v516
      %v613 = vpop.f32.mrb[0].mxu0
      %v614 = vadd.f32 0.0, %v613
      %v615 = vpop.f32.mrb[0].mxu0
      %616 = vmatprep.mubr.f32.mxu0 0.0
      %617 = vmatmul.mubr.f32.gmra.mrb[0].mxu0 %v521
      %v618 = vpop.f32.mrb[0].mxu0
      %v619 = vadd.f32 0.0, %v618
      %v620 = vpop.f32.mrb[0].mxu0
      %621 = vmatprep.mubr.f32.mxu0 0.0
      %622 = vmatmul.mubr.f32.gmra.mrb[0].mxu0 0.0
      %v623 = vpop.f32.mrb[0].mxu0
      %v624 = vadd.f32 0.0, %v623
      %v625 = vpop.f32.mrb[0].mxu0
      %626 = vdwg.mxu0
      %628 = vset.pattern.permute.xlu0 54
      %629 = vperm.xlu0 %628, %v589
      %v630 = vpop.permute.xlu0 %629
      %633 = vset.pattern.permute.xlu0 54
      %634 = vperm.xlu0 %633, %v594
      %v635 = vpop.permute.xlu0 %634
      %638 = vset.pattern.permute.xlu0 54
      %639 = vperm.xlu0 %638, %v599
      %v640 = vpop.permute.xlu0 %639
      %643 = vset.pattern.permute.xlu0 54
      %644 = vperm.xlu0 %643, %v604
      %v645 = vpop.permute.xlu0 %644
      %648 = vset.pattern.permute.xlu0 54
      %649 = vperm.xlu0 %648, %v609
      %v650 = vpop.permute.xlu0 %649
      %653 = vset.pattern.permute.xlu0 54
      %654 = vperm.xlu0 %653, %v614
      %v655 = vpop.permute.xlu0 %654
      %658 = vset.pattern.permute.xlu0 54
      %659 = vperm.xlu0 %658, %v619
      %v660 = vpop.permute.xlu0 %659
      %663 = vset.pattern.permute.xlu0 54
      %664 = vperm.xlu0 %663, %v624
      %v665 = vpop.permute.xlu0 %664
      %v667 = vlaneseq
      %v668 = vshrl.u32 %v667, 7
      %v669 = vsub.s32 6, %v668
      %v670 = vrot.slane %v619, %v669
      %v671 = vmul.f32 %v630, %v670
      %v672 = vmul.f32 %v635, %v670
      %v673 = vmul.f32 %v640, %v670
      %v674 = vmul.f32 %v645, %v670
      %v675 = vmul.f32 %v650, %v670
      %v676 = vmul.f32 %v655, %v670
      %v677 = vmul.f32 %v660, %v670
      %v678 = vmul.f32 %v665, %v670
      %v679 = vmul.f32 %v671, 0.037037037
      %v680 = vmul.f32 %v672, 0.037037037
      %v681 = vmul.f32 %v673, 0.037037037
      %v682 = vmul.f32 %v674, 0.037037037
      %v683 = vmul.f32 %v675, 0.037037037
      %v684 = vmul.f32 %v676, 0.037037037
      %v685 = vmul.f32 %v677, 0.037037037
      %v686 = vmul.f32 %v678, 0.037037037
      %v687 = vsub.f32 %v589, %v679
      %v688 = vsub.f32 %v594, %v680
      %v689 = vsub.f32 %v599, %v681
      %v690 = vsub.f32 %v604, %v682
      %v691 = vsub.f32 %v609, %v683
      %v692 = vsub.f32 %v614, %v684
      %v693 = vsub.f32 %v619, %v685
      %v694 = vsub.f32 %v624, %v686
      %s695 = scalar_lea.vmem %s180, 1
      %v696 = vld [vmem:[%s695] ss:$2 sm:$0x3]
      %s697 = scalar_lea.vmem %s185, 1
      %v698 = vld [vmem:[%s697] ss:$2 sm:$0x3]
      %v700 = vlaneseq
      %v701 = vshrl.u32 %v700, 7
      %v702 = vsub.s32 0, %v701
      %v703 = vrot.slane %v696, %v702
      %v704 = vlaneseq
      %v705 = vshrl.u32 %v704, 7
      %v706 = vsub.s32 1, %v705
      %v707 = vrot.slane %v696, %v706
      %v711 = vlaneseq
      %v712 = vshrl.u32 %v711, 7
      %v713 = vsub.s32 0, %v712
      %v714 = vrot.slane %v698, %v713
      %v715 = vlaneseq
      %v716 = vshrl.u32 %v715, 7
      %v717 = vsub.s32 1, %v716
      %v718 = vrot.slane %v698, %v717
      %v721 = vsel %vm216, %v703, %v714
      %v722 = vsel %vm216, %v707, %v718
      %v723 = vmul.f32 %v223, %v721
      %726 = vrot.lane.b32.xlu0 %v721, 127
      %v727 = vpop.permute.xlu0 %726
      %728 = vrot.lane.b32.xlu0 %v722, 127
      %v729 = vpop.permute.xlu0 %728
      %v730 = vsel %vm232, %v727, %v729
      %v732 = vmul.f32 %v223, %v730
      %733 = vrot.lane.b32.xlu0 %v721, 126
      %v734 = vpop.permute.xlu0 %733
      %735 = vrot.lane.b32.xlu0 %v722, 126
      %v736 = vpop.permute.xlu0 %735
      %v737 = vsel %vm240, %v734, %v736
      %v739 = vmul.f32 %v223, %v737
      %740 = vrot.lane.b32.xlu0 %v721, 123
      %v741 = vpop.permute.xlu0 %740
      %742 = vrot.lane.b32.xlu0 %v722, 123
      %v743 = vpop.permute.xlu0 %742
      %v744 = vsel %vm248, %v741, %v743
      %v746 = vmul.f32 %v223, %v744
      %747 = vrot.lane.b32.xlu0 %v721, 122
      %v748 = vpop.permute.xlu0 %747
      %749 = vrot.lane.b32.xlu0 %v722, 122
      %v750 = vpop.permute.xlu0 %749
      %v751 = vsel %vm256, %v748, %v750
      %v753 = vmul.f32 %v223, %v751
      %754 = vrot.lane.b32.xlu0 %v721, 121
      %v755 = vpop.permute.xlu0 %754
      %756 = vrot.lane.b32.xlu0 %v722, 121
      %v757 = vpop.permute.xlu0 %756
      %v758 = vsel %vm264, %v755, %v757
      %v760 = vmul.f32 %v223, %v758
      %761 = vrot.lane.b32.xlu0 %v721, 118
      %v762 = vpop.permute.xlu0 %761
      %763 = vrot.lane.b32.xlu0 %v722, 118
      %v764 = vpop.permute.xlu0 %763
      %v765 = vsel %vm272, %v762, %v764
      %v767 = vmul.f32 %v223, %v765
      %768 = vrot.lane.b32.xlu0 %v721, 117
      %v769 = vpop.permute.xlu0 %768
      %770 = vrot.lane.b32.xlu0 %v722, 117
      %v771 = vpop.permute.xlu0 %770
      %v772 = vsel %vm280, %v769, %v771
      %v774 = vmul.f32 %v223, %v772
      %775 = vrot.lane.b32.xlu0 %v721, 116
      %v776 = vpop.permute.xlu0 %775
      %777 = vrot.lane.b32.xlu0 %v722, 116
      %v778 = vpop.permute.xlu0 %777
      %v779 = vsel %vm288, %v776, %v778
      %v781 = vmul.f32 %v223, %v779
      %782 = vrot.lane.b32.xlu0 %v721, 103
      %v783 = vpop.permute.xlu0 %782
      %784 = vrot.lane.b32.xlu0 %v722, 103
      %v785 = vpop.permute.xlu0 %784
      %v786 = vsel %vm296, %v783, %v785
      %v788 = vmul.f32 %v223, %v786
      %789 = vrot.lane.b32.xlu0 %v721, 102
      %v790 = vpop.permute.xlu0 %789
      %791 = vrot.lane.b32.xlu0 %v722, 102
      %v792 = vpop.permute.xlu0 %791
      %v793 = vsel %vm304, %v790, %v792
      %v795 = vmul.f32 %v223, %v793
      %796 = vrot.lane.b32.xlu0 %v721, 101
      %v797 = vpop.permute.xlu0 %796
      %798 = vrot.lane.b32.xlu0 %v722, 101
      %v799 = vpop.permute.xlu0 %798
      %v800 = vsel %vm312, %v797, %v799
      %v802 = vmul.f32 %v223, %v800
      %803 = vrot.lane.b32.xlu0 %v721, 98
      %v804 = vpop.permute.xlu0 %803
      %805 = vrot.lane.b32.xlu0 %v722, 98
      %v806 = vpop.permute.xlu0 %805
      %v807 = vsel %vm320, %v804, %v806
      %v809 = vmul.f32 %v223, %v807
      %810 = vrot.lane.b32.xlu0 %v721, 97
      %v811 = vpop.permute.xlu0 %810
      %812 = vrot.lane.b32.xlu0 %v722, 97
      %v813 = vpop.permute.xlu0 %812
      %v814 = vsel %vm328, %v811, %v813
      %v816 = vmul.f32 %v223, %v814
      %817 = vrot.lane.b32.xlu0 %v721, 96
      %v818 = vpop.permute.xlu0 %817
      %819 = vrot.lane.b32.xlu0 %v722, 96
      %v820 = vpop.permute.xlu0 %819
      %v821 = vsel %vm336, %v818, %v820
      %v823 = vmul.f32 %v223, %v821
      %824 = vrot.lane.b32.xlu0 %v721, 93
      %v825 = vpop.permute.xlu0 %824
      %826 = vrot.lane.b32.xlu0 %v722, 93
      %v827 = vpop.permute.xlu0 %826
      %v828 = vsel %vm344, %v825, %v827
      %v830 = vmul.f32 %v223, %v828
      %831 = vrot.lane.b32.xlu0 %v721, 92
      %v832 = vpop.permute.xlu0 %831
      %833 = vrot.lane.b32.xlu0 %v722, 92
      %v834 = vpop.permute.xlu0 %833
      %v835 = vsel %vm352, %v832, %v834
      %v837 = vmul.f32 %v223, %v835
      %838 = vrot.lane.b32.xlu0 %v721, 91
      %v839 = vpop.permute.xlu0 %838
      %840 = vrot.lane.b32.xlu0 %v722, 91
      %v841 = vpop.permute.xlu0 %840
      %v842 = vsel %vm360, %v839, %v841
      %v844 = vmul.f32 %v223, %v842
      %845 = vrot.lane.b32.xlu0 %v721, 78
      %v846 = vpop.permute.xlu0 %845
      %847 = vrot.lane.b32.xlu0 %v722, 78
      %v848 = vpop.permute.xlu0 %847
      %v849 = vsel %vm368, %v846, %v848
      %v851 = vmul.f32 %v223, %v849
      %852 = vrot.lane.b32.xlu0 %v721, 77
      %v853 = vpop.permute.xlu0 %852
      %854 = vrot.lane.b32.xlu0 %v722, 77
      %v855 = vpop.permute.xlu0 %854
      %v856 = vsel %vm376, %v853, %v855
      %v858 = vmul.f32 %v223, %v856
      %859 = vrot.lane.b32.xlu0 %v721, 76
      %v860 = vpop.permute.xlu0 %859
      %861 = vrot.lane.b32.xlu0 %v722, 76
      %v862 = vpop.permute.xlu0 %861
      %v863 = vsel %vm384, %v860, %v862
      %v865 = vmul.f32 %v223, %v863
      %866 = vrot.lane.b32.xlu0 %v721, 73
      %v867 = vpop.permute.xlu0 %866
      %868 = vrot.lane.b32.xlu0 %v722, 73
      %v869 = vpop.permute.xlu0 %868
      %v870 = vsel %vm392, %v867, %v869
      %v872 = vmul.f32 %v223, %v870
      %873 = vrot.lane.b32.xlu0 %v721, 72
      %v874 = vpop.permute.xlu0 %873
      %875 = vrot.lane.b32.xlu0 %v722, 72
      %v876 = vpop.permute.xlu0 %875
      %v877 = vsel %vm400, %v874, %v876
      %v879 = vmul.f32 %v223, %v877
      %880 = vrot.lane.b32.xlu0 %v721, 71
      %v881 = vpop.permute.xlu0 %880
      %882 = vrot.lane.b32.xlu0 %v722, 71
      %v883 = vpop.permute.xlu0 %882
      %v884 = vsel %vm408, %v881, %v883
      %v886 = vmul.f32 %v223, %v884
      %887 = vrot.lane.b32.xlu0 %v721, 68
      %v888 = vpop.permute.xlu0 %887
      %889 = vrot.lane.b32.xlu0 %v722, 68
      %v890 = vpop.permute.xlu0 %889
      %v891 = vsel %vm416, %v888, %v890
      %v893 = vmul.f32 %v223, %v891
      %894 = vrot.lane.b32.xlu0 %v721, 67
      %v895 = vpop.permute.xlu0 %894
      %896 = vrot.lane.b32.xlu0 %v722, 67
      %v897 = vpop.permute.xlu0 %896
      %v898 = vsel %vm424, %v895, %v897
      %v900 = vmul.f32 %v223, %v898
      %901 = vrot.lane.b32.xlu0 %v721, 66
      %v902 = vpop.permute.xlu0 %901
      %903 = vrot.lane.b32.xlu0 %v722, 66
      %v904 = vpop.permute.xlu0 %903
      %v905 = vsel %vm432, %v902, %v904
      %v907 = vmul.f32 %v223, %v905
      %v909 = vrot.slane %v732, 6
      %v912 = vrot.slane %v739, 4
      %v915 = vrot.slane %v746, 2
      %v918 = vrot.slane %v760, 6
      %v921 = vrot.slane %v767, 4
      %v924 = vrot.slane %v774, 2
      %v927 = vrot.slane %v788, 6
      %v930 = vrot.slane %v795, 4
      %v933 = vrot.slane %v802, 2
      %v936 = vrot.slane %v816, 6
      %v939 = vrot.slane %v823, 4
      %v942 = vrot.slane %v830, 2
      %v944 = vsel %vm472, %v723, %v909
      %v945 = vsel %vm474, %v944, %v912
      %v946 = vsel %vm476, %v945, %v915
      %v947 = vsel %vm472, %v753, %v918
      %v948 = vsel %vm474, %v947, %v921
      %v949 = vsel %vm476, %v948, %v924
      %v950 = vsel %vm472, %v781, %v927
      %v951 = vsel %vm474, %v950, %v930
      %v952 = vsel %vm476, %v951, %v933
      %v953 = vsel %vm472, %v809, %v936
      %v954 = vsel %vm474, %v953, %v939
      %v955 = vsel %vm476, %v954, %v942
      %v957 = vrot.slane %v844, 6
      %v960 = vrot.slane %v851, 4
      %v963 = vrot.slane %v858, 2
      %v966 = vrot.slane %v872, 6
      %v969 = vrot.slane %v879, 4
      %v972 = vrot.slane %v886, 2
      %v975 = vrot.slane %v900, 6
      %v978 = vrot.slane %v907, 4
      %v980 = vsel %vm472, %v837, %v957
      %v981 = vsel %vm474, %v980, %v960
      %v982 = vsel %vm476, %v981, %v963
      %v983 = vsel %vm472, %v865, %v966
      %v984 = vsel %vm474, %v983, %v969
      %v985 = vsel %vm476, %v984, %v972
      %v986 = vsel %vm472, %v893, %v975
      %v987 = vsel %vm474, %v986, %v978
      %v988 = vsel %vm476, %v987, %v223
      %v989 = vsel %vm520, %v988, 0.0
      %990 = vmatprep.subr.mxu0 0.0
      %991 = vmatpush1.xpose.msra.mxu0 %v946
      %992 = vmatprep.subr.mxu0 0.0
      %993 = vmatpush1.xpose.msra.mxu0 %v949
      %994 = vmatprep.subr.mxu0 0.0
      %995 = vmatpush1.xpose.msra.mxu0 %v952
      %996 = vmatprep.subr.mxu0 0.0
      %997 = vmatpush1.xpose.msra.mxu0 %v955
      %998 = vmatprep.subr.mxu0 0.0
      %999 = vmatpush1.xpose.msra.mxu0 %v982
      %1000 = vmatprep.subr.mxu0 0.0
      %1001 = vmatpush1.xpose.msra.mxu0 %v985
      %1002 = vmatprep.subr.mxu0 0.0
      %1003 = vmatpush1.xpose.msra.mxu0 %v989
      %1004 = vmatprep.subr.mxu0 0.0
      %1005 = vmatpush1.xpose.msra.mxu0 0.0
      %1006 = vmatprep.subr.mxu0 0.0
      %1007 = vmatpush1.xpose.msra.mxu0 0.0
      %1008 = vmatprep.subr.mxu0 0.0
      %1009 = vmatpush1.xpose.msra.mxu0 0.0
      %1010 = vmatprep.subr.mxu0 0.0
      %1011 = vmatpush1.xpose.msra.mxu0 0.0
      %1012 = vmatprep.subr.mxu0 0.0
      %1013 = vmatpush1.xpose.msra.mxu0 0.0
      %1014 = vmatprep.subr.mxu0 0.0
      %1015 = vmatpush1.xpose.msra.mxu0 0.0
      %1016 = vmatprep.subr.mxu0 0.0
      %1017 = vmatpush1.xpose.msra.mxu0 0.0
      %1018 = vmatprep.subr.mxu0 0.0
      %1019 = vmatpush1.xpose.msra.mxu0 0.0
      %1020 = vmatprep.subr.mxu0 0.0
      %1021 = vmatpush1.xpose.msra.mxu0 0.0
      %1022 = vmatprep.subr.mxu0 0.0
      %1023 = vmatpush1.xpose.msra.mxu0 0.0
      %1024 = vmatprep.subr.mxu0 0.0
      %1025 = vmatpush1.xpose.msra.mxu0 0.0
      %1026 = vmatprep.subr.mxu0 0.0
      %1027 = vmatpush1.xpose.msra.mxu0 0.0
      %1028 = vmatprep.subr.mxu0 0.0
      %1029 = vmatpush1.xpose.msra.mxu0 0.0
      %1030 = vmatprep.subr.mxu0 0.0
      %1031 = vmatpush1.xpose.msra.mxu0 0.0
      %1032 = vmatprep.subr.mxu0 0.0
      %1033 = vmatpush1.xpose.msra.mxu0 0.0
      %1034 = vmatprep.subr.mxu0 0.0
      %1035 = vmatpush1.xpose.msra.mxu0 0.0
      %1036 = vmatprep.subr.mxu0 0.0
      %1037 = vmatpush1.xpose.msra.mxu0 0.0
      %1038 = vmatprep.subr.mxu0 0.0
      %1039 = vmatpush1.xpose.msra.mxu0 0.0
      %1040 = vmatprep.subr.mxu0 0.0
      %1041 = vmatpush1.xpose.msra.mxu0 0.0
      %1042 = vmatprep.subr.mxu0 0.0
      %1043 = vmatpush1.xpose.msra.mxu0 0.0
      %1044 = vmatprep.subr.mxu0 0.0
      %1045 = vmatpush1.xpose.msra.mxu0 0.0
      %1046 = vmatprep.subr.mxu0 0.0
      %1047 = vmatpush1.xpose.msra.mxu0 0.0
      %1048 = vmatprep.subr.mxu0 0.0
      %1049 = vmatpush1.xpose.msra.mxu0 0.0
      %1050 = vmatprep.subr.mxu0 0.0
      %1051 = vmatpush1.xpose.msra.mxu0 0.0
      %1052 = vmatprep.subr.mxu0 0.0
      %1053 = vmatpush1.xpose.msra.mxu0 0.0
      %1054 = vmatprep.mubr.f32.mxu0 0.0
      %1055 = vmatmul.mubr.f32.gmra.mrb[0].mxu0 %v946
      %v1056 = vpop.f32.mrb[0].mxu0
      %v1057 = vadd.f32 0.0, %v1056
      %v1058 = vpop.f32.mrb[0].mxu0
      %1059 = vmatprep.mubr.f32.mxu0 0.0
      %1060 = vmatmul.mubr.f32.gmra.mrb[0].mxu0 %v949
      %v1061 = vpop.f32.mrb[0].mxu0
      %v1062 = vadd.f32 0.0, %v1061
      %v1063 = vpop.f32.mrb[0].mxu0
      %1064 = vmatprep.mubr.f32.mxu0 0.0
      %1065 = vmatmul.mubr.f32.gmra.mrb[0].mxu0 %v952
      %v1066 = vpop.f32.mrb[0].mxu0
      %v1067 = vadd.f32 0.0, %v1066
      %v1068 = vpop.f32.mrb[0].mxu0
      %1069 = vmatprep.mubr.f32.mxu0 0.0
      %1070 = vmatmul.mubr.f32.gmra.mrb[0].mxu0 %v955
      %v1071 = vpop.f32.mrb[0].mxu0
      %v1072 = vadd.f32 0.0, %v1071
      %v1073 = vpop.f32.mrb[0].mxu0
      %1074 = vmatprep.mubr.f32.mxu0 0.0
      %1075 = vmatmul.mubr.f32.gmra.mrb[0].mxu0 %v982
      %v1076 = vpop.f32.mrb[0].mxu0
      %v1077 = vadd.f32 0.0, %v1076
      %v1078 = vpop.f32.mrb[0].mxu0
      %1079 = vmatprep.mubr.f32.mxu0 0.0
      %1080 = vmatmul.mubr.f32.gmra.mrb[0].mxu0 %v985
      %v1081 = vpop.f32.mrb[0].mxu0
      %v1082 = vadd.f32 0.0, %v1081
      %v1083 = vpop.f32.mrb[0].mxu0
      %1084 = vmatprep.mubr.f32.mxu0 0.0
      %1085 = vmatmul.mubr.f32.gmra.mrb[0].mxu0 %v989
      %v1086 = vpop.f32.mrb[0].mxu0
      %v1087 = vadd.f32 0.0, %v1086
      %v1088 = vpop.f32.mrb[0].mxu0
      %1089 = vmatprep.mubr.f32.mxu0 0.0
      %1090 = vmatmul.mubr.f32.gmra.mrb[0].mxu0 0.0
      %v1091 = vpop.f32.mrb[0].mxu0
      %v1092 = vadd.f32 0.0, %v1091
      %v1093 = vpop.f32.mrb[0].mxu0
      %1094 = vdwg.mxu0
      %1096 = vset.pattern.permute.xlu0 54
      %1097 = vperm.xlu0 %1096, %v1057
      %v1098 = vpop.permute.xlu0 %1097
      %1101 = vset.pattern.permute.xlu0 54
      %1102 = vperm.xlu0 %1101, %v1062
      %v1103 = vpop.permute.xlu0 %1102
      %1106 = vset.pattern.permute.xlu0 54
      %1107 = vperm.xlu0 %1106, %v1067
      %v1108 = vpop.permute.xlu0 %1107
      %1111 = vset.pattern.permute.xlu0 54
      %1112 = vperm.xlu0 %1111, %v1072
      %v1113 = vpop.permute.xlu0 %1112
      %1116 = vset.pattern.permute.xlu0 54
      %1117 = vperm.xlu0 %1116, %v1077
      %v1118 = vpop.permute.xlu0 %1117
      %1121 = vset.pattern.permute.xlu0 54
      %1122 = vperm.xlu0 %1121, %v1082
      %v1123 = vpop.permute.xlu0 %1122
      %1126 = vset.pattern.permute.xlu0 54
      %1127 = vperm.xlu0 %1126, %v1087
      %v1128 = vpop.permute.xlu0 %1127
      %1131 = vset.pattern.permute.xlu0 54
      %1132 = vperm.xlu0 %1131, %v1092
      %v1133 = vpop.permute.xlu0 %1132
      %v1135 = vlaneseq
      %v1136 = vshrl.u32 %v1135, 7
      %v1137 = vsub.s32 6, %v1136
      %v1138 = vrot.slane %v1087, %v1137
      %v1139 = vmul.f32 %v1098, %v1138
      %v1140 = vmul.f32 %v1103, %v1138
      %v1141 = vmul.f32 %v1108, %v1138
      %v1142 = vmul.f32 %v1113, %v1138
      %v1143 = vmul.f32 %v1118, %v1138
      %v1144 = vmul.f32 %v1123, %v1138
      %v1145 = vmul.f32 %v1128, %v1138
      %v1146 = vmul.f32 %v1133, %v1138
      %v1147 = vmul.f32 %v1139, 0.037037037
      %v1148 = vmul.f32 %v1140, 0.037037037
      %v1149 = vmul.f32 %v1141, 0.037037037
      %v1150 = vmul.f32 %v1142, 0.037037037
      %v1151 = vmul.f32 %v1143, 0.037037037
      %v1152 = vmul.f32 %v1144, 0.037037037
      %v1153 = vmul.f32 %v1145, 0.037037037
      %v1154 = vmul.f32 %v1146, 0.037037037
      %v1155 = vsub.f32 %v1057, %v1147
      %v1156 = vsub.f32 %v1062, %v1148
      %v1157 = vsub.f32 %v1067, %v1149
      %v1158 = vsub.f32 %v1072, %v1150
      %v1159 = vsub.f32 %v1077, %v1151
      %v1160 = vsub.f32 %v1082, %v1152
      %v1161 = vsub.f32 %v1087, %v1153
      %v1162 = vsub.f32 %v1092, %v1154
      %1171 = vrot.lane.b32.xlu0 %v1155, 64
      %v1172 = vpop.permute.xlu0 %1171
      %1173 = vrot.lane.b32.xlu0 %v1156, 64
      %v1174 = vpop.permute.xlu0 %1173
      %1175 = vrot.lane.b32.xlu0 %v1157, 64
      %v1176 = vpop.permute.xlu0 %1175
      %1177 = vrot.lane.b32.xlu0 %v1158, 64
      %v1178 = vpop.permute.xlu0 %1177
      %1179 = vrot.lane.b32.xlu0 %v1159, 64
      %v1180 = vpop.permute.xlu0 %1179
      %1181 = vrot.lane.b32.xlu0 %v1160, 64
      %v1182 = vpop.permute.xlu0 %1181
      %1183 = vrot.lane.b32.xlu0 %v1161, 64
      %v1184 = vpop.permute.xlu0 %1183
      %1185 = vrot.lane.b32.xlu0 %v1162, 64
      %v1186 = vpop.permute.xlu0 %1185
      %vm1195 = vcmask 523264
      %v1196 = vsel %vm1195, %v687, %v1172
      %v1197 = vsel %vm1195, %v688, %v1174
      %v1198 = vsel %vm1195, %v689, %v1176
      %v1199 = vsel %vm1195, %v690, %v1178
      %v1200 = vsel %vm1195, %v691, %v1180
      %v1201 = vsel %vm1195, %v692, %v1182
      %v1202 = vsel %vm1195, %v693, %v1184
      %v1203 = vsel %vm1195, %v694, %v1186
      %1204 = vst [vmem:[%s190] sm:$0xff] %v1196
      %1205 = vst [vmem:[%s190 + $0x8] sm:$0xff] %v1197
      %1206 = vst [vmem:[%s190 + $0x10] sm:$0xff] %v1198
      %1207 = vst [vmem:[%s190 + $0x18] sm:$0xff] %v1199
      %1208 = vst [vmem:[%s190 + $0x20] sm:$0xff] %v1200
      %1209 = vst [vmem:[%s190 + $0x28] sm:$0xff] %v1201
      %1210 = vst [vmem:[%s190 + $0x30] sm:$0xff] %v1202
      %1211 = vst [vmem:[%s190 + $0x38] sm:$0xff] %v1203
      %p1212 = scmp.lt.s32.totalorder %s14, 1
      %s1213 = scalar_select %p1212, %s14, 1
      %s1214 = smul.addr %s1213, 8
      %s1215 = smul.addr %s1214, 8
      %s1216 = scalar_lea.vmem %s3, %s1215
      // Predicated region
      $region33: #{rmi_loss_3d.1} parent=31 // pred_check
        %p1217 = pneg %p105
      $region34: #{rmi_loss_3d.1} parent=31 // pred_check_branch
        %1219 = sbr.rel (%p1217) target = $region36
      $region35: #{rmi_loss_3d.1} parent=31 // pred_region
        _
      $region36: #{rmi_loss_3d.1} parent=31 // pred_fallthru
        _
    $region32: #{rmi_loss_3d.1} parent=5 // pred_fallthru
      _
    %p1220 = scmp.le.s32.totalorder 2, %s9
    // Predicated region
    $region37: #{rmi_loss_3d.1} parent=5 // pred_check
      %p1221 = pneg %p1220
    $region38: #{rmi_loss_3d.1} parent=5 // pred_check_branch
      %1223 = sbr.rel (%p1221) target = $region40
    $region39: #{rmi_loss_3d.1} parent=5 // pred_region
      %s1224 = ssub.s32 %s9, 2
      // Predicated region
      $region41: #{rmi_loss_3d.1} parent=39 // pred_check
        %p1225 = pneg %p111
      $region42: #{rmi_loss_3d.1} parent=39 // pred_check_branch
        %1227 = sbr.rel (%p1225) target = $region44
      $region43: #{rmi_loss_3d.1} parent=39 // pred_region
        %p1228 = scmp.lt.s32.totalorder %s15, 1
        %s1229 = scalar_select %p1228, %s15, 1
        %s1230 = smul.addr %s1229, 8
        %s1231 = smul.addr %s1230, 8
        %s1232 = scalar_lea.vmem %s3, %s1231
      $region44: #{rmi_loss_3d.1} parent=39 // pred_fallthru
        _
    $region40: #{rmi_loss_3d.1} parent=5 // pred_fallthru
      _
  $region6: #{rmi_loss_3d.1} parent=0 // loop_footer
    %s13 = sadd.s32 1, %s9
  $region7: #{rmi_loss_3d.1} parent=0 // loop_footer_branch
    %8 = sbr.rel target = $region3
  $region8: #{rmi_loss_3d.1} parent=0 // loop_exit
    _

// kernel: custom-call.12
$region0: #{custom-call.12}
  %s0 = inlined_call_operand.vmem [shape: f32[2,2,1,27,27], index: 0, kind: input, shape index: {}]
  %s1 = inlined_call_operand.vmem [shape: f32[2,2,1,27,27], index: 1, kind: output, shape index: {}]
  $region1: #{custom-call.12} parent=0
    #allocation0 [shape = 'u8[32768]{0}', space=vmem, size = 0x8000, scoped, tag = 'operand span for operand 0']
    #allocation1 [shape = 'u8[32768]{0}', space=vmem, size = 0x8000, scoped, tag = 'operand span for operand 1']
    loop: start=0, step=1, limit=6
    $region2: #{custom-call.12} parent=1 // loop_pre_header
      _
    $region3: #{custom-call.12} parent=1 // loop_header
      %s3 = sphi 0, %s7
      %p4 = scmp.ge.s32.totalorder %s3, 6
      %s10 = sphi 0, %s43
      %s11 = sphi 0, %s39
      %s12 = sphi 0, %s35
      %s13 = sphi 0, %s31
      %s14 = sphi 0, %s27
      %s15 = sphi 0, %s10
      %s16 = sphi 0, %s11
      %s17 = sphi 0, %s12
      %s18 = sphi 0, %s13
      %s19 = sphi 0, %s14
      %s20 = sphi 0, %s15
      %s21 = sphi 0, %s16
      %s22 = sphi 0, %s17
      %s23 = sphi 0, %s18
      %s24 = sphi 0, %s19
    $region4: #{custom-call.12} parent=1 // loop_header_branch
      %6 = sbr.rel (%p4) target = $region8
    $region5: #{custom-call.12} parent=1 // loop_body
      %s8 = ssub.s32 %s3, 1
      %s9 = ssub.s32 %s3, 2
      %s25 = sadd.s32 1, %s14
      %p26 = scmp.ge.s32.totalorder %s25, 1
      %s27 = scalar_select %p26, 0, %s25
      %s28 = sadd.s32 1, %s13
      %s29 = scalar_select %p26, %s28, %s13
      %p30 = scmp.ge.s32.totalorder %s29, 1
      %s31 = scalar_select %p30, 0, %s29
      %s32 = sadd.s32 1, %s12
      %s33 = scalar_select %p30, %s32, %s12
      %p34 = scmp.ge.s32.totalorder %s33, 1
      %s35 = scalar_select %p34, 0, %s33
      %s36 = sadd.s32 1, %s11
      %s37 = scalar_select %p34, %s36, %s11
      %p38 = scmp.ge.s32.totalorder %s37, 2
      %s39 = scalar_select %p38, 0, %s37
      %s40 = sadd.s32 1, %s10
      %s41 = scalar_select %p38, %s40, %s10
      %p42 = scmp.ge.s32.totalorder %s41, 2
      %s43 = scalar_select %p42, 0, %s41
      %p44 = scmp.le.s32.totalorder 1, %s3
      %p45 = scmp.lt.s32.totalorder %s3, 5
      %p46 = pnand %p44, %p45
      %p47 = pneg %p46
      // Predicated region
      $region9: #{custom-call.12} parent=5 // pred_check
        _
      $region10: #{custom-call.12} parent=5 // pred_check_branch
        %49 = sbr.rel (%p46) target = $region12
      $region11: #{custom-call.12} parent=5 // pred_region
        %s50 = ssub.s32 %s3, 1
      $region12: #{custom-call.12} parent=5 // pred_fallthru
        _
      %p51 = scmp.lt.s32.totalorder %s3, 4
      // Predicated region
      $region13: #{custom-call.12} parent=5 // pred_check
        %p52 = pneg %p51
      $region14: #{custom-call.12} parent=5 // pred_check_branch
        %54 = sbr.rel (%p52) target = $region16
      $region15: #{custom-call.12} parent=5 // pred_region
        %s55 = sand.u32 %s3, 1
        %s56 = sand.u32 %s3, 1
        %s57 = smul.addr %s56, 32
        %s58 = scalar_lea.vmem [#allocation0], %s57
        %s59 = sadd.s32 %s14, %s13
        %s60 = smul.addr %s12, 4
        %s61 = sadd.s32 %s59, %s60
        %s62 = smul.addr %s11, 4
        %s63 = sadd.s32 %s61, %s62
        %s64 = smul.addr %s10, 8
        %s65 = sadd.s32 %s63, %s64
        %s66 = smul.addr %s65, 8
        %s67 = scalar_lea.vmem %s0, %s66
        // Predicated region
        $region17: #{custom-call.12} parent=15 // pred_check
          _
        $region18: #{custom-call.12} parent=15 // pred_check_branch
          %69 = sbr.rel (0) target = $region20
        $region19: #{custom-call.12} parent=15 // pred_region
          // Predicated region
          $region21: #{custom-call.12} parent=19 // pred_check
            _
          $region22: #{custom-call.12} parent=19 // pred_check_branch
            %71 = sbr.rel (0) target = $region24
          $region23: #{custom-call.12} parent=19 // pred_region
            // Predicated region
            $region36: #{custom-call.12} parent=23 // pred_check
              _
            $region37: #{custom-call.12} parent=23 // pred_check_branch
              %92 = sbr.rel (0) target = $region39
            $region38: #{custom-call.12} parent=23 // pred_region
              loop: start=0, step=1, limit=1
              $region40: #{custom-call.12} parent=38 // loop_pre_header
                _
              $region41: #{custom-call.12} parent=38 // loop_header
                %s94 = sphi 0, %s98
                %p95 = scmp.ge.s32.totalorder %s94, 1
                %s99 = sphi %s67, %s67
                %s100 = sphi %s58, %s58
              $region42: #{custom-call.12} parent=38 // loop_header_branch
                %97 = sbr.rel (%p95) target = $region46
              $region43: #{custom-call.12} parent=38 // loop_body
                %v101 = vld [vmem:[%s99] sm:$0xff]
                %102 = vst [vmem:[%s100] sm:$0xff] %v101
                %v103 = vld [vmem:[%s99 + $0x8] sm:$0xff]
                %104 = vst [vmem:[%s100 + $0x8] sm:$0xff] %v103
                %v105 = vld [vmem:[%s99 + $0x10] sm:$0xff]
                %106 = vst [vmem:[%s100 + $0x10] sm:$0xff] %v105
                %v107 = vld [vmem:[%s99 + $0x18] sm:$0xff]
                %108 = vst [vmem:[%s100 + $0x18] sm:$0xff] %v107
              $region44: #{custom-call.12} parent=38 // loop_footer
                %s98 = sadd.s32 1, %s94
              $region45: #{custom-call.12} parent=38 // loop_footer_branch
                %93 = sbr.rel target = $region41
              $region46: #{custom-call.12} parent=38 // loop_exit
                _
            $region39: #{custom-call.12} parent=23 // pred_fallthru
              _
            // Predicated region
            $region47: #{custom-call.12} parent=23 // pred_check
              _
            $region48: #{custom-call.12} parent=23 // pred_check_branch
              %110 = sbr.rel target = $region50
            $region49: #{custom-call.12} parent=23 // pred_region
              _
            $region50: #{custom-call.12} parent=23 // pred_fallthru
              _
          $region24: #{custom-call.12} parent=19 // pred_fallthru
            _
          // Predicated region
          $region25: #{custom-call.12} parent=19 // pred_check
            _
          $region26: #{custom-call.12} parent=19 // pred_check_branch
            %73 = sbr.rel target = $region28
          $region27: #{custom-call.12} parent=19 // pred_region
            loop: start=0, step=1, limit=1
            $region29: #{custom-call.12} parent=27 // loop_pre_header
              _
            $region30: #{custom-call.12} parent=27 // loop_header
              %s76 = sphi 0, %s80
              %p77 = scmp.ge.s32.totalorder %s76, 1
              %s81 = sphi %s67, %s67
              %s82 = sphi %s58, %s58
            $region31: #{custom-call.12} parent=27 // loop_header_branch
              %79 = sbr.rel (%p77) target = $region35
            $region32: #{custom-call.12} parent=27 // loop_body
              %v83 = vld [vmem:[%s81] sm:$0xff]
              %84 = vst [vmem:[%s82] sm:$0xff] %v83
              %v85 = vld [vmem:[%s81 + $0x8] sm:$0xff]
              %86 = vst [vmem:[%s82 + $0x8] sm:$0xff] %v85
              %v87 = vld [vmem:[%s81 + $0x10] sm:$0xff]
              %88 = vst [vmem:[%s82 + $0x10] sm:$0xff] %v87
              %v89 = vld [vmem:[%s81 + $0x18] sm:$0xff]
              %90 = vst [vmem:[%s82 + $0x18] sm:$0xff] %v89
            $region33: #{custom-call.12} parent=27 // loop_footer
              %s80 = sadd.s32 1, %s76
            $region34: #{custom-call.12} parent=27 // loop_footer_branch
              %75 = sbr.rel target = $region30
            $region35: #{custom-call.12} parent=27 // loop_exit
              _
          $region28: #{custom-call.12} parent=19 // pred_fallthru
            _
        $region20: #{custom-call.12} parent=15 // pred_fallthru
          _
        %111 = vnop
      $region16: #{custom-call.12} parent=5 // pred_fallthru
        _
      %p112 = scmp.le.s32.totalorder 1, %s3
      %p113 = scmp.lt.s32.totalorder %s3, 5
      %p114 = pnand %p112, %p113
      %p115 = pneg %p114
      // Predicated region
      $region51: #{custom-call.12} parent=5 // pred_check
        _
      $region52: #{custom-call.12} parent=5 // pred_check_branch
        %117 = sbr.rel (%p114) target = $region54
      $region53: #{custom-call.12} parent=5 // pred_region
        #allocation2 [shape = 'f32[27,27]{1,0}', space=vmem, size = 0x4000, scoped, tag = 'rescaled input a']
        %s118 = ssub.s32 %s3, 1
        %s119 = sand.u32 %s8, 1
        %s120 = sand.u32 %s8, 1
        %s121 = smul.addr %s120, 32
        %s122 = scalar_lea.vmem [#allocation0], %s121
        %s123 = sand.u32 %s8, 1
        %s124 = sand.u32 %s8, 1
        %s125 = smul.addr %s124, 32
        %s126 = scalar_lea.vmem [#allocation0], %s125
        %s127 = sand.u32 %s8, 1
        %s128 = sand.u32 %s8, 1
        %s129 = smul.addr %s128, 32
        %s130 = scalar_lea.vmem [#allocation1], %s129
        %v131 = vlaneseq
        %v132 = vand.u32 %v131, 127
        %vm133 = vcmp.lt.s32.totalorder %v132, 27
        %v134 = vlaneseq
        %v135 = vshrl.u32 %v134, 7
        %vm137 = vcmp.eq.s32.totalorder %v135, %v132
        %v138 = vld [vmem:[%s122] sm:$0xff]
        %v139 = vsel %vm137, %v138, 0.0
        %140 = vadd.xlane.f32.xlu0 %v139
        %v141 = vpop.xlane.xlu0 %140
        %vm142 = vcmp.ge.s32.totalorder %v135, %v132
        %vm143 = vmand %vm142, %vm133
        %v144 = vsel %vm143, %v138, 0.0
        %v145 = vrcp.pop %v141
        %v146 = vmul.f32 %v144, %v145
        %147 = vst [vmem:[#allocation2] sm:$0xff] %v146
        %s148 = scalar_lea.vmem %s122, 8 [#allocation0]
        %s149 = scalar_lea.vmem [#allocation2], 8
        %v150 = vlaneseq
        %v151 = vshrl.u32 %v150, 7
        %v152 = vadd.s32 %v151, 8
        %vm153 = vcmp.eq.s32.totalorder %v152, %v132
        %v154 = vld [vmem:[%s148] sm:$0xff]
        %v155 = vsel %vm153, %v154, 0.0
        %156 = vadd.xlane.f32.xlu0 %v155
        %v157 = vpop.xlane.xlu0 %156
        %vm158 = vcmp.ge.s32.totalorder %v152, %v132
        %vm159 = vmand %vm158, %vm133
        %v160 = vsel %vm159, %v154, 0.0
        %v161 = vrcp.pop %v157
        %v162 = vmul.f32 %v160, %v161
        %163 = vst [vmem:[%s149] sm:$0xff] %v162
        %s164 = scalar_lea.vmem %s122, 16 [#allocation0]
        %s165 = scalar_lea.vmem [#allocation2], 16
        %v166 = vlaneseq
        %v167 = vshrl.u32 %v166, 7
        %v168 = vadd.s32 %v167, 16
        %vm169 = vcmp.eq.s32.totalorder %v168, %v132
        %v170 = vld [vmem:[%s164] sm:$0xff]
        %v171 = vsel %vm169, %v170, 0.0
        %172 = vadd.xlane.f32.xlu0 %v171
        %v173 = vpop.xlane.xlu0 %172
        %vm174 = vcmp.ge.s32.totalorder %v168, %v132
        %vm175 = vmand %vm174, %vm133
        %v176 = vsel %vm175, %v170, 0.0
        %v177 = vrcp.pop %v173
        %v178 = vmul.f32 %v176, %v177
        %179 = vst [vmem:[%s165] sm:$0xff] %v178
        %s180 = scalar_lea.vmem %s122, 24 [#allocation0]
        %s181 = scalar_lea.vmem [#allocation2], 24
        %v182 = vlaneseq
        %v183 = vshrl.u32 %v182, 7
        %v184 = vadd.s32 %v183, 24
        %vm185 = vcmp.eq.s32.totalorder %v184, %v132
        %v186 = vld [vmem:[%s180] sm:$0xff]
        %v187 = vsel %vm185, %v186, 0.0
        %188 = vadd.xlane.f32.xlu0 %v187
        %v189 = vpop.xlane.xlu0 %188
        %vm190 = vcmp.ge.s32.totalorder %v184, %v132
        %vm191 = vmand %vm190, %vm133
        %v192 = vsel %vm191, %v186, 0.0
        %v193 = vrcp.pop %v189
        %v194 = vmul.f32 %v192, %v193
        %195 = vst [vmem:[%s181] sm:$0xff] %v194
        %v196 = vlaneseq
        %v197 = vand.u32 %v196, 127
        %v198 = vlaneseq
        %v199 = vshrl.u32 %v198, 7
        %vm201 = vcmp.eq.s32.totalorder %v197, %v199
        %v202 = vlaneseq
        %v203 = vand.u32 %v202, 127
        %vm204 = vcmp.eq.s32.totalorder %v203, 0
        %v205 = vsel %vm204, 1.0, -1.0
        %v206 = vsel %vm201, %v205, 0.0
        %v207 = vlaneseq
        %v208 = vand.u32 %v207, 127
        %v209 = vlaneseq
        %v210 = vshrl.u32 %v209, 7
        %v211 = vadd.s32 %v210, 8
        %vm212 = vcmp.eq.s32.totalorder %v208, %v211
        %v213 = vsel %vm212, -1.0, 0.0
        %v214 = vlaneseq
        %v215 = vand.u32 %v214, 127
        %v216 = vlaneseq
        %v217 = vshrl.u32 %v216, 7
        %v218 = vadd.s32 %v217, 16
        %vm219 = vcmp.eq.s32.totalorder %v215, %v218
        %v220 = vsel %vm219, -1.0, 0.0
        %v221 = vlaneseq
        %v222 = vand.u32 %v221, 127
        %v223 = vlaneseq
        %v224 = vshrl.u32 %v223, 7
        %v225 = vadd.s32 %v224, 24
        %vm226 = vcmp.eq.s32.totalorder %v222, %v225
        %v227 = vsel %vm226, -1.0, 0.0
        %s228 = scalar_lea.vmem [#allocation2], 1
        %v229 = vld [vmem:[%s228] ss:$0 sm:$0xff]
        %v230 = vxor.u32 %v229, 2147483648
        %v231 = vlaneseq
        %v232 = vand.u32 %v231, 127
        %vm233 = vcmp.eq.s32.totalorder %v232, 1
        %v234 = vmul.f32 %v230, %v206
        %235 = vadd.xlane.f32.xlu0 %v234
        %v236 = vpop.xlane.xlu0 %235
        %v237 = vsel %vm233, %v236, %v206
        %s238 = scalar_lea.vmem [#allocation2], 2
        %v239 = vld [vmem:[%s238] ss:$0 sm:$0xff]
        %v240 = vxor.u32 %v239, 2147483648
        %v241 = vlaneseq
        %v242 = vand.u32 %v241, 127
        %vm243 = vcmp.eq.s32.totalorder %v242, 2
        %v244 = vmul.f32 %v240, %v237
        %245 = vadd.xlane.f32.xlu0 %v244
        %v246 = vpop.xlane.xlu0 %245
        %v247 = vsel %vm243, %v246, %v237
        %s248 = scalar_lea.vmem [#allocation2], 3
        %v249 = vld [vmem:[%s248] ss:$0 sm:$0xff]
        %v250 = vxor.u32 %v249, 2147483648
        %v251 = vlaneseq
        %v252 = vand.u32 %v251, 127
        %vm253 = vcmp.eq.s32.totalorder %v252, 3
        %v254 = vmul.f32 %v250, %v247
        %255 = vadd.xlane.f32.xlu0 %v254
        %v256 = vpop.xlane.xlu0 %255
        %v257 = vsel %vm253, %v256, %v247
        %s258 = scalar_lea.vmem [#allocation2], 4
        %v259 = vld [vmem:[%s258] ss:$0 sm:$0xff]
        %v260 = vxor.u32 %v259, 2147483648
        %v261 = vlaneseq
        %v262 = vand.u32 %v261, 127
        %vm263 = vcmp.eq.s32.totalorder %v262, 4
        %v264 = vmul.f32 %v260, %v257
        %265 = vadd.xlane.f32.xlu0 %v264
        %v266 = vpop.xlane.xlu0 %265
        %v267 = vsel %vm263, %v266, %v257
        %s268 = scalar_lea.vmem [#allocation2], 5
        %v269 = vld [vmem:[%s268] ss:$0 sm:$0xff]
        %v270 = vxor.u32 %v269, 2147483648
        %v271 = vlaneseq
        %v272 = vand.u32 %v271, 127
        %vm273 = vcmp.eq.s32.totalorder %v272, 5
        %v274 = vmul.f32 %v270, %v267
        %275 = vadd.xlane.f32.xlu0 %v274
        %v276 = vpop.xlane.xlu0 %275
        %v277 = vsel %vm273, %v276, %v267
        %s278 = scalar_lea.vmem [#allocation2], 6
        %v279 = vld [vmem:[%s278] ss:$0 sm:$0xff]
        %v280 = vxor.u32 %v279, 2147483648
        %v281 = vlaneseq
        %v282 = vand.u32 %v281, 127
        %vm283 = vcmp.eq.s32.totalorder %v282, 6
        %v284 = vmul.f32 %v280, %v277
        %285 = vadd.xlane.f32.xlu0 %v284
        %v286 = vpop.xlane.xlu0 %285
        %v287 = vsel %vm283, %v286, %v277
        %s288 = scalar_lea.vmem [#allocation2], 7
        %v289 = vld [vmem:[%s288] ss:$0 sm:$0xff]
        %v290 = vxor.u32 %v289, 2147483648
        %v291 = vlaneseq
        %v292 = vand.u32 %v291, 127
        %vm293 = vcmp.eq.s32.totalorder %v292, 7
        %v294 = vmul.f32 %v290, %v287
        %295 = vadd.xlane.f32.xlu0 %v294
        %v296 = vpop.xlane.xlu0 %295
        %v297 = vsel %vm293, %v296, %v287
        %s298 = scalar_lea.vmem [#allocation2], 8
        %v299 = vld [vmem:[%s298] ss:$0 sm:$0xff]
        %v300 = vxor.u32 %v299, 2147483648
        %v301 = vlaneseq
        %v302 = vand.u32 %v301, 127
        %vm303 = vcmp.eq.s32.totalorder %v302, 8
        %v304 = vmul.f32 %v300, %v297
        %305 = vadd.xlane.f32.xlu0 %v304
        %v306 = vpop.xlane.xlu0 %305
        %v307 = vsel %vm303, %v306, %v297
        %v308 = vmul.f32 %v300, %v213
        %309 = vadd.xlane.f32.xlu0 %v308
        %v310 = vpop.xlane.xlu0 %309
        %v311 = vsel %vm303, %v310, %v213
        %s312 = scalar_lea.vmem [#allocation2], 9
        %v313 = vld [vmem:[%s312] ss:$0 sm:$0xff]
        %v314 = vxor.u32 %v313, 2147483648
        %v315 = vlaneseq
        %v316 = vand.u32 %v315, 127
        %vm317 = vcmp.eq.s32.totalorder %v316, 9
        %v318 = vmul.f32 %v314, %v307
        %319 = vadd.xlane.f32.xlu0 %v318
        %v320 = vpop.xlane.xlu0 %319
        %v321 = vsel %vm317, %v320, %v307
        %v322 = vmul.f32 %v314, %v311
        %323 = vadd.xlane.f32.xlu0 %v322
        %v324 = vpop.xlane.xlu0 %323
        %v325 = vsel %vm317, %v324, %v311
        %s326 = scalar_lea.vmem [#allocation2], 10
        %v327 = vld [vmem:[%s326] ss:$0 sm:$0xff]
        %v328 = vxor.u32 %v327, 2147483648
        %v329 = vlaneseq
        %v330 = vand.u32 %v329, 127
        %vm331 = vcmp.eq.s32.totalorder %v330, 10
        %v332 = vmul.f32 %v328, %v321
        %333 = vadd.xlane.f32.xlu0 %v332
        %v334 = vpop.xlane.xlu0 %333
        %v335 = vsel %vm331, %v334, %v321
        %v336 = vmul.f32 %v328, %v325
        %337 = vadd.xlane.f32.xlu0 %v336
        %v338 = vpop.xlane.xlu0 %337
        %v339 = vsel %vm331, %v338, %v325
        %s340 = scalar_lea.vmem [#allocation2], 11
        %v341 = vld [vmem:[%s340] ss:$0 sm:$0xff]
        %v342 = vxor.u32 %v341, 2147483648
        %v343 = vlaneseq
        %v344 = vand.u32 %v343, 127
        %vm345 = vcmp.eq.s32.totalorder %v344, 11
        %v346 = vmul.f32 %v342, %v335
        %347 = vadd.xlane.f32.xlu0 %v346
        %v348 = vpop.xlane.xlu0 %347
        %v349 = vsel %vm345, %v348, %v335
        %v350 = vmul.f32 %v342, %v339
        %351 = vadd.xlane.f32.xlu0 %v350
        %v352 = vpop.xlane.xlu0 %351
        %v353 = vsel %vm345, %v352, %v339
        %s354 = scalar_lea.vmem [#allocation2], 12
        %v355 = vld [vmem:[%s354] ss:$0 sm:$0xff]
        %v356 = vxor.u32 %v355, 2147483648
        %v357 = vlaneseq
        %v358 = vand.u32 %v357, 127
        %vm359 = vcmp.eq.s32.totalorder %v358, 12
        %v360 = vmul.f32 %v356, %v349
        %361 = vadd.xlane.f32.xlu0 %v360
        %v362 = vpop.xlane.xlu0 %361
        %v363 = vsel %vm359, %v362, %v349
        %v364 = vmul.f32 %v356, %v353
        %365 = vadd.xlane.f32.xlu0 %v364
        %v366 = vpop.xlane.xlu0 %365
        %v367 = vsel %vm359, %v366, %v353
        %s368 = scalar_lea.vmem [#allocation2], 13
        %v369 = vld [vmem:[%s368] ss:$0 sm:$0xff]
        %v370 = vxor.u32 %v369, 2147483648
        %v371 = vlaneseq
        %v372 = vand.u32 %v371, 127
        %vm373 = vcmp.eq.s32.totalorder %v372, 13
        %v374 = vmul.f32 %v370, %v363
        %375 = vadd.xlane.f32.xlu0 %v374
        %v376 = vpop.xlane.xlu0 %375
        %v377 = vsel %vm373, %v376, %v363
        %v378 = vmul.f32 %v370, %v367
        %379 = vadd.xlane.f32.xlu0 %v378
        %v380 = vpop.xlane.xlu0 %379
        %v381 = vsel %vm373, %v380, %v367
        %s382 = scalar_lea.vmem [#allocation2], 14
        %v383 = vld [vmem:[%s382] ss:$0 sm:$0xff]
        %v384 = vxor.u32 %v383, 2147483648
        %v385 = vlaneseq
        %v386 = vand.u32 %v385, 127
        %vm387 = vcmp.eq.s32.totalorder %v386, 14
        %v388 = vmul.f32 %v384, %v377
        %389 = vadd.xlane.f32.xlu0 %v388
        %v390 = vpop.xlane.xlu0 %389
        %v391 = vsel %vm387, %v390, %v377
        %v392 = vmul.f32 %v384, %v381
        %393 = vadd.xlane.f32.xlu0 %v392
        %v394 = vpop.xlane.xlu0 %393
        %v395 = vsel %vm387, %v394, %v381
        %s396 = scalar_lea.vmem [#allocation2], 15
        %v397 = vld [vmem:[%s396] ss:$0 sm:$0xff]
        %v398 = vxor.u32 %v397, 2147483648
        %v399 = vlaneseq
        %v400 = vand.u32 %v399, 127
        %vm401 = vcmp.eq.s32.totalorder %v400, 15
        %v402 = vmul.f32 %v398, %v391
        %403 = vadd.xlane.f32.xlu0 %v402
        %v404 = vpop.xlane.xlu0 %403
        %v405 = vsel %vm401, %v404, %v391
        %v406 = vmul.f32 %v398, %v395
        %407 = vadd.xlane.f32.xlu0 %v406
        %v408 = vpop.xlane.xlu0 %407
        %v409 = vsel %vm401, %v408, %v395
        %s410 = scalar_lea.vmem [#allocation2], 16
        %v411 = vld [vmem:[%s410] ss:$0 sm:$0xff]
        %v412 = vxor.u32 %v411, 2147483648
        %v413 = vlaneseq
        %v414 = vand.u32 %v413, 127
        %vm415 = vcmp.eq.s32.totalorder %v414, 16
        %v416 = vmul.f32 %v412, %v405
        %417 = vadd.xlane.f32.xlu0 %v416
        %v418 = vpop.xlane.xlu0 %417
        %v419 = vsel %vm415, %v418, %v405
        %v420 = vmul.f32 %v412, %v409
        %421 = vadd.xlane.f32.xlu0 %v420
        %v422 = vpop.xlane.xlu0 %421
        %v423 = vsel %vm415, %v422, %v409
        %v424 = vmul.f32 %v412, %v220
        %425 = vadd.xlane.f32.xlu0 %v424
        %v426 = vpop.xlane.xlu0 %425
        %v427 = vsel %vm415, %v426, %v220
        %s428 = scalar_lea.vmem [#allocation2], 17
        %v429 = vld [vmem:[%s428] ss:$0 sm:$0xff]
        %v430 = vxor.u32 %v429, 2147483648
        %v431 = vlaneseq
        %v432 = vand.u32 %v431, 127
        %vm433 = vcmp.eq.s32.totalorder %v432, 17
        %v434 = vmul.f32 %v430, %v419
        %435 = vadd.xlane.f32.xlu0 %v434
        %v436 = vpop.xlane.xlu0 %435
        %v437 = vsel %vm433, %v436, %v419
        %v438 = vmul.f32 %v430, %v423
        %439 = vadd.xlane.f32.xlu0 %v438
        %v440 = vpop.xlane.xlu0 %439
        %v441 = vsel %vm433, %v440, %v423
        %v442 = vmul.f32 %v430, %v427
        %443 = vadd.xlane.f32.xlu0 %v442
        %v444 = vpop.xlane.xlu0 %443
        %v445 = vsel %vm433, %v444, %v427
        %s446 = scalar_lea.vmem [#allocation2], 18
        %v447 = vld [vmem:[%s446] ss:$0 sm:$0xff]
        %v448 = vxor.u32 %v447, 2147483648
        %v449 = vlaneseq
        %v450 = vand.u32 %v449, 127
        %vm451 = vcmp.eq.s32.totalorder %v450, 18
        %v452 = vmul.f32 %v448, %v437
        %453 = vadd.xlane.f32.xlu0 %v452
        %v454 = vpop.xlane.xlu0 %453
        %v455 = vsel %vm451, %v454, %v437
        %v456 = vmul.f32 %v448, %v441
        %457 = vadd.xlane.f32.xlu0 %v456
        %v458 = vpop.xlane.xlu0 %457
        %v459 = vsel %vm451, %v458, %v441
        %v460 = vmul.f32 %v448, %v445
        %461 = vadd.xlane.f32.xlu0 %v460
        %v462 = vpop.xlane.xlu0 %461
        %v463 = vsel %vm451, %v462, %v445
        %s464 = scalar_lea.vmem [#allocation2], 19
        %v465 = vld [vmem:[%s464] ss:$0 sm:$0xff]
        %v466 = vxor.u32 %v465, 2147483648
        %v467 = vlaneseq
        %v468 = vand.u32 %v467, 127
        %vm469 = vcmp.eq.s32.totalorder %v468, 19
        %v470 = vmul.f32 %v466, %v455
        %471 = vadd.xlane.f32.xlu0 %v470
        %v472 = vpop.xlane.xlu0 %471
        %v473 = vsel %vm469, %v472, %v455
        %v474 = vmul.f32 %v466, %v459
        %475 = vadd.xlane.f32.xlu0 %v474
        %v476 = vpop.xlane.xlu0 %475
        %v477 = vsel %vm469, %v476, %v459
        %v478 = vmul.f32 %v466, %v463
        %479 = vadd.xlane.f32.xlu0 %v478
        %v480 = vpop.xlane.xlu0 %479
        %v481 = vsel %vm469, %v480, %v463
        %s482 = scalar_lea.vmem [#allocation2], 20
        %v483 = vld [vmem:[%s482] ss:$0 sm:$0xff]
        %v484 = vxor.u32 %v483, 2147483648
        %v485 = vlaneseq
        %v486 = vand.u32 %v485, 127
        %vm487 = vcmp.eq.s32.totalorder %v486, 20
        %v488 = vmul.f32 %v484, %v473
        %489 = vadd.xlane.f32.xlu0 %v488
        %v490 = vpop.xlane.xlu0 %489
        %v491 = vsel %vm487, %v490, %v473
        %v492 = vmul.f32 %v484, %v477
        %493 = vadd.xlane.f32.xlu0 %v492
        %v494 = vpop.xlane.xlu0 %493
        %v495 = vsel %vm487, %v494, %v477
        %v496 = vmul.f32 %v484, %v481
        %497 = vadd.xlane.f32.xlu0 %v496
        %v498 = vpop.xlane.xlu0 %497
        %v499 = vsel %vm487, %v498, %v481
        %s500 = scalar_lea.vmem [#allocation2], 21
        %v501 = vld [vmem:[%s500] ss:$0 sm:$0xff]
        %v502 = vxor.u32 %v501, 2147483648
        %v503 = vlaneseq
        %v504 = vand.u32 %v503, 127
        %vm505 = vcmp.eq.s32.totalorder %v504, 21
        %v506 = vmul.f32 %v502, %v491
        %507 = vadd.xlane.f32.xlu0 %v506
        %v508 = vpop.xlane.xlu0 %507
        %v509 = vsel %vm505, %v508, %v491
        %v510 = vmul.f32 %v502, %v495
        %511 = vadd.xlane.f32.xlu0 %v510
        %v512 = vpop.xlane.xlu0 %511
        %v513 = vsel %vm505, %v512, %v495
        %v514 = vmul.f32 %v502, %v499
        %515 = vadd.xlane.f32.xlu0 %v514
        %v516 = vpop.xlane.xlu0 %515
        %v517 = vsel %vm505, %v516, %v499
        %s518 = scalar_lea.vmem [#allocation2], 22
        %v519 = vld [vmem:[%s518] ss:$0 sm:$0xff]
        %v520 = vxor.u32 %v519, 2147483648
        %v521 = vlaneseq
        %v522 = vand.u32 %v521, 127
        %vm523 = vcmp.eq.s32.totalorder %v522, 22
        %v524 = vmul.f32 %v520, %v509
        %525 = vadd.xlane.f32.xlu0 %v524
        %v526 = vpop.xlane.xlu0 %525
        %v527 = vsel %vm523, %v526, %v509
        %v528 = vmul.f32 %v520, %v513
        %529 = vadd.xlane.f32.xlu0 %v528
        %v530 = vpop.xlane.xlu0 %529
        %v531 = vsel %vm523, %v530, %v513
        %v532 = vmul.f32 %v520, %v517
        %533 = vadd.xlane.f32.xlu0 %v532
        %v534 = vpop.xlane.xlu0 %533
        %v535 = vsel %vm523, %v534, %v517
        %s536 = scalar_lea.vmem [#allocation2], 23
        %v537 = vld [vmem:[%s536] ss:$0 sm:$0xff]
        %v538 = vxor.u32 %v537, 2147483648
        %v539 = vlaneseq
        %v540 = vand.u32 %v539, 127
        %vm541 = vcmp.eq.s32.totalorder %v540, 23
        %v542 = vmul.f32 %v538, %v527
        %543 = vadd.xlane.f32.xlu0 %v542
        %v544 = vpop.xlane.xlu0 %543
        %v545 = vsel %vm541, %v544, %v527
        %v546 = vmul.f32 %v538, %v531
        %547 = vadd.xlane.f32.xlu0 %v546
        %v548 = vpop.xlane.xlu0 %547
        %v549 = vsel %vm541, %v548, %v531
        %v550 = vmul.f32 %v538, %v535
        %551 = vadd.xlane.f32.xlu0 %v550
        %v552 = vpop.xlane.xlu0 %551
        %v553 = vsel %vm541, %v552, %v535
        %s554 = scalar_lea.vmem [#allocation2], 24
        %v555 = vld [vmem:[%s554] ss:$0 sm:$0xff]
        %v556 = vxor.u32 %v555, 2147483648
        %v557 = vlaneseq
        %v558 = vand.u32 %v557, 127
        %vm559 = vcmp.eq.s32.totalorder %v558, 24
        %v560 = vmul.f32 %v556, %v545
        %561 = vadd.xlane.f32.xlu0 %v560
        %v562 = vpop.xlane.xlu0 %561
        %v563 = vsel %vm559, %v562, %v545
        %v564 = vmul.f32 %v556, %v549
        %565 = vadd.xlane.f32.xlu0 %v564
        %v566 = vpop.xlane.xlu0 %565
        %v567 = vsel %vm559, %v566, %v549
        %v568 = vmul.f32 %v556, %v553
        %569 = vadd.xlane.f32.xlu0 %v568
        %v570 = vpop.xlane.xlu0 %569
        %v571 = vsel %vm559, %v570, %v553
        %v572 = vmul.f32 %v556, %v227
        %573 = vadd.xlane.f32.xlu0 %v572
        %v574 = vpop.xlane.xlu0 %573
        %v575 = vsel %vm559, %v574, %v227
        %s576 = scalar_lea.vmem [#allocation2], 25
        %v577 = vld [vmem:[%s576] ss:$0 sm:$0xff]
        %v578 = vxor.u32 %v577, 2147483648
        %v579 = vlaneseq
        %v580 = vand.u32 %v579, 127
        %vm581 = vcmp.eq.s32.totalorder %v580, 25
        %v582 = vmul.f32 %v578, %v563
        %583 = vadd.xlane.f32.xlu0 %v582
        %v584 = vpop.xlane.xlu0 %583
        %v585 = vsel %vm581, %v584, %v563
        %v586 = vmul.f32 %v578, %v567
        %587 = vadd.xlane.f32.xlu0 %v586
        %v588 = vpop.xlane.xlu0 %587
        %v589 = vsel %vm581, %v588, %v567
        %v590 = vmul.f32 %v578, %v571
        %591 = vadd.xlane.f32.xlu0 %v590
        %v592 = vpop.xlane.xlu0 %591
        %v593 = vsel %vm581, %v592, %v571
        %v594 = vmul.f32 %v578, %v575
        %595 = vadd.xlane.f32.xlu0 %v594
        %v596 = vpop.xlane.xlu0 %595
        %v597 = vsel %vm581, %v596, %v575
        %s598 = scalar_lea.vmem [#allocation2], 26
        %v599 = vld [vmem:[%s598] ss:$0 sm:$0xff]
        %v600 = vxor.u32 %v599, 2147483648
        %v601 = vlaneseq
        %v602 = vand.u32 %v601, 127
        %vm603 = vcmp.eq.s32.totalorder %v602, 26
        %v604 = vmul.f32 %v600, %v585
        %605 = vadd.xlane.f32.xlu0 %v604
        %v606 = vpop.xlane.xlu0 %605
        %v607 = vsel %vm603, %v606, %v585
        %v608 = vmul.f32 %v600, %v589
        %609 = vadd.xlane.f32.xlu0 %v608
        %v610 = vpop.xlane.xlu0 %609
        %v611 = vsel %vm603, %v610, %v589
        %v612 = vmul.f32 %v600, %v593
        %613 = vadd.xlane.f32.xlu0 %v612
        %v614 = vpop.xlane.xlu0 %613
        %v615 = vsel %vm603, %v614, %v593
        %v616 = vmul.f32 %v600, %v597
        %617 = vadd.xlane.f32.xlu0 %v616
        %v618 = vpop.xlane.xlu0 %617
        %v619 = vsel %vm603, %v618, %v597
        %v620 = vrcp.pop %v141
        %v621 = vmul.f32 %v607, %v620
        %vm622 = vweird.f32 %v141
        %v623 = vsel %vm622, %v607, %v621
        %624 = vst [vmem:[%s130] sm:$0xff] %v623
        %v625 = vrcp.pop %v157
        %v626 = vmul.f32 %v611, %v625
        %vm627 = vweird.f32 %v157
        %v628 = vsel %vm627, %v611, %v626
        %s629 = scalar_lea.vmem %s130, 8 [#allocation1]
        %630 = vst [vmem:[%s629] sm:$0xff] %v628
        %v631 = vrcp.pop %v173
        %v632 = vmul.f32 %v615, %v631
        %vm633 = vweird.f32 %v173
        %v634 = vsel %vm633, %v615, %v632
        %s635 = scalar_lea.vmem %s130, 16 [#allocation1]
        %636 = vst [vmem:[%s635] sm:$0xff] %v634
        %v637 = vrcp.pop %v189
        %v638 = vmul.f32 %v619, %v637
        %vm639 = vweird.f32 %v189
        %v640 = vsel %vm639, %v619, %v638
        %s641 = scalar_lea.vmem %s130, 24 [#allocation1]
        %642 = vst [vmem:[%s641] sm:$0xff] %v640
        %s643 = sand.u32 %s8, 1
        %s644 = sand.u32 %s8, 1
        %s645 = smul.addr %s644, 32
        %s646 = scalar_lea.vmem [#allocation1], %s645
        %s647 = sadd.s32 %s19, %s18
        %s648 = smul.addr %s17, 4
        %s649 = sadd.s32 %s647, %s648
        %s650 = smul.addr %s16, 4
        %s651 = sadd.s32 %s649, %s650
        %s652 = smul.addr %s15, 8
        %s653 = sadd.s32 %s651, %s652
        %s654 = smul.addr %s653, 8
        %s655 = scalar_lea.vmem %s1, %s654
        // Predicated region
        $region55: #{custom-call.12} parent=53 // pred_check
          _
        $region56: #{custom-call.12} parent=53 // pred_check_branch
          %657 = sbr.rel (0) target = $region58
        $region57: #{custom-call.12} parent=53 // pred_region
          // Predicated region
          $region59: #{custom-call.12} parent=57 // pred_check
            _
          $region60: #{custom-call.12} parent=57 // pred_check_branch
            %659 = sbr.rel (0) target = $region62
          $region61: #{custom-call.12} parent=57 // pred_region
            // Predicated region
            $region74: #{custom-call.12} parent=61 // pred_check
              _
            $region75: #{custom-call.12} parent=61 // pred_check_branch
              %680 = sbr.rel (0) target = $region77
            $region76: #{custom-call.12} parent=61 // pred_region
              loop: start=0, step=1, limit=1
              $region78: #{custom-call.12} parent=76 // loop_pre_header
                _
              $region79: #{custom-call.12} parent=76 // loop_header
                %s682 = sphi 0, %s686
                %p683 = scmp.ge.s32.totalorder %s682, 1
                %s687 = sphi %s646, %s646
                %s688 = sphi %s655, %s655
              $region80: #{custom-call.12} parent=76 // loop_header_branch
                %685 = sbr.rel (%p683) target = $region84
              $region81: #{custom-call.12} parent=76 // loop_body
                %v689 = vld [vmem:[%s687] sm:$0xff]
                %690 = vst [vmem:[%s688] sm:$0xff] %v689
                %v691 = vld [vmem:[%s687 + $0x8] sm:$0xff]
                %692 = vst [vmem:[%s688 + $0x8] sm:$0xff] %v691
                %v693 = vld [vmem:[%s687 + $0x10] sm:$0xff]
                %694 = vst [vmem:[%s688 + $0x10] sm:$0xff] %v693
                %v695 = vld [vmem:[%s687 + $0x18] sm:$0xff]
                %696 = vst [vmem:[%s688 + $0x18] sm:$0xff] %v695
              $region82: #{custom-call.12} parent=76 // loop_footer
                %s686 = sadd.s32 1, %s682
              $region83: #{custom-call.12} parent=76 // loop_footer_branch
                %681 = sbr.rel target = $region79
              $region84: #{custom-call.12} parent=76 // loop_exit
                _
            $region77: #{custom-call.12} parent=61 // pred_fallthru
              _
            // Predicated region
            $region85: #{custom-call.12} parent=61 // pred_check
              _
            $region86: #{custom-call.12} parent=61 // pred_check_branch
              %698 = sbr.rel target = $region88
            $region87: #{custom-call.12} parent=61 // pred_region
              _
            $region88: #{custom-call.12} parent=61 // pred_fallthru
              _
          $region62: #{custom-call.12} parent=57 // pred_fallthru
            _
          // Predicated region
          $region63: #{custom-call.12} parent=57 // pred_check
            _
          $region64: #{custom-call.12} parent=57 // pred_check_branch
            %661 = sbr.rel target = $region66
          $region65: #{custom-call.12} parent=57 // pred_region
            loop: start=0, step=1, limit=1
            $region67: #{custom-call.12} parent=65 // loop_pre_header
              _
            $region68: #{custom-call.12} parent=65 // loop_header
              %s664 = sphi 0, %s668
              %p665 = scmp.ge.s32.totalorder %s664, 1
              %s669 = sphi %s646, %s646
              %s670 = sphi %s655, %s655
            $region69: #{custom-call.12} parent=65 // loop_header_branch
              %667 = sbr.rel (%p665) target = $region73
            $region70: #{custom-call.12} parent=65 // loop_body
              %v671 = vld [vmem:[%s669] sm:$0xff]
              %672 = vst [vmem:[%s670] sm:$0xff] %v671
              %v673 = vld [vmem:[%s669 + $0x8] sm:$0xff]
              %674 = vst [vmem:[%s670 + $0x8] sm:$0xff] %v673
              %v675 = vld [vmem:[%s669 + $0x10] sm:$0xff]
              %676 = vst [vmem:[%s670 + $0x10] sm:$0xff] %v675
              %v677 = vld [vmem:[%s669 + $0x18] sm:$0xff]
              %678 = vst [vmem:[%s670 + $0x18] sm:$0xff] %v677
            $region71: #{custom-call.12} parent=65 // loop_footer
              %s668 = sadd.s32 1, %s664
            $region72: #{custom-call.12} parent=65 // loop_footer_branch
              %663 = sbr.rel target = $region68
            $region73: #{custom-call.12} parent=65 // loop_exit
              _
          $region66: #{custom-call.12} parent=57 // pred_fallthru
            _
        $region58: #{custom-call.12} parent=53 // pred_fallthru
          _
        %699 = vnop
      $region54: #{custom-call.12} parent=5 // pred_fallthru
        _
      %p700 = scmp.le.s32.totalorder 2, %s3
      // Predicated region
      $region89: #{custom-call.12} parent=5 // pred_check
        %p701 = pneg %p700
      $region90: #{custom-call.12} parent=5 // pred_check_branch
        %703 = sbr.rel (%p701) target = $region92
      $region91: #{custom-call.12} parent=5 // pred_region
        %s704 = ssub.s32 %s3, 2
        %s705 = sand.u32 %s9, 1
        %s706 = sand.u32 %s9, 1
        %s707 = smul.addr %s706, 32
        %s708 = scalar_lea.vmem [#allocation1], %s707
      $region92: #{custom-call.12} parent=5 // pred_fallthru
        _
    $region6: #{custom-call.12} parent=1 // loop_footer
      %s7 = sadd.s32 1, %s3
    $region7: #{custom-call.12} parent=1 // loop_footer_branch
      %2 = sbr.rel target = $region3
    $region8: #{custom-call.12} parent=1 // loop_exit
      _

// kernel: custom-call.11
$region0: #{custom-call.11}
  %s0 = inlined_call_operand.vmem [shape: f32[2,2,1,27,27], index: 0, kind: input, shape index: {}]
  %s1 = inlined_call_operand.vmem [shape: f32[2,2,1,27,27], index: 1, kind: output, shape index: {}]
  $region1: #{custom-call.11} parent=0
    #allocation0 [shape = 'u8[32768]{0}', space=vmem, size = 0x8000, scoped, tag = 'operand span for operand 0']
    #allocation1 [shape = 'u8[32768]{0}', space=vmem, size = 0x8000, scoped, tag = 'operand span for operand 1']
    loop: start=0, step=1, limit=6
    $region2: #{custom-call.11} parent=1 // loop_pre_header
      _
    $region3: #{custom-call.11} parent=1 // loop_header
      %s3 = sphi 0, %s7
      %p4 = scmp.ge.s32.totalorder %s3, 6
      %s10 = sphi 0, %s43
      %s11 = sphi 0, %s39
      %s12 = sphi 0, %s35
      %s13 = sphi 0, %s31
      %s14 = sphi 0, %s27
      %s15 = sphi 0, %s10
      %s16 = sphi 0, %s11
      %s17 = sphi 0, %s12
      %s18 = sphi 0, %s13
      %s19 = sphi 0, %s14
      %s20 = sphi 0, %s15
      %s21 = sphi 0, %s16
      %s22 = sphi 0, %s17
      %s23 = sphi 0, %s18
      %s24 = sphi 0, %s19
    $region4: #{custom-call.11} parent=1 // loop_header_branch
      %6 = sbr.rel (%p4) target = $region8
    $region5: #{custom-call.11} parent=1 // loop_body
      %s8 = ssub.s32 %s3, 1
      %s9 = ssub.s32 %s3, 2
      %s25 = sadd.s32 1, %s14
      %p26 = scmp.ge.s32.totalorder %s25, 1
      %s27 = scalar_select %p26, 0, %s25
      %s28 = sadd.s32 1, %s13
      %s29 = scalar_select %p26, %s28, %s13
      %p30 = scmp.ge.s32.totalorder %s29, 1
      %s31 = scalar_select %p30, 0, %s29
      %s32 = sadd.s32 1, %s12
      %s33 = scalar_select %p30, %s32, %s12
      %p34 = scmp.ge.s32.totalorder %s33, 1
      %s35 = scalar_select %p34, 0, %s33
      %s36 = sadd.s32 1, %s11
      %s37 = scalar_select %p34, %s36, %s11
      %p38 = scmp.ge.s32.totalorder %s37, 2
      %s39 = scalar_select %p38, 0, %s37
      %s40 = sadd.s32 1, %s10
      %s41 = scalar_select %p38, %s40, %s10
      %p42 = scmp.ge.s32.totalorder %s41, 2
      %s43 = scalar_select %p42, 0, %s41
      %p44 = scmp.le.s32.totalorder 1, %s3
      %p45 = scmp.lt.s32.totalorder %s3, 5
      %p46 = pnand %p44, %p45
      %p47 = pneg %p46
      // Predicated region
      $region9: #{custom-call.11} parent=5 // pred_check
        _
      $region10: #{custom-call.11} parent=5 // pred_check_branch
        %49 = sbr.rel (%p46) target = $region12
      $region11: #{custom-call.11} parent=5 // pred_region
        %s50 = ssub.s32 %s3, 1
      $region12: #{custom-call.11} parent=5 // pred_fallthru
        _
      %p51 = scmp.lt.s32.totalorder %s3, 4
      // Predicated region
      $region13: #{custom-call.11} parent=5 // pred_check
        %p52 = pneg %p51
      $region14: #{custom-call.11} parent=5 // pred_check_branch
        %54 = sbr.rel (%p52) target = $region16
      $region15: #{custom-call.11} parent=5 // pred_region
        %s55 = sand.u32 %s3, 1
        %s56 = sand.u32 %s3, 1
        %s57 = smul.addr %s56, 32
        %s58 = scalar_lea.vmem [#allocation0], %s57
        %s59 = sadd.s32 %s14, %s13
        %s60 = smul.addr %s12, 4
        %s61 = sadd.s32 %s59, %s60
        %s62 = smul.addr %s11, 4
        %s63 = sadd.s32 %s61, %s62
        %s64 = smul.addr %s10, 8
        %s65 = sadd.s32 %s63, %s64
        %s66 = smul.addr %s65, 8
        %s67 = scalar_lea.vmem %s0, %s66
        // Predicated region
        $region17: #{custom-call.11} parent=15 // pred_check
          _
        $region18: #{custom-call.11} parent=15 // pred_check_branch
          %69 = sbr.rel (0) target = $region20
        $region19: #{custom-call.11} parent=15 // pred_region
          // Predicated region
          $region21: #{custom-call.11} parent=19 // pred_check
            _
          $region22: #{custom-call.11} parent=19 // pred_check_branch
            %71 = sbr.rel (0) target = $region24
          $region23: #{custom-call.11} parent=19 // pred_region
            // Predicated region
            $region36: #{custom-call.11} parent=23 // pred_check
              _
            $region37: #{custom-call.11} parent=23 // pred_check_branch
              %92 = sbr.rel (0) target = $region39
            $region38: #{custom-call.11} parent=23 // pred_region
              loop: start=0, step=1, limit=1
              $region40: #{custom-call.11} parent=38 // loop_pre_header
                _
              $region41: #{custom-call.11} parent=38 // loop_header
                %s94 = sphi 0, %s98
                %p95 = scmp.ge.s32.totalorder %s94, 1
                %s99 = sphi %s67, %s67
                %s100 = sphi %s58, %s58
              $region42: #{custom-call.11} parent=38 // loop_header_branch
                %97 = sbr.rel (%p95) target = $region46
              $region43: #{custom-call.11} parent=38 // loop_body
                %v101 = vld [vmem:[%s99] sm:$0xff]
                %102 = vst [vmem:[%s100] sm:$0xff] %v101
                %v103 = vld [vmem:[%s99 + $0x8] sm:$0xff]
                %104 = vst [vmem:[%s100 + $0x8] sm:$0xff] %v103
                %v105 = vld [vmem:[%s99 + $0x10] sm:$0xff]
                %106 = vst [vmem:[%s100 + $0x10] sm:$0xff] %v105
                %v107 = vld [vmem:[%s99 + $0x18] sm:$0xff]
                %108 = vst [vmem:[%s100 + $0x18] sm:$0xff] %v107
              $region44: #{custom-call.11} parent=38 // loop_footer
                %s98 = sadd.s32 1, %s94
              $region45: #{custom-call.11} parent=38 // loop_footer_branch
                %93 = sbr.rel target = $region41
              $region46: #{custom-call.11} parent=38 // loop_exit
                _
            $region39: #{custom-call.11} parent=23 // pred_fallthru
              _
            // Predicated region
            $region47: #{custom-call.11} parent=23 // pred_check
              _
            $region48: #{custom-call.11} parent=23 // pred_check_branch
              %110 = sbr.rel target = $region50
            $region49: #{custom-call.11} parent=23 // pred_region
              _
            $region50: #{custom-call.11} parent=23 // pred_fallthru
              _
          $region24: #{custom-call.11} parent=19 // pred_fallthru
            _
          // Predicated region
          $region25: #{custom-call.11} parent=19 // pred_check
            _
          $region26: #{custom-call.11} parent=19 // pred_check_branch
            %73 = sbr.rel target = $region28
          $region27: #{custom-call.11} parent=19 // pred_region
            loop: start=0, step=1, limit=1
            $region29: #{custom-call.11} parent=27 // loop_pre_header
              _
            $region30: #{custom-call.11} parent=27 // loop_header
              %s76 = sphi 0, %s80
              %p77 = scmp.ge.s32.totalorder %s76, 1
              %s81 = sphi %s67, %s67
              %s82 = sphi %s58, %s58
            $region31: #{custom-call.11} parent=27 // loop_header_branch
              %79 = sbr.rel (%p77) target = $region35
            $region32: #{custom-call.11} parent=27 // loop_body
              %v83 = vld [vmem:[%s81] sm:$0xff]
              %84 = vst [vmem:[%s82] sm:$0xff] %v83
              %v85 = vld [vmem:[%s81 + $0x8] sm:$0xff]
              %86 = vst [vmem:[%s82 + $0x8] sm:$0xff] %v85
              %v87 = vld [vmem:[%s81 + $0x10] sm:$0xff]
              %88 = vst [vmem:[%s82 + $0x10] sm:$0xff] %v87
              %v89 = vld [vmem:[%s81 + $0x18] sm:$0xff]
              %90 = vst [vmem:[%s82 + $0x18] sm:$0xff] %v89
            $region33: #{custom-call.11} parent=27 // loop_footer
              %s80 = sadd.s32 1, %s76
            $region34: #{custom-call.11} parent=27 // loop_footer_branch
              %75 = sbr.rel target = $region30
            $region35: #{custom-call.11} parent=27 // loop_exit
              _
          $region28: #{custom-call.11} parent=19 // pred_fallthru
            _
        $region20: #{custom-call.11} parent=15 // pred_fallthru
          _
        %111 = vnop
      $region16: #{custom-call.11} parent=5 // pred_fallthru
        _
      %p112 = scmp.le.s32.totalorder 1, %s3
      %p113 = scmp.lt.s32.totalorder %s3, 5
      %p114 = pnand %p112, %p113
      %p115 = pneg %p114
      // Predicated region
      $region51: #{custom-call.11} parent=5 // pred_check
        _
      $region52: #{custom-call.11} parent=5 // pred_check_branch
        %117 = sbr.rel (%p114) target = $region54
      $region53: #{custom-call.11} parent=5 // pred_region
        #allocation2 [shape = 'f32[27,27]{1,0}', space=vmem, size = 0x4000, scoped, tag = 'rescaled input a']
        %s118 = ssub.s32 %s3, 1
        %s119 = sand.u32 %s8, 1
        %s120 = sand.u32 %s8, 1
        %s121 = smul.addr %s120, 32
        %s122 = scalar_lea.vmem [#allocation0], %s121
        %s123 = sand.u32 %s8, 1
        %s124 = sand.u32 %s8, 1
        %s125 = smul.addr %s124, 32
        %s126 = scalar_lea.vmem [#allocation0], %s125
        %s127 = sand.u32 %s8, 1
        %s128 = sand.u32 %s8, 1
        %s129 = smul.addr %s128, 32
        %s130 = scalar_lea.vmem [#allocation1], %s129
        %v131 = vlaneseq
        %v132 = vand.u32 %v131, 127
        %vm133 = vcmp.lt.s32.totalorder %v132, 27
        %v134 = vlaneseq
        %v135 = vshrl.u32 %v134, 7
        %vm137 = vcmp.eq.s32.totalorder %v135, %v132
        %v138 = vld [vmem:[%s122] sm:$0xff]
        %v139 = vsel %vm137, %v138, 0.0
        %140 = vadd.xlane.f32.xlu0 %v139
        %v141 = vpop.xlane.xlu0 %140
        %vm142 = vcmp.le.s32.totalorder %v135, %v132
        %vm143 = vmand %vm142, %vm133
        %v144 = vsel %vm143, %v138, 0.0
        %v145 = vrcp.pop %v141
        %v146 = vmul.f32 %v144, %v145
        %147 = vst [vmem:[#allocation2] sm:$0xff] %v146
        %s148 = scalar_lea.vmem %s122, 8 [#allocation0]
        %s149 = scalar_lea.vmem [#allocation2], 8
        %v150 = vlaneseq
        %v151 = vshrl.u32 %v150, 7
        %v152 = vadd.s32 %v151, 8
        %vm153 = vcmp.eq.s32.totalorder %v152, %v132
        %v154 = vld [vmem:[%s148] sm:$0xff]
        %v155 = vsel %vm153, %v154, 0.0
        %156 = vadd.xlane.f32.xlu0 %v155
        %v157 = vpop.xlane.xlu0 %156
        %vm158 = vcmp.le.s32.totalorder %v152, %v132
        %vm159 = vmand %vm158, %vm133
        %v160 = vsel %vm159, %v154, 0.0
        %v161 = vrcp.pop %v157
        %v162 = vmul.f32 %v160, %v161
        %163 = vst [vmem:[%s149] sm:$0xff] %v162
        %s164 = scalar_lea.vmem %s122, 16 [#allocation0]
        %s165 = scalar_lea.vmem [#allocation2], 16
        %v166 = vlaneseq
        %v167 = vshrl.u32 %v166, 7
        %v168 = vadd.s32 %v167, 16
        %vm169 = vcmp.eq.s32.totalorder %v168, %v132
        %v170 = vld [vmem:[%s164] sm:$0xff]
        %v171 = vsel %vm169, %v170, 0.0
        %172 = vadd.xlane.f32.xlu0 %v171
        %v173 = vpop.xlane.xlu0 %172
        %vm174 = vcmp.le.s32.totalorder %v168, %v132
        %vm175 = vmand %vm174, %vm133
        %v176 = vsel %vm175, %v170, 0.0
        %v177 = vrcp.pop %v173
        %v178 = vmul.f32 %v176, %v177
        %179 = vst [vmem:[%s165] sm:$0xff] %v178
        %s180 = scalar_lea.vmem %s122, 24 [#allocation0]
        %s181 = scalar_lea.vmem [#allocation2], 24
        %v182 = vlaneseq
        %v183 = vshrl.u32 %v182, 7
        %v184 = vadd.s32 %v183, 24
        %vm185 = vcmp.eq.s32.totalorder %v184, %v132
        %v186 = vld [vmem:[%s180] sm:$0xff]
        %v187 = vsel %vm185, %v186, 0.0
        %188 = vadd.xlane.f32.xlu0 %v187
        %v189 = vpop.xlane.xlu0 %188
        %vm190 = vcmp.le.s32.totalorder %v184, %v132
        %vm191 = vmand %vm190, %vm133
        %v192 = vsel %vm191, %v186, 0.0
        %v193 = vrcp.pop %v189
        %v194 = vmul.f32 %v192, %v193
        %195 = vst [vmem:[%s181] sm:$0xff] %v194
        %v196 = vlaneseq
        %v197 = vand.u32 %v196, 127
        %v198 = vlaneseq
        %v199 = vshrl.u32 %v198, 7
        %vm201 = vcmp.eq.s32.totalorder %v197, %v199
        %v202 = vsel %vm201, -1.0, 0.0
        %v203 = vlaneseq
        %v204 = vand.u32 %v203, 127
        %v205 = vlaneseq
        %v206 = vshrl.u32 %v205, 7
        %v207 = vadd.s32 %v206, 8
        %vm208 = vcmp.eq.s32.totalorder %v204, %v207
        %v209 = vsel %vm208, -1.0, 0.0
        %v210 = vlaneseq
        %v211 = vand.u32 %v210, 127
        %v212 = vlaneseq
        %v213 = vshrl.u32 %v212, 7
        %v214 = vadd.s32 %v213, 16
        %vm215 = vcmp.eq.s32.totalorder %v211, %v214
        %v216 = vsel %vm215, -1.0, 0.0
        %v217 = vlaneseq
        %v218 = vand.u32 %v217, 127
        %v219 = vlaneseq
        %v220 = vshrl.u32 %v219, 7
        %v221 = vadd.s32 %v220, 24
        %vm222 = vcmp.eq.s32.totalorder %v218, %v221
        %v223 = vlaneseq
        %v224 = vand.u32 %v223, 127
        %vm225 = vcmp.eq.s32.totalorder %v224, 26
        %v226 = vsel %vm225, 1.0, -1.0
        %v227 = vsel %vm222, %v226, 0.0
        %s228 = scalar_lea.vmem [#allocation2], 25
        %v229 = vld [vmem:[%s228] ss:$0 sm:$0xff]
        %v230 = vxor.u32 %v229, 2147483648
        %v231 = vlaneseq
        %v232 = vand.u32 %v231, 127
        %vm233 = vcmp.eq.s32.totalorder %v232, 25
        %v234 = vmul.f32 %v230, %v227
        %235 = vadd.xlane.f32.xlu0 %v234
        %v236 = vpop.xlane.xlu0 %235
        %v237 = vsel %vm233, %v236, %v227
        %s238 = scalar_lea.vmem [#allocation2], 24
        %v239 = vld [vmem:[%s238] ss:$0 sm:$0xff]
        %v240 = vxor.u32 %v239, 2147483648
        %v241 = vlaneseq
        %v242 = vand.u32 %v241, 127
        %vm243 = vcmp.eq.s32.totalorder %v242, 24
        %v244 = vmul.f32 %v240, %v237
        %245 = vadd.xlane.f32.xlu0 %v244
        %v246 = vpop.xlane.xlu0 %245
        %v247 = vsel %vm243, %v246, %v237
        %s248 = scalar_lea.vmem [#allocation2], 23
        %v249 = vld [vmem:[%s248] ss:$0 sm:$0xff]
        %v250 = vxor.u32 %v249, 2147483648
        %v251 = vlaneseq
        %v252 = vand.u32 %v251, 127
        %vm253 = vcmp.eq.s32.totalorder %v252, 23
        %v254 = vmul.f32 %v250, %v216
        %255 = vadd.xlane.f32.xlu0 %v254
        %v256 = vpop.xlane.xlu0 %255
        %v257 = vsel %vm253, %v256, %v216
        %v258 = vmul.f32 %v250, %v247
        %259 = vadd.xlane.f32.xlu0 %v258
        %v260 = vpop.xlane.xlu0 %259
        %v261 = vsel %vm253, %v260, %v247
        %s262 = scalar_lea.vmem [#allocation2], 22
        %v263 = vld [vmem:[%s262] ss:$0 sm:$0xff]
        %v264 = vxor.u32 %v263, 2147483648
        %v265 = vlaneseq
        %v266 = vand.u32 %v265, 127
        %vm267 = vcmp.eq.s32.totalorder %v266, 22
        %v268 = vmul.f32 %v264, %v257
        %269 = vadd.xlane.f32.xlu0 %v268
        %v270 = vpop.xlane.xlu0 %269
        %v271 = vsel %vm267, %v270, %v257
        %v272 = vmul.f32 %v264, %v261
        %273 = vadd.xlane.f32.xlu0 %v272
        %v274 = vpop.xlane.xlu0 %273
        %v275 = vsel %vm267, %v274, %v261
        %s276 = scalar_lea.vmem [#allocation2], 21
        %v277 = vld [vmem:[%s276] ss:$0 sm:$0xff]
        %v278 = vxor.u32 %v277, 2147483648
        %v279 = vlaneseq
        %v280 = vand.u32 %v279, 127
        %vm281 = vcmp.eq.s32.totalorder %v280, 21
        %v282 = vmul.f32 %v278, %v271
        %283 = vadd.xlane.f32.xlu0 %v282
        %v284 = vpop.xlane.xlu0 %283
        %v285 = vsel %vm281, %v284, %v271
        %v286 = vmul.f32 %v278, %v275
        %287 = vadd.xlane.f32.xlu0 %v286
        %v288 = vpop.xlane.xlu0 %287
        %v289 = vsel %vm281, %v288, %v275
        %s290 = scalar_lea.vmem [#allocation2], 20
        %v291 = vld [vmem:[%s290] ss:$0 sm:$0xff]
        %v292 = vxor.u32 %v291, 2147483648
        %v293 = vlaneseq
        %v294 = vand.u32 %v293, 127
        %vm295 = vcmp.eq.s32.totalorder %v294, 20
        %v296 = vmul.f32 %v292, %v285
        %297 = vadd.xlane.f32.xlu0 %v296
        %v298 = vpop.xlane.xlu0 %297
        %v299 = vsel %vm295, %v298, %v285
        %v300 = vmul.f32 %v292, %v289
        %301 = vadd.xlane.f32.xlu0 %v300
        %v302 = vpop.xlane.xlu0 %301
        %v303 = vsel %vm295, %v302, %v289
        %s304 = scalar_lea.vmem [#allocation2], 19
        %v305 = vld [vmem:[%s304] ss:$0 sm:$0xff]
        %v306 = vxor.u32 %v305, 2147483648
        %v307 = vlaneseq
        %v308 = vand.u32 %v307, 127
        %vm309 = vcmp.eq.s32.totalorder %v308, 19
        %v310 = vmul.f32 %v306, %v299
        %311 = vadd.xlane.f32.xlu0 %v310
        %v312 = vpop.xlane.xlu0 %311
        %v313 = vsel %vm309, %v312, %v299
        %v314 = vmul.f32 %v306, %v303
        %315 = vadd.xlane.f32.xlu0 %v314
        %v316 = vpop.xlane.xlu0 %315
        %v317 = vsel %vm309, %v316, %v303
        %s318 = scalar_lea.vmem [#allocation2], 18
        %v319 = vld [vmem:[%s318] ss:$0 sm:$0xff]
        %v320 = vxor.u32 %v319, 2147483648
        %v321 = vlaneseq
        %v322 = vand.u32 %v321, 127
        %vm323 = vcmp.eq.s32.totalorder %v322, 18
        %v324 = vmul.f32 %v320, %v313
        %325 = vadd.xlane.f32.xlu0 %v324
        %v326 = vpop.xlane.xlu0 %325
        %v327 = vsel %vm323, %v326, %v313
        %v328 = vmul.f32 %v320, %v317
        %329 = vadd.xlane.f32.xlu0 %v328
        %v330 = vpop.xlane.xlu0 %329
        %v331 = vsel %vm323, %v330, %v317
        %s332 = scalar_lea.vmem [#allocation2], 17
        %v333 = vld [vmem:[%s332] ss:$0 sm:$0xff]
        %v334 = vxor.u32 %v333, 2147483648
        %v335 = vlaneseq
        %v336 = vand.u32 %v335, 127
        %vm337 = vcmp.eq.s32.totalorder %v336, 17
        %v338 = vmul.f32 %v334, %v327
        %339 = vadd.xlane.f32.xlu0 %v338
        %v340 = vpop.xlane.xlu0 %339
        %v341 = vsel %vm337, %v340, %v327
        %v342 = vmul.f32 %v334, %v331
        %343 = vadd.xlane.f32.xlu0 %v342
        %v344 = vpop.xlane.xlu0 %343
        %v345 = vsel %vm337, %v344, %v331
        %s346 = scalar_lea.vmem [#allocation2], 16
        %v347 = vld [vmem:[%s346] ss:$0 sm:$0xff]
        %v348 = vxor.u32 %v347, 2147483648
        %v349 = vlaneseq
        %v350 = vand.u32 %v349, 127
        %vm351 = vcmp.eq.s32.totalorder %v350, 16
        %v352 = vmul.f32 %v348, %v341
        %353 = vadd.xlane.f32.xlu0 %v352
        %v354 = vpop.xlane.xlu0 %353
        %v355 = vsel %vm351, %v354, %v341
        %v356 = vmul.f32 %v348, %v345
        %357 = vadd.xlane.f32.xlu0 %v356
        %v358 = vpop.xlane.xlu0 %357
        %v359 = vsel %vm351, %v358, %v345
        %s360 = scalar_lea.vmem [#allocation2], 15
        %v361 = vld [vmem:[%s360] ss:$0 sm:$0xff]
        %v362 = vxor.u32 %v361, 2147483648
        %v363 = vlaneseq
        %v364 = vand.u32 %v363, 127
        %vm365 = vcmp.eq.s32.totalorder %v364, 15
        %v366 = vmul.f32 %v362, %v209
        %367 = vadd.xlane.f32.xlu0 %v366
        %v368 = vpop.xlane.xlu0 %367
        %v369 = vsel %vm365, %v368, %v209
        %v370 = vmul.f32 %v362, %v355
        %371 = vadd.xlane.f32.xlu0 %v370
        %v372 = vpop.xlane.xlu0 %371
        %v373 = vsel %vm365, %v372, %v355
        %v374 = vmul.f32 %v362, %v359
        %375 = vadd.xlane.f32.xlu0 %v374
        %v376 = vpop.xlane.xlu0 %375
        %v377 = vsel %vm365, %v376, %v359
        %s378 = scalar_lea.vmem [#allocation2], 14
        %v379 = vld [vmem:[%s378] ss:$0 sm:$0xff]
        %v380 = vxor.u32 %v379, 2147483648
        %v381 = vlaneseq
        %v382 = vand.u32 %v381, 127
        %vm383 = vcmp.eq.s32.totalorder %v382, 14
        %v384 = vmul.f32 %v380, %v369
        %385 = vadd.xlane.f32.xlu0 %v384
        %v386 = vpop.xlane.xlu0 %385
        %v387 = vsel %vm383, %v386, %v369
        %v388 = vmul.f32 %v380, %v373
        %389 = vadd.xlane.f32.xlu0 %v388
        %v390 = vpop.xlane.xlu0 %389
        %v391 = vsel %vm383, %v390, %v373
        %v392 = vmul.f32 %v380, %v377
        %393 = vadd.xlane.f32.xlu0 %v392
        %v394 = vpop.xlane.xlu0 %393
        %v395 = vsel %vm383, %v394, %v377
        %s396 = scalar_lea.vmem [#allocation2], 13
        %v397 = vld [vmem:[%s396] ss:$0 sm:$0xff]
        %v398 = vxor.u32 %v397, 2147483648
        %v399 = vlaneseq
        %v400 = vand.u32 %v399, 127
        %vm401 = vcmp.eq.s32.totalorder %v400, 13
        %v402 = vmul.f32 %v398, %v387
        %403 = vadd.xlane.f32.xlu0 %v402
        %v404 = vpop.xlane.xlu0 %403
        %v405 = vsel %vm401, %v404, %v387
        %v406 = vmul.f32 %v398, %v391
        %407 = vadd.xlane.f32.xlu0 %v406
        %v408 = vpop.xlane.xlu0 %407
        %v409 = vsel %vm401, %v408, %v391
        %v410 = vmul.f32 %v398, %v395
        %411 = vadd.xlane.f32.xlu0 %v410
        %v412 = vpop.xlane.xlu0 %411
        %v413 = vsel %vm401, %v412, %v395
        %s414 = scalar_lea.vmem [#allocation2], 12
        %v415 = vld [vmem:[%s414] ss:$0 sm:$0xff]
        %v416 = vxor.u32 %v415, 2147483648
        %v417 = vlaneseq
        %v418 = vand.u32 %v417, 127
        %vm419 = vcmp.eq.s32.totalorder %v418, 12
        %v420 = vmul.f32 %v416, %v405
        %421 = vadd.xlane.f32.xlu0 %v420
        %v422 = vpop.xlane.xlu0 %421
        %v423 = vsel %vm419, %v422, %v405
        %v424 = vmul.f32 %v416, %v409
        %425 = vadd.xlane.f32.xlu0 %v424
        %v426 = vpop.xlane.xlu0 %425
        %v427 = vsel %vm419, %v426, %v409
        %v428 = vmul.f32 %v416, %v413
        %429 = vadd.xlane.f32.xlu0 %v428
        %v430 = vpop.xlane.xlu0 %429
        %v431 = vsel %vm419, %v430, %v413
        %s432 = scalar_lea.vmem [#allocation2], 11
        %v433 = vld [vmem:[%s432] ss:$0 sm:$0xff]
        %v434 = vxor.u32 %v433, 2147483648
        %v435 = vlaneseq
        %v436 = vand.u32 %v435, 127
        %vm437 = vcmp.eq.s32.totalorder %v436, 11
        %v438 = vmul.f32 %v434, %v423
        %439 = vadd.xlane.f32.xlu0 %v438
        %v440 = vpop.xlane.xlu0 %439
        %v441 = vsel %vm437, %v440, %v423
        %v442 = vmul.f32 %v434, %v427
        %443 = vadd.xlane.f32.xlu0 %v442
        %v444 = vpop.xlane.xlu0 %443
        %v445 = vsel %vm437, %v444, %v427
        %v446 = vmul.f32 %v434, %v431
        %447 = vadd.xlane.f32.xlu0 %v446
        %v448 = vpop.xlane.xlu0 %447
        %v449 = vsel %vm437, %v448, %v431
        %s450 = scalar_lea.vmem [#allocation2], 10
        %v451 = vld [vmem:[%s450] ss:$0 sm:$0xff]
        %v452 = vxor.u32 %v451, 2147483648
        %v453 = vlaneseq
        %v454 = vand.u32 %v453, 127
        %vm455 = vcmp.eq.s32.totalorder %v454, 10
        %v456 = vmul.f32 %v452, %v441
        %457 = vadd.xlane.f32.xlu0 %v456
        %v458 = vpop.xlane.xlu0 %457
        %v459 = vsel %vm455, %v458, %v441
        %v460 = vmul.f32 %v452, %v445
        %461 = vadd.xlane.f32.xlu0 %v460
        %v462 = vpop.xlane.xlu0 %461
        %v463 = vsel %vm455, %v462, %v445
        %v464 = vmul.f32 %v452, %v449
        %465 = vadd.xlane.f32.xlu0 %v464
        %v466 = vpop.xlane.xlu0 %465
        %v467 = vsel %vm455, %v466, %v449
        %s468 = scalar_lea.vmem [#allocation2], 9
        %v469 = vld [vmem:[%s468] ss:$0 sm:$0xff]
        %v470 = vxor.u32 %v469, 2147483648
        %v471 = vlaneseq
        %v472 = vand.u32 %v471, 127
        %vm473 = vcmp.eq.s32.totalorder %v472, 9
        %v474 = vmul.f32 %v470, %v459
        %475 = vadd.xlane.f32.xlu0 %v474
        %v476 = vpop.xlane.xlu0 %475
        %v477 = vsel %vm473, %v476, %v459
        %v478 = vmul.f32 %v470, %v463
        %479 = vadd.xlane.f32.xlu0 %v478
        %v480 = vpop.xlane.xlu0 %479
        %v481 = vsel %vm473, %v480, %v463
        %v482 = vmul.f32 %v470, %v467
        %483 = vadd.xlane.f32.xlu0 %v482
        %v484 = vpop.xlane.xlu0 %483
        %v485 = vsel %vm473, %v484, %v467
        %s486 = scalar_lea.vmem [#allocation2], 8
        %v487 = vld [vmem:[%s486] ss:$0 sm:$0xff]
        %v488 = vxor.u32 %v487, 2147483648
        %v489 = vlaneseq
        %v490 = vand.u32 %v489, 127
        %vm491 = vcmp.eq.s32.totalorder %v490, 8
        %v492 = vmul.f32 %v488, %v477
        %493 = vadd.xlane.f32.xlu0 %v492
        %v494 = vpop.xlane.xlu0 %493
        %v495 = vsel %vm491, %v494, %v477
        %v496 = vmul.f32 %v488, %v481
        %497 = vadd.xlane.f32.xlu0 %v496
        %v498 = vpop.xlane.xlu0 %497
        %v499 = vsel %vm491, %v498, %v481
        %v500 = vmul.f32 %v488, %v485
        %501 = vadd.xlane.f32.xlu0 %v500
        %v502 = vpop.xlane.xlu0 %501
        %v503 = vsel %vm491, %v502, %v485
        %s504 = scalar_lea.vmem [#allocation2], 7
        %v505 = vld [vmem:[%s504] ss:$0 sm:$0xff]
        %v506 = vxor.u32 %v505, 2147483648
        %v507 = vlaneseq
        %v508 = vand.u32 %v507, 127
        %vm509 = vcmp.eq.s32.totalorder %v508, 7
        %v510 = vmul.f32 %v506, %v202
        %511 = vadd.xlane.f32.xlu0 %v510
        %v512 = vpop.xlane.xlu0 %511
        %v513 = vsel %vm509, %v512, %v202
        %v514 = vmul.f32 %v506, %v495
        %515 = vadd.xlane.f32.xlu0 %v514
        %v516 = vpop.xlane.xlu0 %515
        %v517 = vsel %vm509, %v516, %v495
        %v518 = vmul.f32 %v506, %v499
        %519 = vadd.xlane.f32.xlu0 %v518
        %v520 = vpop.xlane.xlu0 %519
        %v521 = vsel %vm509, %v520, %v499
        %v522 = vmul.f32 %v506, %v503
        %523 = vadd.xlane.f32.xlu0 %v522
        %v524 = vpop.xlane.xlu0 %523
        %v525 = vsel %vm509, %v524, %v503
        %s526 = scalar_lea.vmem [#allocation2], 6
        %v527 = vld [vmem:[%s526] ss:$0 sm:$0xff]
        %v528 = vxor.u32 %v527, 2147483648
        %v529 = vlaneseq
        %v530 = vand.u32 %v529, 127
        %vm531 = vcmp.eq.s32.totalorder %v530, 6
        %v532 = vmul.f32 %v528, %v513
        %533 = vadd.xlane.f32.xlu0 %v532
        %v534 = vpop.xlane.xlu0 %533
        %v535 = vsel %vm531, %v534, %v513
        %v536 = vmul.f32 %v528, %v517
        %537 = vadd.xlane.f32.xlu0 %v536
        %v538 = vpop.xlane.xlu0 %537
        %v539 = vsel %vm531, %v538, %v517
        %v540 = vmul.f32 %v528, %v521
        %541 = vadd.xlane.f32.xlu0 %v540
        %v542 = vpop.xlane.xlu0 %541
        %v543 = vsel %vm531, %v542, %v521
        %v544 = vmul.f32 %v528, %v525
        %545 = vadd.xlane.f32.xlu0 %v544
        %v546 = vpop.xlane.xlu0 %545
        %v547 = vsel %vm531, %v546, %v525
        %s548 = scalar_lea.vmem [#allocation2], 5
        %v549 = vld [vmem:[%s548] ss:$0 sm:$0xff]
        %v550 = vxor.u32 %v549, 2147483648
        %v551 = vlaneseq
        %v552 = vand.u32 %v551, 127
        %vm553 = vcmp.eq.s32.totalorder %v552, 5
        %v554 = vmul.f32 %v550, %v535
        %555 = vadd.xlane.f32.xlu0 %v554
        %v556 = vpop.xlane.xlu0 %555
        %v557 = vsel %vm553, %v556, %v535
        %v558 = vmul.f32 %v550, %v539
        %559 = vadd.xlane.f32.xlu0 %v558
        %v560 = vpop.xlane.xlu0 %559
        %v561 = vsel %vm553, %v560, %v539
        %v562 = vmul.f32 %v550, %v543
        %563 = vadd.xlane.f32.xlu0 %v562
        %v564 = vpop.xlane.xlu0 %563
        %v565 = vsel %vm553, %v564, %v543
        %v566 = vmul.f32 %v550, %v547
        %567 = vadd.xlane.f32.xlu0 %v566
        %v568 = vpop.xlane.xlu0 %567
        %v569 = vsel %vm553, %v568, %v547
        %s570 = scalar_lea.vmem [#allocation2], 4
        %v571 = vld [vmem:[%s570] ss:$0 sm:$0xff]
        %v572 = vxor.u32 %v571, 2147483648
        %v573 = vlaneseq
        %v574 = vand.u32 %v573, 127
        %vm575 = vcmp.eq.s32.totalorder %v574, 4
        %v576 = vmul.f32 %v572, %v557
        %577 = vadd.xlane.f32.xlu0 %v576
        %v578 = vpop.xlane.xlu0 %577
        %v579 = vsel %vm575, %v578, %v557
        %v580 = vmul.f32 %v572, %v561
        %581 = vadd.xlane.f32.xlu0 %v580
        %v582 = vpop.xlane.xlu0 %581
        %v583 = vsel %vm575, %v582, %v561
        %v584 = vmul.f32 %v572, %v565
        %585 = vadd.xlane.f32.xlu0 %v584
        %v586 = vpop.xlane.xlu0 %585
        %v587 = vsel %vm575, %v586, %v565
        %v588 = vmul.f32 %v572, %v569
        %589 = vadd.xlane.f32.xlu0 %v588
        %v590 = vpop.xlane.xlu0 %589
        %v591 = vsel %vm575, %v590, %v569
        %s592 = scalar_lea.vmem [#allocation2], 3
        %v593 = vld [vmem:[%s592] ss:$0 sm:$0xff]
        %v594 = vxor.u32 %v593, 2147483648
        %v595 = vlaneseq
        %v596 = vand.u32 %v595, 127
        %vm597 = vcmp.eq.s32.totalorder %v596, 3
        %v598 = vmul.f32 %v594, %v579
        %599 = vadd.xlane.f32.xlu0 %v598
        %v600 = vpop.xlane.xlu0 %599
        %v601 = vsel %vm597, %v600, %v579
        %v602 = vmul.f32 %v594, %v583
        %603 = vadd.xlane.f32.xlu0 %v602
        %v604 = vpop.xlane.xlu0 %603
        %v605 = vsel %vm597, %v604, %v583
        %v606 = vmul.f32 %v594, %v587
        %607 = vadd.xlane.f32.xlu0 %v606
        %v608 = vpop.xlane.xlu0 %607
        %v609 = vsel %vm597, %v608, %v587
        %v610 = vmul.f32 %v594, %v591
        %611 = vadd.xlane.f32.xlu0 %v610
        %v612 = vpop.xlane.xlu0 %611
        %v613 = vsel %vm597, %v612, %v591
        %s614 = scalar_lea.vmem [#allocation2], 2
        %v615 = vld [vmem:[%s614] ss:$0 sm:$0xff]
        %v616 = vxor.u32 %v615, 2147483648
        %v617 = vlaneseq
        %v618 = vand.u32 %v617, 127
        %vm619 = vcmp.eq.s32.totalorder %v618, 2
        %v620 = vmul.f32 %v616, %v601
        %621 = vadd.xlane.f32.xlu0 %v620
        %v622 = vpop.xlane.xlu0 %621
        %v623 = vsel %vm619, %v622, %v601
        %v624 = vmul.f32 %v616, %v605
        %625 = vadd.xlane.f32.xlu0 %v624
        %v626 = vpop.xlane.xlu0 %625
        %v627 = vsel %vm619, %v626, %v605
        %v628 = vmul.f32 %v616, %v609
        %629 = vadd.xlane.f32.xlu0 %v628
        %v630 = vpop.xlane.xlu0 %629
        %v631 = vsel %vm619, %v630, %v609
        %v632 = vmul.f32 %v616, %v613
        %633 = vadd.xlane.f32.xlu0 %v632
        %v634 = vpop.xlane.xlu0 %633
        %v635 = vsel %vm619, %v634, %v613
        %s636 = scalar_lea.vmem [#allocation2], 1
        %v637 = vld [vmem:[%s636] ss:$0 sm:$0xff]
        %v638 = vxor.u32 %v637, 2147483648
        %v639 = vlaneseq
        %v640 = vand.u32 %v639, 127
        %vm641 = vcmp.eq.s32.totalorder %v640, 1
        %v642 = vmul.f32 %v638, %v623
        %643 = vadd.xlane.f32.xlu0 %v642
        %v644 = vpop.xlane.xlu0 %643
        %v645 = vsel %vm641, %v644, %v623
        %v646 = vmul.f32 %v638, %v627
        %647 = vadd.xlane.f32.xlu0 %v646
        %v648 = vpop.xlane.xlu0 %647
        %v649 = vsel %vm641, %v648, %v627
        %v650 = vmul.f32 %v638, %v631
        %651 = vadd.xlane.f32.xlu0 %v650
        %v652 = vpop.xlane.xlu0 %651
        %v653 = vsel %vm641, %v652, %v631
        %v654 = vmul.f32 %v638, %v635
        %655 = vadd.xlane.f32.xlu0 %v654
        %v656 = vpop.xlane.xlu0 %655
        %v657 = vsel %vm641, %v656, %v635
        %v658 = vld [vmem:[#allocation2] ss:$0 sm:$0xff]
        %v659 = vxor.u32 %v658, 2147483648
        %v660 = vlaneseq
        %v661 = vand.u32 %v660, 127
        %vm662 = vcmp.eq.s32.totalorder %v661, 0
        %v663 = vmul.f32 %v659, %v645
        %664 = vadd.xlane.f32.xlu0 %v663
        %v665 = vpop.xlane.xlu0 %664
        %v666 = vsel %vm662, %v665, %v645
        %v667 = vmul.f32 %v659, %v649
        %668 = vadd.xlane.f32.xlu0 %v667
        %v669 = vpop.xlane.xlu0 %668
        %v670 = vsel %vm662, %v669, %v649
        %v671 = vmul.f32 %v659, %v653
        %672 = vadd.xlane.f32.xlu0 %v671
        %v673 = vpop.xlane.xlu0 %672
        %v674 = vsel %vm662, %v673, %v653
        %v675 = vmul.f32 %v659, %v657
        %676 = vadd.xlane.f32.xlu0 %v675
        %v677 = vpop.xlane.xlu0 %676
        %v678 = vsel %vm662, %v677, %v657
        %v679 = vrcp.pop %v141
        %v680 = vmul.f32 %v666, %v679
        %vm681 = vweird.f32 %v141
        %v682 = vsel %vm681, %v666, %v680
        %683 = vst [vmem:[%s130] sm:$0xff] %v682
        %v684 = vrcp.pop %v157
        %v685 = vmul.f32 %v670, %v684
        %vm686 = vweird.f32 %v157
        %v687 = vsel %vm686, %v670, %v685
        %s688 = scalar_lea.vmem %s130, 8 [#allocation1]
        %689 = vst [vmem:[%s688] sm:$0xff] %v687
        %v690 = vrcp.pop %v173
        %v691 = vmul.f32 %v674, %v690
        %vm692 = vweird.f32 %v173
        %v693 = vsel %vm692, %v674, %v691
        %s694 = scalar_lea.vmem %s130, 16 [#allocation1]
        %695 = vst [vmem:[%s694] sm:$0xff] %v693
        %v696 = vrcp.pop %v189
        %v697 = vmul.f32 %v678, %v696
        %vm698 = vweird.f32 %v189
        %v699 = vsel %vm698, %v678, %v697
        %s700 = scalar_lea.vmem %s130, 24 [#allocation1]
        %701 = vst [vmem:[%s700] sm:$0xff] %v699
        %s702 = sand.u32 %s8, 1
        %s703 = sand.u32 %s8, 1
        %s704 = smul.addr %s703, 32
        %s705 = scalar_lea.vmem [#allocation1], %s704
        %s706 = sadd.s32 %s19, %s18
        %s707 = smul.addr %s17, 4
        %s708 = sadd.s32 %s706, %s707
        %s709 = smul.addr %s16, 4
        %s710 = sadd.s32 %s708, %s709
        %s711 = smul.addr %s15, 8
        %s712 = sadd.s32 %s710, %s711
        %s713 = smul.addr %s712, 8
        %s714 = scalar_lea.vmem %s1, %s713
        // Predicated region
        $region55: #{custom-call.11} parent=53 // pred_check
          _
        $region56: #{custom-call.11} parent=53 // pred_check_branch
          %716 = sbr.rel (0) target = $region58
        $region57: #{custom-call.11} parent=53 // pred_region
          // Predicated region
          $region59: #{custom-call.11} parent=57 // pred_check
            _
          $region60: #{custom-call.11} parent=57 // pred_check_branch
            %718 = sbr.rel (0) target = $region62
          $region61: #{custom-call.11} parent=57 // pred_region
            // Predicated region
            $region74: #{custom-call.11} parent=61 // pred_check
              _
            $region75: #{custom-call.11} parent=61 // pred_check_branch
              %739 = sbr.rel (0) target = $region77
            $region76: #{custom-call.11} parent=61 // pred_region
              loop: start=0, step=1, limit=1
              $region78: #{custom-call.11} parent=76 // loop_pre_header
                _
              $region79: #{custom-call.11} parent=76 // loop_header
                %s741 = sphi 0, %s745
                %p742 = scmp.ge.s32.totalorder %s741, 1
                %s746 = sphi %s705, %s705
                %s747 = sphi %s714, %s714
              $region80: #{custom-call.11} parent=76 // loop_header_branch
                %744 = sbr.rel (%p742) target = $region84
              $region81: #{custom-call.11} parent=76 // loop_body
                %v748 = vld [vmem:[%s746] sm:$0xff]
                %749 = vst [vmem:[%s747] sm:$0xff] %v748
                %v750 = vld [vmem:[%s746 + $0x8] sm:$0xff]
                %751 = vst [vmem:[%s747 + $0x8] sm:$0xff] %v750
                %v752 = vld [vmem:[%s746 + $0x10] sm:$0xff]
                %753 = vst [vmem:[%s747 + $0x10] sm:$0xff] %v752
                %v754 = vld [vmem:[%s746 + $0x18] sm:$0xff]
                %755 = vst [vmem:[%s747 + $0x18] sm:$0xff] %v754
              $region82: #{custom-call.11} parent=76 // loop_footer
                %s745 = sadd.s32 1, %s741
              $region83: #{custom-call.11} parent=76 // loop_footer_branch
                %740 = sbr.rel target = $region79
              $region84: #{custom-call.11} parent=76 // loop_exit
                _
            $region77: #{custom-call.11} parent=61 // pred_fallthru
              _
            // Predicated region
            $region85: #{custom-call.11} parent=61 // pred_check
              _
            $region86: #{custom-call.11} parent=61 // pred_check_branch
              %757 = sbr.rel target = $region88
            $region87: #{custom-call.11} parent=61 // pred_region
              _
            $region88: #{custom-call.11} parent=61 // pred_fallthru
              _
          $region62: #{custom-call.11} parent=57 // pred_fallthru
            _
          // Predicated region
          $region63: #{custom-call.11} parent=57 // pred_check
            _
          $region64: #{custom-call.11} parent=57 // pred_check_branch
            %720 = sbr.rel target = $region66
          $region65: #{custom-call.11} parent=57 // pred_region
            loop: start=0, step=1, limit=1
            $region67: #{custom-call.11} parent=65 // loop_pre_header
              _
            $region68: #{custom-call.11} parent=65 // loop_header
              %s723 = sphi 0, %s727
              %p724 = scmp.ge.s32.totalorder %s723, 1
              %s728 = sphi %s705, %s705
              %s729 = sphi %s714, %s714
            $region69: #{custom-call.11} parent=65 // loop_header_branch
              %726 = sbr.rel (%p724) target = $region73
            $region70: #{custom-call.11} parent=65 // loop_body
              %v730 = vld [vmem:[%s728] sm:$0xff]
              %731 = vst [vmem:[%s729] sm:$0xff] %v730
              %v732 = vld [vmem:[%s728 + $0x8] sm:$0xff]
              %733 = vst [vmem:[%s729 + $0x8] sm:$0xff] %v732
              %v734 = vld [vmem:[%s728 + $0x10] sm:$0xff]
              %735 = vst [vmem:[%s729 + $0x10] sm:$0xff] %v734
              %v736 = vld [vmem:[%s728 + $0x18] sm:$0xff]
              %737 = vst [vmem:[%s729 + $0x18] sm:$0xff] %v736
            $region71: #{custom-call.11} parent=65 // loop_footer
              %s727 = sadd.s32 1, %s723
            $region72: #{custom-call.11} parent=65 // loop_footer_branch
              %722 = sbr.rel target = $region68
            $region73: #{custom-call.11} parent=65 // loop_exit
              _
          $region66: #{custom-call.11} parent=57 // pred_fallthru
            _
        $region58: #{custom-call.11} parent=53 // pred_fallthru
          _
        %758 = vnop
      $region54: #{custom-call.11} parent=5 // pred_fallthru
        _
      %p759 = scmp.le.s32.totalorder 2, %s3
      // Predicated region
      $region89: #{custom-call.11} parent=5 // pred_check
        %p760 = pneg %p759
      $region90: #{custom-call.11} parent=5 // pred_check_branch
        %762 = sbr.rel (%p760) target = $region92
      $region91: #{custom-call.11} parent=5 // pred_region
        %s763 = ssub.s32 %s3, 2
        %s764 = sand.u32 %s9, 1
        %s765 = sand.u32 %s9, 1
        %s766 = smul.addr %s765, 32
        %s767 = scalar_lea.vmem [#allocation1], %s766
      $region92: #{custom-call.11} parent=5 // pred_fallthru
        _
    $region6: #{custom-call.11} parent=1 // loop_footer
      %s7 = sadd.s32 1, %s3
    $region7: #{custom-call.11} parent=1 // loop_footer_branch
      %2 = sbr.rel target = $region3
    $region8: #{custom-call.11} parent=1 // loop_exit
      _

// kernel: custom-call.13
$region0: #{custom-call.13}
  %s0 = inlined_call_operand.vmem [shape: f32[2,2,27,27], index: 0, kind: input, shape index: {}]
  %s1 = inlined_call_operand.vmem [shape: f32[2,2,27,27], index: 1, kind: output, shape index: {}]
  $region1: #{custom-call.13} parent=0
    #allocation0 [shape = 'u8[32768]{0}', space=vmem, size = 0x8000, scoped, tag = 'operand span for operand 0']
    #allocation1 [shape = 'u8[32768]{0}', space=vmem, size = 0x8000, scoped, tag = 'operand span for operand 1']
    loop: start=0, step=1, limit=6
    $region2: #{custom-call.13} parent=1 // loop_pre_header
      _
    $region3: #{custom-call.13} parent=1 // loop_header
      %s3 = sphi 0, %s7
      %p4 = scmp.ge.s32.totalorder %s3, 6
      %s10 = sphi 0, %s36
      %s11 = sphi 0, %s32
      %s12 = sphi 0, %s28
      %s13 = sphi 0, %s24
      %s14 = sphi 0, %s10
      %s15 = sphi 0, %s11
      %s16 = sphi 0, %s12
      %s17 = sphi 0, %s13
      %s18 = sphi 0, %s14
      %s19 = sphi 0, %s15
      %s20 = sphi 0, %s16
      %s21 = sphi 0, %s17
    $region4: #{custom-call.13} parent=1 // loop_header_branch
      %6 = sbr.rel (%p4) target = $region8
    $region5: #{custom-call.13} parent=1 // loop_body
      %s8 = ssub.s32 %s3, 1
      %s9 = ssub.s32 %s3, 2
      %s22 = sadd.s32 1, %s13
      %p23 = scmp.ge.s32.totalorder %s22, 1
      %s24 = scalar_select %p23, 0, %s22
      %s25 = sadd.s32 1, %s12
      %s26 = scalar_select %p23, %s25, %s12
      %p27 = scmp.ge.s32.totalorder %s26, 1
      %s28 = scalar_select %p27, 0, %s26
      %s29 = sadd.s32 1, %s11
      %s30 = scalar_select %p27, %s29, %s11
      %p31 = scmp.ge.s32.totalorder %s30, 2
      %s32 = scalar_select %p31, 0, %s30
      %s33 = sadd.s32 1, %s10
      %s34 = scalar_select %p31, %s33, %s10
      %p35 = scmp.ge.s32.totalorder %s34, 2
      %s36 = scalar_select %p35, 0, %s34
      %p37 = scmp.le.s32.totalorder 1, %s3
      %p38 = scmp.lt.s32.totalorder %s3, 5
      %p39 = pnand %p37, %p38
      %p40 = pneg %p39
      // Predicated region
      $region9: #{custom-call.13} parent=5 // pred_check
        _
      $region10: #{custom-call.13} parent=5 // pred_check_branch
        %42 = sbr.rel (%p39) target = $region12
      $region11: #{custom-call.13} parent=5 // pred_region
        %s43 = ssub.s32 %s3, 1
      $region12: #{custom-call.13} parent=5 // pred_fallthru
        _
      %p44 = scmp.lt.s32.totalorder %s3, 4
      // Predicated region
      $region13: #{custom-call.13} parent=5 // pred_check
        %p45 = pneg %p44
      $region14: #{custom-call.13} parent=5 // pred_check_branch
        %47 = sbr.rel (%p45) target = $region16
      $region15: #{custom-call.13} parent=5 // pred_region
        %s48 = sand.u32 %s3, 1
        %s49 = sand.u32 %s3, 1
        %s50 = smul.addr %s49, 32
        %s51 = scalar_lea.vmem [#allocation0], %s50
        %s52 = sadd.s32 %s13, %s12
        %s53 = smul.addr %s11, 4
        %s54 = sadd.s32 %s52, %s53
        %s55 = smul.addr %s10, 8
        %s56 = sadd.s32 %s54, %s55
        %s57 = smul.addr %s56, 8
        %s58 = scalar_lea.vmem %s0, %s57
        // Predicated region
        $region17: #{custom-call.13} parent=15 // pred_check
          _
        $region18: #{custom-call.13} parent=15 // pred_check_branch
          %60 = sbr.rel (0) target = $region20
        $region19: #{custom-call.13} parent=15 // pred_region
          // Predicated region
          $region21: #{custom-call.13} parent=19 // pred_check
            _
          $region22: #{custom-call.13} parent=19 // pred_check_branch
            %62 = sbr.rel (0) target = $region24
          $region23: #{custom-call.13} parent=19 // pred_region
            // Predicated region
            $region36: #{custom-call.13} parent=23 // pred_check
              _
            $region37: #{custom-call.13} parent=23 // pred_check_branch
              %83 = sbr.rel (0) target = $region39
            $region38: #{custom-call.13} parent=23 // pred_region
              loop: start=0, step=1, limit=1
              $region40: #{custom-call.13} parent=38 // loop_pre_header
                _
              $region41: #{custom-call.13} parent=38 // loop_header
                %s85 = sphi 0, %s89
                %p86 = scmp.ge.s32.totalorder %s85, 1
                %s90 = sphi %s58, %s58
                %s91 = sphi %s51, %s51
              $region42: #{custom-call.13} parent=38 // loop_header_branch
                %88 = sbr.rel (%p86) target = $region46
              $region43: #{custom-call.13} parent=38 // loop_body
                %v92 = vld [vmem:[%s90] sm:$0xff]
                %93 = vst [vmem:[%s91] sm:$0xff] %v92
                %v94 = vld [vmem:[%s90 + $0x8] sm:$0xff]
                %95 = vst [vmem:[%s91 + $0x8] sm:$0xff] %v94
                %v96 = vld [vmem:[%s90 + $0x10] sm:$0xff]
                %97 = vst [vmem:[%s91 + $0x10] sm:$0xff] %v96
                %v98 = vld [vmem:[%s90 + $0x18] sm:$0xff]
                %99 = vst [vmem:[%s91 + $0x18] sm:$0xff] %v98
              $region44: #{custom-call.13} parent=38 // loop_footer
                %s89 = sadd.s32 1, %s85
              $region45: #{custom-call.13} parent=38 // loop_footer_branch
                %84 = sbr.rel target = $region41
              $region46: #{custom-call.13} parent=38 // loop_exit
                _
            $region39: #{custom-call.13} parent=23 // pred_fallthru
              _
            // Predicated region
            $region47: #{custom-call.13} parent=23 // pred_check
              _
            $region48: #{custom-call.13} parent=23 // pred_check_branch
              %101 = sbr.rel target = $region50
            $region49: #{custom-call.13} parent=23 // pred_region
              _
            $region50: #{custom-call.13} parent=23 // pred_fallthru
              _
          $region24: #{custom-call.13} parent=19 // pred_fallthru
            _
          // Predicated region
          $region25: #{custom-call.13} parent=19 // pred_check
            _
          $region26: #{custom-call.13} parent=19 // pred_check_branch
            %64 = sbr.rel target = $region28
          $region27: #{custom-call.13} parent=19 // pred_region
            loop: start=0, step=1, limit=1
            $region29: #{custom-call.13} parent=27 // loop_pre_header
              _
            $region30: #{custom-call.13} parent=27 // loop_header
              %s67 = sphi 0, %s71
              %p68 = scmp.ge.s32.totalorder %s67, 1
              %s72 = sphi %s58, %s58
              %s73 = sphi %s51, %s51
            $region31: #{custom-call.13} parent=27 // loop_header_branch
              %70 = sbr.rel (%p68) target = $region35
            $region32: #{custom-call.13} parent=27 // loop_body
              %v74 = vld [vmem:[%s72] sm:$0xff]
              %75 = vst [vmem:[%s73] sm:$0xff] %v74
              %v76 = vld [vmem:[%s72 + $0x8] sm:$0xff]
              %77 = vst [vmem:[%s73 + $0x8] sm:$0xff] %v76
              %v78 = vld [vmem:[%s72 + $0x10] sm:$0xff]
              %79 = vst [vmem:[%s73 + $0x10] sm:$0xff] %v78
              %v80 = vld [vmem:[%s72 + $0x18] sm:$0xff]
              %81 = vst [vmem:[%s73 + $0x18] sm:$0xff] %v80
            $region33: #{custom-call.13} parent=27 // loop_footer
              %s71 = sadd.s32 1, %s67
            $region34: #{custom-call.13} parent=27 // loop_footer_branch
              %66 = sbr.rel target = $region30
            $region35: #{custom-call.13} parent=27 // loop_exit
              _
          $region28: #{custom-call.13} parent=19 // pred_fallthru
            _
        $region20: #{custom-call.13} parent=15 // pred_fallthru
          _
        %102 = vnop
      $region16: #{custom-call.13} parent=5 // pred_fallthru
        _
      %p103 = scmp.le.s32.totalorder 1, %s3
      %p104 = scmp.lt.s32.totalorder %s3, 5
      %p105 = pnand %p103, %p104
      %p106 = pneg %p105
      // Predicated region
      $region51: #{custom-call.13} parent=5 // pred_check
        _
      $region52: #{custom-call.13} parent=5 // pred_check_branch
        %108 = sbr.rel (%p105) target = $region54
      $region53: #{custom-call.13} parent=5 // pred_region
        %s109 = ssub.s32 %s3, 1
        %s110 = sand.u32 %s8, 1
        %s111 = sand.u32 %s8, 1
        %s112 = smul.addr %s111, 32
        %s113 = scalar_lea.vmem [#allocation0], %s112
        %s114 = sand.u32 %s8, 1
        %s115 = sand.u32 %s8, 1
        %s116 = smul.addr %s115, 32
        %s117 = scalar_lea.vmem [#allocation0], %s116
        %s118 = sand.u32 %s8, 1
        %s119 = sand.u32 %s8, 1
        %s120 = smul.addr %s119, 32
        %s121 = scalar_lea.vmem [#allocation1], %s120
        %122 = vst [vmem:[%s121] sm:$0xff] 0.0
        %s123 = scalar_lea.vmem %s121, 8 [#allocation1]
        %124 = vst [vmem:[%s123] sm:$0xff] 0.0
        %s125 = scalar_lea.vmem %s121, 16 [#allocation1]
        %126 = vst [vmem:[%s125] sm:$0xff] 0.0
        %s127 = scalar_lea.vmem %s121, 24 [#allocation1]
        %128 = vst [vmem:[%s127] sm:$0xff] 0.0
        %vm129 = vcmask 7168
        %v130 = vld [vmem:[%s121] ss:$0 sm:$0xff]
        %v131 = vld [vmem:[%s113] ss:$0 sm:$0xff]
        %v132 = vmul.f32 %v130, %v130
        %133 = vadd.xlane.f32.xlu0 %v132
        %v134 = vpop.xlane.xlu0 %133
        %v135 = vsub.f32 %v131, %v134
        %v136 = vrsqrt.pop %v135
        %v137 = vld [vmem:[%s113] sm:$0xff]
        %v138 = vld [vmem:[%s121] sm:$0xff]
        %v139 = vmul.f32 %v138, %v130
        %140 = vadd.xlane.f32.xlu0 %v139
        %v141 = vpop.xlane.xlu0 %140
        %v142 = vsub.f32 %v137, %v141
        %v143 = vmul.f32 %v142, %v136
        %v144 = vsel %vm129, %v143, 0.0
        %v145 = vadd.f32 %v138, %v144
        %146 = vst [vmem:[%s121] sm:$0xff] %v145
        %s147 = scalar_lea.vmem %s113, 8 [#allocation0]
        %v148 = vld [vmem:[%s147] sm:$0xff]
        %s149 = scalar_lea.vmem %s121, 8 [#allocation1]
        %v150 = vld [vmem:[%s149] sm:$0xff]
        %v151 = vmul.f32 %v150, %v130
        %152 = vadd.xlane.f32.xlu0 %v151
        %v153 = vpop.xlane.xlu0 %152
        %v154 = vsub.f32 %v148, %v153
        %v155 = vmul.f32 %v154, %v136
        %v156 = vsel %vm129, %v155, 0.0
        %v157 = vadd.f32 %v150, %v156
        %s158 = scalar_lea.vmem %s121, 8 [#allocation1]
        %159 = vst [vmem:[%s158] sm:$0xff] %v157
        %s160 = scalar_lea.vmem %s113, 16 [#allocation0]
        %v161 = vld [vmem:[%s160] sm:$0xff]
        %s162 = scalar_lea.vmem %s121, 16 [#allocation1]
        %v163 = vld [vmem:[%s162] sm:$0xff]
        %v164 = vmul.f32 %v163, %v130
        %165 = vadd.xlane.f32.xlu0 %v164
        %v166 = vpop.xlane.xlu0 %165
        %v167 = vsub.f32 %v161, %v166
        %v168 = vmul.f32 %v167, %v136
        %v169 = vsel %vm129, %v168, 0.0
        %v170 = vadd.f32 %v163, %v169
        %s171 = scalar_lea.vmem %s121, 16 [#allocation1]
        %172 = vst [vmem:[%s171] sm:$0xff] %v170
        %s173 = scalar_lea.vmem %s113, 24 [#allocation0]
        %v174 = vld [vmem:[%s173] sm:$0xff]
        %s175 = scalar_lea.vmem %s121, 24 [#allocation1]
        %v176 = vld [vmem:[%s175] sm:$0xff]
        %v177 = vmul.f32 %v176, %v130
        %178 = vadd.xlane.f32.xlu0 %v177
        %v179 = vpop.xlane.xlu0 %178
        %v180 = vsub.f32 %v174, %v179
        %v181 = vmul.f32 %v180, %v136
        %v182 = vsel %vm129, %v181, 0.0
        %v183 = vadd.f32 %v176, %v182
        %s184 = scalar_lea.vmem %s121, 24 [#allocation1]
        %185 = vst [vmem:[%s184] sm:$0xff] %v183
        %vm186 = vcmask 15368
        %s187 = scalar_lea.vmem %s121, 1 [#allocation1]
        %v188 = vld [vmem:[%s187] ss:$0 sm:$0xff]
        %s189 = scalar_lea.vmem %s113, 1 [#allocation0]
        %v190 = vld [vmem:[%s189] ss:$0 sm:$0xff]
        %v191 = vmul.f32 %v188, %v188
        %192 = vadd.xlane.f32.xlu0 %v191
        %v193 = vpop.xlane.xlu0 %192
        %v194 = vsub.f32 %v190, %v193
        %v195 = vrsqrt.pop %v194
        %v196 = vld [vmem:[%s113] sm:$0xff]
        %v197 = vld [vmem:[%s121] sm:$0xff]
        %v198 = vmul.f32 %v197, %v188
        %199 = vadd.xlane.f32.xlu0 %v198
        %v200 = vpop.xlane.xlu0 %199
        %v201 = vsub.f32 %v196, %v200
        %v202 = vmul.f32 %v201, %v195
        %vm203 = vcmask 1047553
        %vm204 = vmand %vm186, %vm203
        %v205 = vsel %vm204, %v202, 0.0
        %v206 = vadd.f32 %v197, %v205
        %207 = vst [vmem:[%s121] sm:$0xff] %v206
        %s208 = scalar_lea.vmem %s113, 8 [#allocation0]
        %v209 = vld [vmem:[%s208] sm:$0xff]
        %s210 = scalar_lea.vmem %s121, 8 [#allocation1]
        %v211 = vld [vmem:[%s210] sm:$0xff]
        %v212 = vmul.f32 %v211, %v188
        %213 = vadd.xlane.f32.xlu0 %v212
        %v214 = vpop.xlane.xlu0 %213
        %v215 = vsub.f32 %v209, %v214
        %v216 = vmul.f32 %v215, %v195
        %v217 = vsel %vm186, %v216, 0.0
        %v218 = vadd.f32 %v211, %v217
        %s219 = scalar_lea.vmem %s121, 8 [#allocation1]
        %220 = vst [vmem:[%s219] sm:$0xff] %v218
        %s221 = scalar_lea.vmem %s113, 16 [#allocation0]
        %v222 = vld [vmem:[%s221] sm:$0xff]
        %s223 = scalar_lea.vmem %s121, 16 [#allocation1]
        %v224 = vld [vmem:[%s223] sm:$0xff]
        %v225 = vmul.f32 %v224, %v188
        %226 = vadd.xlane.f32.xlu0 %v225
        %v227 = vpop.xlane.xlu0 %226
        %v228 = vsub.f32 %v222, %v227
        %v229 = vmul.f32 %v228, %v195
        %v230 = vsel %vm186, %v229, 0.0
        %v231 = vadd.f32 %v224, %v230
        %s232 = scalar_lea.vmem %s121, 16 [#allocation1]
        %233 = vst [vmem:[%s232] sm:$0xff] %v231
        %s234 = scalar_lea.vmem %s113, 24 [#allocation0]
        %v235 = vld [vmem:[%s234] sm:$0xff]
        %s236 = scalar_lea.vmem %s121, 24 [#allocation1]
        %v237 = vld [vmem:[%s236] sm:$0xff]
        %v238 = vmul.f32 %v237, %v188
        %239 = vadd.xlane.f32.xlu0 %v238
        %v240 = vpop.xlane.xlu0 %239
        %v241 = vsub.f32 %v235, %v240
        %v242 = vmul.f32 %v241, %v195
        %v243 = vsel %vm186, %v242, 0.0
        %v244 = vadd.f32 %v237, %v243
        %s245 = scalar_lea.vmem %s121, 24 [#allocation1]
        %246 = vst [vmem:[%s245] sm:$0xff] %v244
        %vm247 = vcmask 23568
        %s248 = scalar_lea.vmem %s121, 2 [#allocation1]
        %v249 = vld [vmem:[%s248] ss:$0 sm:$0xff]
        %s250 = scalar_lea.vmem %s113, 2 [#allocation0]
        %v251 = vld [vmem:[%s250] ss:$0 sm:$0xff]
        %v252 = vmul.f32 %v249, %v249
        %253 = vadd.xlane.f32.xlu0 %v252
        %v254 = vpop.xlane.xlu0 %253
        %v255 = vsub.f32 %v251, %v254
        %v256 = vrsqrt.pop %v255
        %v257 = vld [vmem:[%s113] sm:$0xff]
        %v258 = vld [vmem:[%s121] sm:$0xff]
        %v259 = vmul.f32 %v258, %v249
        %260 = vadd.xlane.f32.xlu0 %v259
        %v261 = vpop.xlane.xlu0 %260
        %v262 = vsub.f32 %v257, %v261
        %v263 = vmul.f32 %v262, %v256
        %vm264 = vcmask 1047554
        %vm265 = vmand %vm247, %vm264
        %v266 = vsel %vm265, %v263, 0.0
        %v267 = vadd.f32 %v258, %v266
        %268 = vst [vmem:[%s121] sm:$0xff] %v267
        %s269 = scalar_lea.vmem %s113, 8 [#allocation0]
        %v270 = vld [vmem:[%s269] sm:$0xff]
        %s271 = scalar_lea.vmem %s121, 8 [#allocation1]
        %v272 = vld [vmem:[%s271] sm:$0xff]
        %v273 = vmul.f32 %v272, %v249
        %274 = vadd.xlane.f32.xlu0 %v273
        %v275 = vpop.xlane.xlu0 %274
        %v276 = vsub.f32 %v270, %v275
        %v277 = vmul.f32 %v276, %v256
        %v278 = vsel %vm247, %v277, 0.0
        %v279 = vadd.f32 %v272, %v278
        %s280 = scalar_lea.vmem %s121, 8 [#allocation1]
        %281 = vst [vmem:[%s280] sm:$0xff] %v279
        %s282 = scalar_lea.vmem %s113, 16 [#allocation0]
        %v283 = vld [vmem:[%s282] sm:$0xff]
        %s284 = scalar_lea.vmem %s121, 16 [#allocation1]
        %v285 = vld [vmem:[%s284] sm:$0xff]
        %v286 = vmul.f32 %v285, %v249
        %287 = vadd.xlane.f32.xlu0 %v286
        %v288 = vpop.xlane.xlu0 %287
        %v289 = vsub.f32 %v283, %v288
        %v290 = vmul.f32 %v289, %v256
        %v291 = vsel %vm247, %v290, 0.0
        %v292 = vadd.f32 %v285, %v291
        %s293 = scalar_lea.vmem %s121, 16 [#allocation1]
        %294 = vst [vmem:[%s293] sm:$0xff] %v292
        %s295 = scalar_lea.vmem %s113, 24 [#allocation0]
        %v296 = vld [vmem:[%s295] sm:$0xff]
        %s297 = scalar_lea.vmem %s121, 24 [#allocation1]
        %v298 = vld [vmem:[%s297] sm:$0xff]
        %v299 = vmul.f32 %v298, %v249
        %300 = vadd.xlane.f32.xlu0 %v299
        %v301 = vpop.xlane.xlu0 %300
        %v302 = vsub.f32 %v296, %v301
        %v303 = vmul.f32 %v302, %v256
        %v304 = vsel %vm247, %v303, 0.0
        %v305 = vadd.f32 %v298, %v304
        %s306 = scalar_lea.vmem %s121, 24 [#allocation1]
        %307 = vst [vmem:[%s306] sm:$0xff] %v305
        %vm308 = vcmask 31768
        %s309 = scalar_lea.vmem %s121, 3 [#allocation1]
        %v310 = vld [vmem:[%s309] ss:$0 sm:$0xff]
        %s311 = scalar_lea.vmem %s113, 3 [#allocation0]
        %v312 = vld [vmem:[%s311] ss:$0 sm:$0xff]
        %v313 = vmul.f32 %v310, %v310
        %314 = vadd.xlane.f32.xlu0 %v313
        %v315 = vpop.xlane.xlu0 %314
        %v316 = vsub.f32 %v312, %v315
        %v317 = vrsqrt.pop %v316
        %v318 = vld [vmem:[%s113] sm:$0xff]
        %v319 = vld [vmem:[%s121] sm:$0xff]
        %v320 = vmul.f32 %v319, %v310
        %321 = vadd.xlane.f32.xlu0 %v320
        %v322 = vpop.xlane.xlu0 %321
        %v323 = vsub.f32 %v318, %v322
        %v324 = vmul.f32 %v323, %v317
        %vm325 = vcmask 1047555
        %vm326 = vmand %vm308, %vm325
        %v327 = vsel %vm326, %v324, 0.0
        %v328 = vadd.f32 %v319, %v327
        %329 = vst [vmem:[%s121] sm:$0xff] %v328
        %s330 = scalar_lea.vmem %s113, 8 [#allocation0]
        %v331 = vld [vmem:[%s330] sm:$0xff]
        %s332 = scalar_lea.vmem %s121, 8 [#allocation1]
        %v333 = vld [vmem:[%s332] sm:$0xff]
        %v334 = vmul.f32 %v333, %v310
        %335 = vadd.xlane.f32.xlu0 %v334
        %v336 = vpop.xlane.xlu0 %335
        %v337 = vsub.f32 %v331, %v336
        %v338 = vmul.f32 %v337, %v317
        %v339 = vsel %vm308, %v338, 0.0
        %v340 = vadd.f32 %v333, %v339
        %s341 = scalar_lea.vmem %s121, 8 [#allocation1]
        %342 = vst [vmem:[%s341] sm:$0xff] %v340
        %s343 = scalar_lea.vmem %s113, 16 [#allocation0]
        %v344 = vld [vmem:[%s343] sm:$0xff]
        %s345 = scalar_lea.vmem %s121, 16 [#allocation1]
        %v346 = vld [vmem:[%s345] sm:$0xff]
        %v347 = vmul.f32 %v346, %v310
        %348 = vadd.xlane.f32.xlu0 %v347
        %v349 = vpop.xlane.xlu0 %348
        %v350 = vsub.f32 %v344, %v349
        %v351 = vmul.f32 %v350, %v317
        %v352 = vsel %vm308, %v351, 0.0
        %v353 = vadd.f32 %v346, %v352
        %s354 = scalar_lea.vmem %s121, 16 [#allocation1]
        %355 = vst [vmem:[%s354] sm:$0xff] %v353
        %s356 = scalar_lea.vmem %s113, 24 [#allocation0]
        %v357 = vld [vmem:[%s356] sm:$0xff]
        %s358 = scalar_lea.vmem %s121, 24 [#allocation1]
        %v359 = vld [vmem:[%s358] sm:$0xff]
        %v360 = vmul.f32 %v359, %v310
        %361 = vadd.xlane.f32.xlu0 %v360
        %v362 = vpop.xlane.xlu0 %361
        %v363 = vsub.f32 %v357, %v362
        %v364 = vmul.f32 %v363, %v317
        %v365 = vsel %vm308, %v364, 0.0
        %v366 = vadd.f32 %v359, %v365
        %s367 = scalar_lea.vmem %s121, 24 [#allocation1]
        %368 = vst [vmem:[%s367] sm:$0xff] %v366
        %vm369 = vcmask 39968
        %s370 = scalar_lea.vmem %s121, 4 [#allocation1]
        %v371 = vld [vmem:[%s370] ss:$0 sm:$0xff]
        %s372 = scalar_lea.vmem %s113, 4 [#allocation0]
        %v373 = vld [vmem:[%s372] ss:$0 sm:$0xff]
        %v374 = vmul.f32 %v371, %v371
        %375 = vadd.xlane.f32.xlu0 %v374
        %v376 = vpop.xlane.xlu0 %375
        %v377 = vsub.f32 %v373, %v376
        %v378 = vrsqrt.pop %v377
        %v379 = vld [vmem:[%s113] sm:$0xff]
        %v380 = vld [vmem:[%s121] sm:$0xff]
        %v381 = vmul.f32 %v380, %v371
        %382 = vadd.xlane.f32.xlu0 %v381
        %v383 = vpop.xlane.xlu0 %382
        %v384 = vsub.f32 %v379, %v383
        %v385 = vmul.f32 %v384, %v378
        %vm386 = vcmask 1047556
        %vm387 = vmand %vm369, %vm386
        %v388 = vsel %vm387, %v385, 0.0
        %v389 = vadd.f32 %v380, %v388
        %390 = vst [vmem:[%s121] sm:$0xff] %v389
        %s391 = scalar_lea.vmem %s113, 8 [#allocation0]
        %v392 = vld [vmem:[%s391] sm:$0xff]
        %s393 = scalar_lea.vmem %s121, 8 [#allocation1]
        %v394 = vld [vmem:[%s393] sm:$0xff]
        %v395 = vmul.f32 %v394, %v371
        %396 = vadd.xlane.f32.xlu0 %v395
        %v397 = vpop.xlane.xlu0 %396
        %v398 = vsub.f32 %v392, %v397
        %v399 = vmul.f32 %v398, %v378
        %v400 = vsel %vm369, %v399, 0.0
        %v401 = vadd.f32 %v394, %v400
        %s402 = scalar_lea.vmem %s121, 8 [#allocation1]
        %403 = vst [vmem:[%s402] sm:$0xff] %v401
        %s404 = scalar_lea.vmem %s113, 16 [#allocation0]
        %v405 = vld [vmem:[%s404] sm:$0xff]
        %s406 = scalar_lea.vmem %s121, 16 [#allocation1]
        %v407 = vld [vmem:[%s406] sm:$0xff]
        %v408 = vmul.f32 %v407, %v371
        %409 = vadd.xlane.f32.xlu0 %v408
        %v410 = vpop.xlane.xlu0 %409
        %v411 = vsub.f32 %v405, %v410
        %v412 = vmul.f32 %v411, %v378
        %v413 = vsel %vm369, %v412, 0.0
        %v414 = vadd.f32 %v407, %v413
        %s415 = scalar_lea.vmem %s121, 16 [#allocation1]
        %416 = vst [vmem:[%s415] sm:$0xff] %v414
        %s417 = scalar_lea.vmem %s113, 24 [#allocation0]
        %v418 = vld [vmem:[%s417] sm:$0xff]
        %s419 = scalar_lea.vmem %s121, 24 [#allocation1]
        %v420 = vld [vmem:[%s419] sm:$0xff]
        %v421 = vmul.f32 %v420, %v371
        %422 = vadd.xlane.f32.xlu0 %v421
        %v423 = vpop.xlane.xlu0 %422
        %v424 = vsub.f32 %v418, %v423
        %v425 = vmul.f32 %v424, %v378
        %v426 = vsel %vm369, %v425, 0.0
        %v427 = vadd.f32 %v420, %v426
        %s428 = scalar_lea.vmem %s121, 24 [#allocation1]
        %429 = vst [vmem:[%s428] sm:$0xff] %v427
        %vm430 = vcmask 48168
        %s431 = scalar_lea.vmem %s121, 5 [#allocation1]
        %v432 = vld [vmem:[%s431] ss:$0 sm:$0xff]
        %s433 = scalar_lea.vmem %s113, 5 [#allocation0]
        %v434 = vld [vmem:[%s433] ss:$0 sm:$0xff]
        %v435 = vmul.f32 %v432, %v432
        %436 = vadd.xlane.f32.xlu0 %v435
        %v437 = vpop.xlane.xlu0 %436
        %v438 = vsub.f32 %v434, %v437
        %v439 = vrsqrt.pop %v438
        %v440 = vld [vmem:[%s113] sm:$0xff]
        %v441 = vld [vmem:[%s121] sm:$0xff]
        %v442 = vmul.f32 %v441, %v432
        %443 = vadd.xlane.f32.xlu0 %v442
        %v444 = vpop.xlane.xlu0 %443
        %v445 = vsub.f32 %v440, %v444
        %v446 = vmul.f32 %v445, %v439
        %vm447 = vcmask 1047557
        %vm448 = vmand %vm430, %vm447
        %v449 = vsel %vm448, %v446, 0.0
        %v450 = vadd.f32 %v441, %v449
        %451 = vst [vmem:[%s121] sm:$0xff] %v450
        %s452 = scalar_lea.vmem %s113, 8 [#allocation0]
        %v453 = vld [vmem:[%s452] sm:$0xff]
        %s454 = scalar_lea.vmem %s121, 8 [#allocation1]
        %v455 = vld [vmem:[%s454] sm:$0xff]
        %v456 = vmul.f32 %v455, %v432
        %457 = vadd.xlane.f32.xlu0 %v456
        %v458 = vpop.xlane.xlu0 %457
        %v459 = vsub.f32 %v453, %v458
        %v460 = vmul.f32 %v459, %v439
        %v461 = vsel %vm430, %v460, 0.0
        %v462 = vadd.f32 %v455, %v461
        %s463 = scalar_lea.vmem %s121, 8 [#allocation1]
        %464 = vst [vmem:[%s463] sm:$0xff] %v462
        %s465 = scalar_lea.vmem %s113, 16 [#allocation0]
        %v466 = vld [vmem:[%s465] sm:$0xff]
        %s467 = scalar_lea.vmem %s121, 16 [#allocation1]
        %v468 = vld [vmem:[%s467] sm:$0xff]
        %v469 = vmul.f32 %v468, %v432
        %470 = vadd.xlane.f32.xlu0 %v469
        %v471 = vpop.xlane.xlu0 %470
        %v472 = vsub.f32 %v466, %v471
        %v473 = vmul.f32 %v472, %v439
        %v474 = vsel %vm430, %v473, 0.0
        %v475 = vadd.f32 %v468, %v474
        %s476 = scalar_lea.vmem %s121, 16 [#allocation1]
        %477 = vst [vmem:[%s476] sm:$0xff] %v475
        %s478 = scalar_lea.vmem %s113, 24 [#allocation0]
        %v479 = vld [vmem:[%s478] sm:$0xff]
        %s480 = scalar_lea.vmem %s121, 24 [#allocation1]
        %v481 = vld [vmem:[%s480] sm:$0xff]
        %v482 = vmul.f32 %v481, %v432
        %483 = vadd.xlane.f32.xlu0 %v482
        %v484 = vpop.xlane.xlu0 %483
        %v485 = vsub.f32 %v479, %v484
        %v486 = vmul.f32 %v485, %v439
        %v487 = vsel %vm430, %v486, 0.0
        %v488 = vadd.f32 %v481, %v487
        %s489 = scalar_lea.vmem %s121, 24 [#allocation1]
        %490 = vst [vmem:[%s489] sm:$0xff] %v488
        %vm491 = vcmask 56368
        %s492 = scalar_lea.vmem %s121, 6 [#allocation1]
        %v493 = vld [vmem:[%s492] ss:$0 sm:$0xff]
        %s494 = scalar_lea.vmem %s113, 6 [#allocation0]
        %v495 = vld [vmem:[%s494] ss:$0 sm:$0xff]
        %v496 = vmul.f32 %v493, %v493
        %497 = vadd.xlane.f32.xlu0 %v496
        %v498 = vpop.xlane.xlu0 %497
        %v499 = vsub.f32 %v495, %v498
        %v500 = vrsqrt.pop %v499
        %v501 = vld [vmem:[%s113] sm:$0xff]
        %v502 = vld [vmem:[%s121] sm:$0xff]
        %v503 = vmul.f32 %v502, %v493
        %504 = vadd.xlane.f32.xlu0 %v503
        %v505 = vpop.xlane.xlu0 %504
        %v506 = vsub.f32 %v501, %v505
        %v507 = vmul.f32 %v506, %v500
        %vm508 = vcmask 1047558
        %vm509 = vmand %vm491, %vm508
        %v510 = vsel %vm509, %v507, 0.0
        %v511 = vadd.f32 %v502, %v510
        %512 = vst [vmem:[%s121] sm:$0xff] %v511
        %s513 = scalar_lea.vmem %s113, 8 [#allocation0]
        %v514 = vld [vmem:[%s513] sm:$0xff]
        %s515 = scalar_lea.vmem %s121, 8 [#allocation1]
        %v516 = vld [vmem:[%s515] sm:$0xff]
        %v517 = vmul.f32 %v516, %v493
        %518 = vadd.xlane.f32.xlu0 %v517
        %v519 = vpop.xlane.xlu0 %518
        %v520 = vsub.f32 %v514, %v519
        %v521 = vmul.f32 %v520, %v500
        %v522 = vsel %vm491, %v521, 0.0
        %v523 = vadd.f32 %v516, %v522
        %s524 = scalar_lea.vmem %s121, 8 [#allocation1]
        %525 = vst [vmem:[%s524] sm:$0xff] %v523
        %s526 = scalar_lea.vmem %s113, 16 [#allocation0]
        %v527 = vld [vmem:[%s526] sm:$0xff]
        %s528 = scalar_lea.vmem %s121, 16 [#allocation1]
        %v529 = vld [vmem:[%s528] sm:$0xff]
        %v530 = vmul.f32 %v529, %v493
        %531 = vadd.xlane.f32.xlu0 %v530
        %v532 = vpop.xlane.xlu0 %531
        %v533 = vsub.f32 %v527, %v532
        %v534 = vmul.f32 %v533, %v500
        %v535 = vsel %vm491, %v534, 0.0
        %v536 = vadd.f32 %v529, %v535
        %s537 = scalar_lea.vmem %s121, 16 [#allocation1]
        %538 = vst [vmem:[%s537] sm:$0xff] %v536
        %s539 = scalar_lea.vmem %s113, 24 [#allocation0]
        %v540 = vld [vmem:[%s539] sm:$0xff]
        %s541 = scalar_lea.vmem %s121, 24 [#allocation1]
        %v542 = vld [vmem:[%s541] sm:$0xff]
        %v543 = vmul.f32 %v542, %v493
        %544 = vadd.xlane.f32.xlu0 %v543
        %v545 = vpop.xlane.xlu0 %544
        %v546 = vsub.f32 %v540, %v545
        %v547 = vmul.f32 %v546, %v500
        %v548 = vsel %vm491, %v547, 0.0
        %v549 = vadd.f32 %v542, %v548
        %s550 = scalar_lea.vmem %s121, 24 [#allocation1]
        %551 = vst [vmem:[%s550] sm:$0xff] %v549
        %vm552 = vcmask 64568
        %s553 = scalar_lea.vmem %s121, 7 [#allocation1]
        %v554 = vld [vmem:[%s553] ss:$0 sm:$0xff]
        %s555 = scalar_lea.vmem %s113, 7 [#allocation0]
        %v556 = vld [vmem:[%s555] ss:$0 sm:$0xff]
        %v557 = vmul.f32 %v554, %v554
        %558 = vadd.xlane.f32.xlu0 %v557
        %v559 = vpop.xlane.xlu0 %558
        %v560 = vsub.f32 %v556, %v559
        %v561 = vrsqrt.pop %v560
        %v562 = vld [vmem:[%s113] sm:$0xff]
        %v563 = vld [vmem:[%s121] sm:$0xff]
        %v564 = vmul.f32 %v563, %v554
        %565 = vadd.xlane.f32.xlu0 %v564
        %v566 = vpop.xlane.xlu0 %565
        %v567 = vsub.f32 %v562, %v566
        %v568 = vmul.f32 %v567, %v561
        %vm569 = vcmask 1047559
        %vm570 = vmand %vm552, %vm569
        %v571 = vsel %vm570, %v568, 0.0
        %v572 = vadd.f32 %v563, %v571
        %573 = vst [vmem:[%s121] sm:$0xff] %v572
        %s574 = scalar_lea.vmem %s113, 8 [#allocation0]
        %v575 = vld [vmem:[%s574] sm:$0xff]
        %s576 = scalar_lea.vmem %s121, 8 [#allocation1]
        %v577 = vld [vmem:[%s576] sm:$0xff]
        %v578 = vmul.f32 %v577, %v554
        %579 = vadd.xlane.f32.xlu0 %v578
        %v580 = vpop.xlane.xlu0 %579
        %v581 = vsub.f32 %v575, %v580
        %v582 = vmul.f32 %v581, %v561
        %v583 = vsel %vm552, %v582, 0.0
        %v584 = vadd.f32 %v577, %v583
        %s585 = scalar_lea.vmem %s121, 8 [#allocation1]
        %586 = vst [vmem:[%s585] sm:$0xff] %v584
        %s587 = scalar_lea.vmem %s113, 16 [#allocation0]
        %v588 = vld [vmem:[%s587] sm:$0xff]
        %s589 = scalar_lea.vmem %s121, 16 [#allocation1]
        %v590 = vld [vmem:[%s589] sm:$0xff]
        %v591 = vmul.f32 %v590, %v554
        %592 = vadd.xlane.f32.xlu0 %v591
        %v593 = vpop.xlane.xlu0 %592
        %v594 = vsub.f32 %v588, %v593
        %v595 = vmul.f32 %v594, %v561
        %v596 = vsel %vm552, %v595, 0.0
        %v597 = vadd.f32 %v590, %v596
        %s598 = scalar_lea.vmem %s121, 16 [#allocation1]
        %599 = vst [vmem:[%s598] sm:$0xff] %v597
        %s600 = scalar_lea.vmem %s113, 24 [#allocation0]
        %v601 = vld [vmem:[%s600] sm:$0xff]
        %s602 = scalar_lea.vmem %s121, 24 [#allocation1]
        %v603 = vld [vmem:[%s602] sm:$0xff]
        %v604 = vmul.f32 %v603, %v554
        %605 = vadd.xlane.f32.xlu0 %v604
        %v606 = vpop.xlane.xlu0 %605
        %v607 = vsub.f32 %v601, %v606
        %v608 = vmul.f32 %v607, %v561
        %v609 = vsel %vm552, %v608, 0.0
        %v610 = vadd.f32 %v603, %v609
        %s611 = scalar_lea.vmem %s121, 24 [#allocation1]
        %612 = vst [vmem:[%s611] sm:$0xff] %v610
        %vm613 = vcmask 72768
        %s614 = scalar_lea.vmem %s121, 8 [#allocation1]
        %v615 = vld [vmem:[%s614] ss:$0 sm:$0xff]
        %s616 = scalar_lea.vmem %s113, 8 [#allocation0]
        %v617 = vld [vmem:[%s616] ss:$0 sm:$0xff]
        %v618 = vmul.f32 %v615, %v615
        %619 = vadd.xlane.f32.xlu0 %v618
        %v620 = vpop.xlane.xlu0 %619
        %v621 = vsub.f32 %v617, %v620
        %v622 = vrsqrt.pop %v621
        %s623 = scalar_lea.vmem %s113, 8 [#allocation0]
        %v624 = vld [vmem:[%s623] sm:$0xff]
        %s625 = scalar_lea.vmem %s121, 8 [#allocation1]
        %v626 = vld [vmem:[%s625] sm:$0xff]
        %v627 = vmul.f32 %v626, %v615
        %628 = vadd.xlane.f32.xlu0 %v627
        %v629 = vpop.xlane.xlu0 %628
        %v630 = vsub.f32 %v624, %v629
        %v631 = vmul.f32 %v630, %v622
        %v632 = vsel %vm613, %v631, 0.0
        %v633 = vadd.f32 %v626, %v632
        %s634 = scalar_lea.vmem %s121, 8 [#allocation1]
        %635 = vst [vmem:[%s634] sm:$0xff] %v633
        %s636 = scalar_lea.vmem %s113, 16 [#allocation0]
        %v637 = vld [vmem:[%s636] sm:$0xff]
        %s638 = scalar_lea.vmem %s121, 16 [#allocation1]
        %v639 = vld [vmem:[%s638] sm:$0xff]
        %v640 = vmul.f32 %v639, %v615
        %641 = vadd.xlane.f32.xlu0 %v640
        %v642 = vpop.xlane.xlu0 %641
        %v643 = vsub.f32 %v637, %v642
        %v644 = vmul.f32 %v643, %v622
        %v645 = vsel %vm613, %v644, 0.0
        %v646 = vadd.f32 %v639, %v645
        %s647 = scalar_lea.vmem %s121, 16 [#allocation1]
        %648 = vst [vmem:[%s647] sm:$0xff] %v646
        %s649 = scalar_lea.vmem %s113, 24 [#allocation0]
        %v650 = vld [vmem:[%s649] sm:$0xff]
        %s651 = scalar_lea.vmem %s121, 24 [#allocation1]
        %v652 = vld [vmem:[%s651] sm:$0xff]
        %v653 = vmul.f32 %v652, %v615
        %654 = vadd.xlane.f32.xlu0 %v653
        %v655 = vpop.xlane.xlu0 %654
        %v656 = vsub.f32 %v650, %v655
        %v657 = vmul.f32 %v656, %v622
        %v658 = vsel %vm613, %v657, 0.0
        %v659 = vadd.f32 %v652, %v658
        %s660 = scalar_lea.vmem %s121, 24 [#allocation1]
        %661 = vst [vmem:[%s660] sm:$0xff] %v659
        %vm662 = vcmask 80968
        %s663 = scalar_lea.vmem %s121, 9 [#allocation1]
        %v664 = vld [vmem:[%s663] ss:$0 sm:$0xff]
        %s665 = scalar_lea.vmem %s113, 9 [#allocation0]
        %v666 = vld [vmem:[%s665] ss:$0 sm:$0xff]
        %v667 = vmul.f32 %v664, %v664
        %668 = vadd.xlane.f32.xlu0 %v667
        %v669 = vpop.xlane.xlu0 %668
        %v670 = vsub.f32 %v666, %v669
        %v671 = vrsqrt.pop %v670
        %s672 = scalar_lea.vmem %s113, 8 [#allocation0]
        %v673 = vld [vmem:[%s672] sm:$0xff]
        %s674 = scalar_lea.vmem %s121, 8 [#allocation1]
        %v675 = vld [vmem:[%s674] sm:$0xff]
        %v676 = vmul.f32 %v675, %v664
        %677 = vadd.xlane.f32.xlu0 %v676
        %v678 = vpop.xlane.xlu0 %677
        %v679 = vsub.f32 %v673, %v678
        %v680 = vmul.f32 %v679, %v671
        %vm681 = vcmask 1047553
        %vm682 = vmand %vm662, %vm681
        %v683 = vsel %vm682, %v680, 0.0
        %v684 = vadd.f32 %v675, %v683
        %s685 = scalar_lea.vmem %s121, 8 [#allocation1]
        %686 = vst [vmem:[%s685] sm:$0xff] %v684
        %s687 = scalar_lea.vmem %s113, 16 [#allocation0]
        %v688 = vld [vmem:[%s687] sm:$0xff]
        %s689 = scalar_lea.vmem %s121, 16 [#allocation1]
        %v690 = vld [vmem:[%s689] sm:$0xff]
        %v691 = vmul.f32 %v690, %v664
        %692 = vadd.xlane.f32.xlu0 %v691
        %v693 = vpop.xlane.xlu0 %692
        %v694 = vsub.f32 %v688, %v693
        %v695 = vmul.f32 %v694, %v671
        %v696 = vsel %vm662, %v695, 0.0
        %v697 = vadd.f32 %v690, %v696
        %s698 = scalar_lea.vmem %s121, 16 [#allocation1]
        %699 = vst [vmem:[%s698] sm:$0xff] %v697
        %s700 = scalar_lea.vmem %s113, 24 [#allocation0]
        %v701 = vld [vmem:[%s700] sm:$0xff]
        %s702 = scalar_lea.vmem %s121, 24 [#allocation1]
        %v703 = vld [vmem:[%s702] sm:$0xff]
        %v704 = vmul.f32 %v703, %v664
        %705 = vadd.xlane.f32.xlu0 %v704
        %v706 = vpop.xlane.xlu0 %705
        %v707 = vsub.f32 %v701, %v706
        %v708 = vmul.f32 %v707, %v671
        %v709 = vsel %vm662, %v708, 0.0
        %v710 = vadd.f32 %v703, %v709
        %s711 = scalar_lea.vmem %s121, 24 [#allocation1]
        %712 = vst [vmem:[%s711] sm:$0xff] %v710
        %vm713 = vcmask 89168
        %s714 = scalar_lea.vmem %s121, 10 [#allocation1]
        %v715 = vld [vmem:[%s714] ss:$0 sm:$0xff]
        %s716 = scalar_lea.vmem %s113, 10 [#allocation0]
        %v717 = vld [vmem:[%s716] ss:$0 sm:$0xff]
        %v718 = vmul.f32 %v715, %v715
        %719 = vadd.xlane.f32.xlu0 %v718
        %v720 = vpop.xlane.xlu0 %719
        %v721 = vsub.f32 %v717, %v720
        %v722 = vrsqrt.pop %v721
        %s723 = scalar_lea.vmem %s113, 8 [#allocation0]
        %v724 = vld [vmem:[%s723] sm:$0xff]
        %s725 = scalar_lea.vmem %s121, 8 [#allocation1]
        %v726 = vld [vmem:[%s725] sm:$0xff]
        %v727 = vmul.f32 %v726, %v715
        %728 = vadd.xlane.f32.xlu0 %v727
        %v729 = vpop.xlane.xlu0 %728
        %v730 = vsub.f32 %v724, %v729
        %v731 = vmul.f32 %v730, %v722
        %vm732 = vcmask 1047554
        %vm733 = vmand %vm713, %vm732
        %v734 = vsel %vm733, %v731, 0.0
        %v735 = vadd.f32 %v726, %v734
        %s736 = scalar_lea.vmem %s121, 8 [#allocation1]
        %737 = vst [vmem:[%s736] sm:$0xff] %v735
        %s738 = scalar_lea.vmem %s113, 16 [#allocation0]
        %v739 = vld [vmem:[%s738] sm:$0xff]
        %s740 = scalar_lea.vmem %s121, 16 [#allocation1]
        %v741 = vld [vmem:[%s740] sm:$0xff]
        %v742 = vmul.f32 %v741, %v715
        %743 = vadd.xlane.f32.xlu0 %v742
        %v744 = vpop.xlane.xlu0 %743
        %v745 = vsub.f32 %v739, %v744
        %v746 = vmul.f32 %v745, %v722
        %v747 = vsel %vm713, %v746, 0.0
        %v748 = vadd.f32 %v741, %v747
        %s749 = scalar_lea.vmem %s121, 16 [#allocation1]
        %750 = vst [vmem:[%s749] sm:$0xff] %v748
        %s751 = scalar_lea.vmem %s113, 24 [#allocation0]
        %v752 = vld [vmem:[%s751] sm:$0xff]
        %s753 = scalar_lea.vmem %s121, 24 [#allocation1]
        %v754 = vld [vmem:[%s753] sm:$0xff]
        %v755 = vmul.f32 %v754, %v715
        %756 = vadd.xlane.f32.xlu0 %v755
        %v757 = vpop.xlane.xlu0 %756
        %v758 = vsub.f32 %v752, %v757
        %v759 = vmul.f32 %v758, %v722
        %v760 = vsel %vm713, %v759, 0.0
        %v761 = vadd.f32 %v754, %v760
        %s762 = scalar_lea.vmem %s121, 24 [#allocation1]
        %763 = vst [vmem:[%s762] sm:$0xff] %v761
        %vm764 = vcmask 97368
        %s765 = scalar_lea.vmem %s121, 11 [#allocation1]
        %v766 = vld [vmem:[%s765] ss:$0 sm:$0xff]
        %s767 = scalar_lea.vmem %s113, 11 [#allocation0]
        %v768 = vld [vmem:[%s767] ss:$0 sm:$0xff]
        %v769 = vmul.f32 %v766, %v766
        %770 = vadd.xlane.f32.xlu0 %v769
        %v771 = vpop.xlane.xlu0 %770
        %v772 = vsub.f32 %v768, %v771
        %v773 = vrsqrt.pop %v772
        %s774 = scalar_lea.vmem %s113, 8 [#allocation0]
        %v775 = vld [vmem:[%s774] sm:$0xff]
        %s776 = scalar_lea.vmem %s121, 8 [#allocation1]
        %v777 = vld [vmem:[%s776] sm:$0xff]
        %v778 = vmul.f32 %v777, %v766
        %779 = vadd.xlane.f32.xlu0 %v778
        %v780 = vpop.xlane.xlu0 %779
        %v781 = vsub.f32 %v775, %v780
        %v782 = vmul.f32 %v781, %v773
        %vm783 = vcmask 1047555
        %vm784 = vmand %vm764, %vm783
        %v785 = vsel %vm784, %v782, 0.0
        %v786 = vadd.f32 %v777, %v785
        %s787 = scalar_lea.vmem %s121, 8 [#allocation1]
        %788 = vst [vmem:[%s787] sm:$0xff] %v786
        %s789 = scalar_lea.vmem %s113, 16 [#allocation0]
        %v790 = vld [vmem:[%s789] sm:$0xff]
        %s791 = scalar_lea.vmem %s121, 16 [#allocation1]
        %v792 = vld [vmem:[%s791] sm:$0xff]
        %v793 = vmul.f32 %v792, %v766
        %794 = vadd.xlane.f32.xlu0 %v793
        %v795 = vpop.xlane.xlu0 %794
        %v796 = vsub.f32 %v790, %v795
        %v797 = vmul.f32 %v796, %v773
        %v798 = vsel %vm764, %v797, 0.0
        %v799 = vadd.f32 %v792, %v798
        %s800 = scalar_lea.vmem %s121, 16 [#allocation1]
        %801 = vst [vmem:[%s800] sm:$0xff] %v799
        %s802 = scalar_lea.vmem %s113, 24 [#allocation0]
        %v803 = vld [vmem:[%s802] sm:$0xff]
        %s804 = scalar_lea.vmem %s121, 24 [#allocation1]
        %v805 = vld [vmem:[%s804] sm:$0xff]
        %v806 = vmul.f32 %v805, %v766
        %807 = vadd.xlane.f32.xlu0 %v806
        %v808 = vpop.xlane.xlu0 %807
        %v809 = vsub.f32 %v803, %v808
        %v810 = vmul.f32 %v809, %v773
        %v811 = vsel %vm764, %v810, 0.0
        %v812 = vadd.f32 %v805, %v811
        %s813 = scalar_lea.vmem %s121, 24 [#allocation1]
        %814 = vst [vmem:[%s813] sm:$0xff] %v812
        %vm815 = vcmask 105568
        %s816 = scalar_lea.vmem %s121, 12 [#allocation1]
        %v817 = vld [vmem:[%s816] ss:$0 sm:$0xff]
        %s818 = scalar_lea.vmem %s113, 12 [#allocation0]
        %v819 = vld [vmem:[%s818] ss:$0 sm:$0xff]
        %v820 = vmul.f32 %v817, %v817
        %821 = vadd.xlane.f32.xlu0 %v820
        %v822 = vpop.xlane.xlu0 %821
        %v823 = vsub.f32 %v819, %v822
        %v824 = vrsqrt.pop %v823
        %s825 = scalar_lea.vmem %s113, 8 [#allocation0]
        %v826 = vld [vmem:[%s825] sm:$0xff]
        %s827 = scalar_lea.vmem %s121, 8 [#allocation1]
        %v828 = vld [vmem:[%s827] sm:$0xff]
        %v829 = vmul.f32 %v828, %v817
        %830 = vadd.xlane.f32.xlu0 %v829
        %v831 = vpop.xlane.xlu0 %830
        %v832 = vsub.f32 %v826, %v831
        %v833 = vmul.f32 %v832, %v824
        %vm834 = vcmask 1047556
        %vm835 = vmand %vm815, %vm834
        %v836 = vsel %vm835, %v833, 0.0
        %v837 = vadd.f32 %v828, %v836
        %s838 = scalar_lea.vmem %s121, 8 [#allocation1]
        %839 = vst [vmem:[%s838] sm:$0xff] %v837
        %s840 = scalar_lea.vmem %s113, 16 [#allocation0]
        %v841 = vld [vmem:[%s840] sm:$0xff]
        %s842 = scalar_lea.vmem %s121, 16 [#allocation1]
        %v843 = vld [vmem:[%s842] sm:$0xff]
        %v844 = vmul.f32 %v843, %v817
        %845 = vadd.xlane.f32.xlu0 %v844
        %v846 = vpop.xlane.xlu0 %845
        %v847 = vsub.f32 %v841, %v846
        %v848 = vmul.f32 %v847, %v824
        %v849 = vsel %vm815, %v848, 0.0
        %v850 = vadd.f32 %v843, %v849
        %s851 = scalar_lea.vmem %s121, 16 [#allocation1]
        %852 = vst [vmem:[%s851] sm:$0xff] %v850
        %s853 = scalar_lea.vmem %s113, 24 [#allocation0]
        %v854 = vld [vmem:[%s853] sm:$0xff]
        %s855 = scalar_lea.vmem %s121, 24 [#allocation1]
        %v856 = vld [vmem:[%s855] sm:$0xff]
        %v857 = vmul.f32 %v856, %v817
        %858 = vadd.xlane.f32.xlu0 %v857
        %v859 = vpop.xlane.xlu0 %858
        %v860 = vsub.f32 %v854, %v859
        %v861 = vmul.f32 %v860, %v824
        %v862 = vsel %vm815, %v861, 0.0
        %v863 = vadd.f32 %v856, %v862
        %s864 = scalar_lea.vmem %s121, 24 [#allocation1]
        %865 = vst [vmem:[%s864] sm:$0xff] %v863
        %vm866 = vcmask 113768
        %s867 = scalar_lea.vmem %s121, 13 [#allocation1]
        %v868 = vld [vmem:[%s867] ss:$0 sm:$0xff]
        %s869 = scalar_lea.vmem %s113, 13 [#allocation0]
        %v870 = vld [vmem:[%s869] ss:$0 sm:$0xff]
        %v871 = vmul.f32 %v868, %v868
        %872 = vadd.xlane.f32.xlu0 %v871
        %v873 = vpop.xlane.xlu0 %872
        %v874 = vsub.f32 %v870, %v873
        %v875 = vrsqrt.pop %v874
        %s876 = scalar_lea.vmem %s113, 8 [#allocation0]
        %v877 = vld [vmem:[%s876] sm:$0xff]
        %s878 = scalar_lea.vmem %s121, 8 [#allocation1]
        %v879 = vld [vmem:[%s878] sm:$0xff]
        %v880 = vmul.f32 %v879, %v868
        %881 = vadd.xlane.f32.xlu0 %v880
        %v882 = vpop.xlane.xlu0 %881
        %v883 = vsub.f32 %v877, %v882
        %v884 = vmul.f32 %v883, %v875
        %vm885 = vcmask 1047557
        %vm886 = vmand %vm866, %vm885
        %v887 = vsel %vm886, %v884, 0.0
        %v888 = vadd.f32 %v879, %v887
        %s889 = scalar_lea.vmem %s121, 8 [#allocation1]
        %890 = vst [vmem:[%s889] sm:$0xff] %v888
        %s891 = scalar_lea.vmem %s113, 16 [#allocation0]
        %v892 = vld [vmem:[%s891] sm:$0xff]
        %s893 = scalar_lea.vmem %s121, 16 [#allocation1]
        %v894 = vld [vmem:[%s893] sm:$0xff]
        %v895 = vmul.f32 %v894, %v868
        %896 = vadd.xlane.f32.xlu0 %v895
        %v897 = vpop.xlane.xlu0 %896
        %v898 = vsub.f32 %v892, %v897
        %v899 = vmul.f32 %v898, %v875
        %v900 = vsel %vm866, %v899, 0.0
        %v901 = vadd.f32 %v894, %v900
        %s902 = scalar_lea.vmem %s121, 16 [#allocation1]
        %903 = vst [vmem:[%s902] sm:$0xff] %v901
        %s904 = scalar_lea.vmem %s113, 24 [#allocation0]
        %v905 = vld [vmem:[%s904] sm:$0xff]
        %s906 = scalar_lea.vmem %s121, 24 [#allocation1]
        %v907 = vld [vmem:[%s906] sm:$0xff]
        %v908 = vmul.f32 %v907, %v868
        %909 = vadd.xlane.f32.xlu0 %v908
        %v910 = vpop.xlane.xlu0 %909
        %v911 = vsub.f32 %v905, %v910
        %v912 = vmul.f32 %v911, %v875
        %v913 = vsel %vm866, %v912, 0.0
        %v914 = vadd.f32 %v907, %v913
        %s915 = scalar_lea.vmem %s121, 24 [#allocation1]
        %916 = vst [vmem:[%s915] sm:$0xff] %v914
        %vm917 = vcmask 121968
        %s918 = scalar_lea.vmem %s121, 14 [#allocation1]
        %v919 = vld [vmem:[%s918] ss:$0 sm:$0xff]
        %s920 = scalar_lea.vmem %s113, 14 [#allocation0]
        %v921 = vld [vmem:[%s920] ss:$0 sm:$0xff]
        %v922 = vmul.f32 %v919, %v919
        %923 = vadd.xlane.f32.xlu0 %v922
        %v924 = vpop.xlane.xlu0 %923
        %v925 = vsub.f32 %v921, %v924
        %v926 = vrsqrt.pop %v925
        %s927 = scalar_lea.vmem %s113, 8 [#allocation0]
        %v928 = vld [vmem:[%s927] sm:$0xff]
        %s929 = scalar_lea.vmem %s121, 8 [#allocation1]
        %v930 = vld [vmem:[%s929] sm:$0xff]
        %v931 = vmul.f32 %v930, %v919
        %932 = vadd.xlane.f32.xlu0 %v931
        %v933 = vpop.xlane.xlu0 %932
        %v934 = vsub.f32 %v928, %v933
        %v935 = vmul.f32 %v934, %v926
        %vm936 = vcmask 1047558
        %vm937 = vmand %vm917, %vm936
        %v938 = vsel %vm937, %v935, 0.0
        %v939 = vadd.f32 %v930, %v938
        %s940 = scalar_lea.vmem %s121, 8 [#allocation1]
        %941 = vst [vmem:[%s940] sm:$0xff] %v939
        %s942 = scalar_lea.vmem %s113, 16 [#allocation0]
        %v943 = vld [vmem:[%s942] sm:$0xff]
        %s944 = scalar_lea.vmem %s121, 16 [#allocation1]
        %v945 = vld [vmem:[%s944] sm:$0xff]
        %v946 = vmul.f32 %v945, %v919
        %947 = vadd.xlane.f32.xlu0 %v946
        %v948 = vpop.xlane.xlu0 %947
        %v949 = vsub.f32 %v943, %v948
        %v950 = vmul.f32 %v949, %v926
        %v951 = vsel %vm917, %v950, 0.0
        %v952 = vadd.f32 %v945, %v951
        %s953 = scalar_lea.vmem %s121, 16 [#allocation1]
        %954 = vst [vmem:[%s953] sm:$0xff] %v952
        %s955 = scalar_lea.vmem %s113, 24 [#allocation0]
        %v956 = vld [vmem:[%s955] sm:$0xff]
        %s957 = scalar_lea.vmem %s121, 24 [#allocation1]
        %v958 = vld [vmem:[%s957] sm:$0xff]
        %v959 = vmul.f32 %v958, %v919
        %960 = vadd.xlane.f32.xlu0 %v959
        %v961 = vpop.xlane.xlu0 %960
        %v962 = vsub.f32 %v956, %v961
        %v963 = vmul.f32 %v962, %v926
        %v964 = vsel %vm917, %v963, 0.0
        %v965 = vadd.f32 %v958, %v964
        %s966 = scalar_lea.vmem %s121, 24 [#allocation1]
        %967 = vst [vmem:[%s966] sm:$0xff] %v965
        %vm968 = vcmask 130168
        %s969 = scalar_lea.vmem %s121, 15 [#allocation1]
        %v970 = vld [vmem:[%s969] ss:$0 sm:$0xff]
        %s971 = scalar_lea.vmem %s113, 15 [#allocation0]
        %v972 = vld [vmem:[%s971] ss:$0 sm:$0xff]
        %v973 = vmul.f32 %v970, %v970
        %974 = vadd.xlane.f32.xlu0 %v973
        %v975 = vpop.xlane.xlu0 %974
        %v976 = vsub.f32 %v972, %v975
        %v977 = vrsqrt.pop %v976
        %s978 = scalar_lea.vmem %s113, 8 [#allocation0]
        %v979 = vld [vmem:[%s978] sm:$0xff]
        %s980 = scalar_lea.vmem %s121, 8 [#allocation1]
        %v981 = vld [vmem:[%s980] sm:$0xff]
        %v982 = vmul.f32 %v981, %v970
        %983 = vadd.xlane.f32.xlu0 %v982
        %v984 = vpop.xlane.xlu0 %983
        %v985 = vsub.f32 %v979, %v984
        %v986 = vmul.f32 %v985, %v977
        %vm987 = vcmask 1047559
        %vm988 = vmand %vm968, %vm987
        %v989 = vsel %vm988, %v986, 0.0
        %v990 = vadd.f32 %v981, %v989
        %s991 = scalar_lea.vmem %s121, 8 [#allocation1]
        %992 = vst [vmem:[%s991] sm:$0xff] %v990
        %s993 = scalar_lea.vmem %s113, 16 [#allocation0]
        %v994 = vld [vmem:[%s993] sm:$0xff]
        %s995 = scalar_lea.vmem %s121, 16 [#allocation1]
        %v996 = vld [vmem:[%s995] sm:$0xff]
        %v997 = vmul.f32 %v996, %v970
        %998 = vadd.xlane.f32.xlu0 %v997
        %v999 = vpop.xlane.xlu0 %998
        %v1000 = vsub.f32 %v994, %v999
        %v1001 = vmul.f32 %v1000, %v977
        %v1002 = vsel %vm968, %v1001, 0.0
        %v1003 = vadd.f32 %v996, %v1002
        %s1004 = scalar_lea.vmem %s121, 16 [#allocation1]
        %1005 = vst [vmem:[%s1004] sm:$0xff] %v1003
        %s1006 = scalar_lea.vmem %s113, 24 [#allocation0]
        %v1007 = vld [vmem:[%s1006] sm:$0xff]
        %s1008 = scalar_lea.vmem %s121, 24 [#allocation1]
        %v1009 = vld [vmem:[%s1008] sm:$0xff]
        %v1010 = vmul.f32 %v1009, %v970
        %1011 = vadd.xlane.f32.xlu0 %v1010
        %v1012 = vpop.xlane.xlu0 %1011
        %v1013 = vsub.f32 %v1007, %v1012
        %v1014 = vmul.f32 %v1013, %v977
        %v1015 = vsel %vm968, %v1014, 0.0
        %v1016 = vadd.f32 %v1009, %v1015
        %s1017 = scalar_lea.vmem %s121, 24 [#allocation1]
        %1018 = vst [vmem:[%s1017] sm:$0xff] %v1016
        %vm1019 = vcmask 138368
        %s1020 = scalar_lea.vmem %s121, 16 [#allocation1]
        %v1021 = vld [vmem:[%s1020] ss:$0 sm:$0xff]
        %s1022 = scalar_lea.vmem %s113, 16 [#allocation0]
        %v1023 = vld [vmem:[%s1022] ss:$0 sm:$0xff]
        %v1024 = vmul.f32 %v1021, %v1021
        %1025 = vadd.xlane.f32.xlu0 %v1024
        %v1026 = vpop.xlane.xlu0 %1025
        %v1027 = vsub.f32 %v1023, %v1026
        %v1028 = vrsqrt.pop %v1027
        %s1029 = scalar_lea.vmem %s113, 16 [#allocation0]
        %v1030 = vld [vmem:[%s1029] sm:$0xff]
        %s1031 = scalar_lea.vmem %s121, 16 [#allocation1]
        %v1032 = vld [vmem:[%s1031] sm:$0xff]
        %v1033 = vmul.f32 %v1032, %v1021
        %1034 = vadd.xlane.f32.xlu0 %v1033
        %v1035 = vpop.xlane.xlu0 %1034
        %v1036 = vsub.f32 %v1030, %v1035
        %v1037 = vmul.f32 %v1036, %v1028
        %v1038 = vsel %vm1019, %v1037, 0.0
        %v1039 = vadd.f32 %v1032, %v1038
        %s1040 = scalar_lea.vmem %s121, 16 [#allocation1]
        %1041 = vst [vmem:[%s1040] sm:$0xff] %v1039
        %s1042 = scalar_lea.vmem %s113, 24 [#allocation0]
        %v1043 = vld [vmem:[%s1042] sm:$0xff]
        %s1044 = scalar_lea.vmem %s121, 24 [#allocation1]
        %v1045 = vld [vmem:[%s1044] sm:$0xff]
        %v1046 = vmul.f32 %v1045, %v1021
        %1047 = vadd.xlane.f32.xlu0 %v1046
        %v1048 = vpop.xlane.xlu0 %1047
        %v1049 = vsub.f32 %v1043, %v1048
        %v1050 = vmul.f32 %v1049, %v1028
        %v1051 = vsel %vm1019, %v1050, 0.0
        %v1052 = vadd.f32 %v1045, %v1051
        %s1053 = scalar_lea.vmem %s121, 24 [#allocation1]
        %1054 = vst [vmem:[%s1053] sm:$0xff] %v1052
        %vm1055 = vcmask 146568
        %s1056 = scalar_lea.vmem %s121, 17 [#allocation1]
        %v1057 = vld [vmem:[%s1056] ss:$0 sm:$0xff]
        %s1058 = scalar_lea.vmem %s113, 17 [#allocation0]
        %v1059 = vld [vmem:[%s1058] ss:$0 sm:$0xff]
        %v1060 = vmul.f32 %v1057, %v1057
        %1061 = vadd.xlane.f32.xlu0 %v1060
        %v1062 = vpop.xlane.xlu0 %1061
        %v1063 = vsub.f32 %v1059, %v1062
        %v1064 = vrsqrt.pop %v1063
        %s1065 = scalar_lea.vmem %s113, 16 [#allocation0]
        %v1066 = vld [vmem:[%s1065] sm:$0xff]
        %s1067 = scalar_lea.vmem %s121, 16 [#allocation1]
        %v1068 = vld [vmem:[%s1067] sm:$0xff]
        %v1069 = vmul.f32 %v1068, %v1057
        %1070 = vadd.xlane.f32.xlu0 %v1069
        %v1071 = vpop.xlane.xlu0 %1070
        %v1072 = vsub.f32 %v1066, %v1071
        %v1073 = vmul.f32 %v1072, %v1064
        %vm1074 = vcmask 1047553
        %vm1075 = vmand %vm1055, %vm1074
        %v1076 = vsel %vm1075, %v1073, 0.0
        %v1077 = vadd.f32 %v1068, %v1076
        %s1078 = scalar_lea.vmem %s121, 16 [#allocation1]
        %1079 = vst [vmem:[%s1078] sm:$0xff] %v1077
        %s1080 = scalar_lea.vmem %s113, 24 [#allocation0]
        %v1081 = vld [vmem:[%s1080] sm:$0xff]
        %s1082 = scalar_lea.vmem %s121, 24 [#allocation1]
        %v1083 = vld [vmem:[%s1082] sm:$0xff]
        %v1084 = vmul.f32 %v1083, %v1057
        %1085 = vadd.xlane.f32.xlu0 %v1084
        %v1086 = vpop.xlane.xlu0 %1085
        %v1087 = vsub.f32 %v1081, %v1086
        %v1088 = vmul.f32 %v1087, %v1064
        %v1089 = vsel %vm1055, %v1088, 0.0
        %v1090 = vadd.f32 %v1083, %v1089
        %s1091 = scalar_lea.vmem %s121, 24 [#allocation1]
        %1092 = vst [vmem:[%s1091] sm:$0xff] %v1090
        %vm1093 = vcmask 154768
        %s1094 = scalar_lea.vmem %s121, 18 [#allocation1]
        %v1095 = vld [vmem:[%s1094] ss:$0 sm:$0xff]
        %s1096 = scalar_lea.vmem %s113, 18 [#allocation0]
        %v1097 = vld [vmem:[%s1096] ss:$0 sm:$0xff]
        %v1098 = vmul.f32 %v1095, %v1095
        %1099 = vadd.xlane.f32.xlu0 %v1098
        %v1100 = vpop.xlane.xlu0 %1099
        %v1101 = vsub.f32 %v1097, %v1100
        %v1102 = vrsqrt.pop %v1101
        %s1103 = scalar_lea.vmem %s113, 16 [#allocation0]
        %v1104 = vld [vmem:[%s1103] sm:$0xff]
        %s1105 = scalar_lea.vmem %s121, 16 [#allocation1]
        %v1106 = vld [vmem:[%s1105] sm:$0xff]
        %v1107 = vmul.f32 %v1106, %v1095
        %1108 = vadd.xlane.f32.xlu0 %v1107
        %v1109 = vpop.xlane.xlu0 %1108
        %v1110 = vsub.f32 %v1104, %v1109
        %v1111 = vmul.f32 %v1110, %v1102
        %vm1112 = vcmask 1047554
        %vm1113 = vmand %vm1093, %vm1112
        %v1114 = vsel %vm1113, %v1111, 0.0
        %v1115 = vadd.f32 %v1106, %v1114
        %s1116 = scalar_lea.vmem %s121, 16 [#allocation1]
        %1117 = vst [vmem:[%s1116] sm:$0xff] %v1115
        %s1118 = scalar_lea.vmem %s113, 24 [#allocation0]
        %v1119 = vld [vmem:[%s1118] sm:$0xff]
        %s1120 = scalar_lea.vmem %s121, 24 [#allocation1]
        %v1121 = vld [vmem:[%s1120] sm:$0xff]
        %v1122 = vmul.f32 %v1121, %v1095
        %1123 = vadd.xlane.f32.xlu0 %v1122
        %v1124 = vpop.xlane.xlu0 %1123
        %v1125 = vsub.f32 %v1119, %v1124
        %v1126 = vmul.f32 %v1125, %v1102
        %v1127 = vsel %vm1093, %v1126, 0.0
        %v1128 = vadd.f32 %v1121, %v1127
        %s1129 = scalar_lea.vmem %s121, 24 [#allocation1]
        %1130 = vst [vmem:[%s1129] sm:$0xff] %v1128
        %vm1131 = vcmask 162968
        %s1132 = scalar_lea.vmem %s121, 19 [#allocation1]
        %v1133 = vld [vmem:[%s1132] ss:$0 sm:$0xff]
        %s1134 = scalar_lea.vmem %s113, 19 [#allocation0]
        %v1135 = vld [vmem:[%s1134] ss:$0 sm:$0xff]
        %v1136 = vmul.f32 %v1133, %v1133
        %1137 = vadd.xlane.f32.xlu0 %v1136
        %v1138 = vpop.xlane.xlu0 %1137
        %v1139 = vsub.f32 %v1135, %v1138
        %v1140 = vrsqrt.pop %v1139
        %s1141 = scalar_lea.vmem %s113, 16 [#allocation0]
        %v1142 = vld [vmem:[%s1141] sm:$0xff]
        %s1143 = scalar_lea.vmem %s121, 16 [#allocation1]
        %v1144 = vld [vmem:[%s1143] sm:$0xff]
        %v1145 = vmul.f32 %v1144, %v1133
        %1146 = vadd.xlane.f32.xlu0 %v1145
        %v1147 = vpop.xlane.xlu0 %1146
        %v1148 = vsub.f32 %v1142, %v1147
        %v1149 = vmul.f32 %v1148, %v1140
        %vm1150 = vcmask 1047555
        %vm1151 = vmand %vm1131, %vm1150
        %v1152 = vsel %vm1151, %v1149, 0.0
        %v1153 = vadd.f32 %v1144, %v1152
        %s1154 = scalar_lea.vmem %s121, 16 [#allocation1]
        %1155 = vst [vmem:[%s1154] sm:$0xff] %v1153
        %s1156 = scalar_lea.vmem %s113, 24 [#allocation0]
        %v1157 = vld [vmem:[%s1156] sm:$0xff]
        %s1158 = scalar_lea.vmem %s121, 24 [#allocation1]
        %v1159 = vld [vmem:[%s1158] sm:$0xff]
        %v1160 = vmul.f32 %v1159, %v1133
        %1161 = vadd.xlane.f32.xlu0 %v1160
        %v1162 = vpop.xlane.xlu0 %1161
        %v1163 = vsub.f32 %v1157, %v1162
        %v1164 = vmul.f32 %v1163, %v1140
        %v1165 = vsel %vm1131, %v1164, 0.0
        %v1166 = vadd.f32 %v1159, %v1165
        %s1167 = scalar_lea.vmem %s121, 24 [#allocation1]
        %1168 = vst [vmem:[%s1167] sm:$0xff] %v1166
        %vm1169 = vcmask 171168
        %s1170 = scalar_lea.vmem %s121, 20 [#allocation1]
        %v1171 = vld [vmem:[%s1170] ss:$0 sm:$0xff]
        %s1172 = scalar_lea.vmem %s113, 20 [#allocation0]
        %v1173 = vld [vmem:[%s1172] ss:$0 sm:$0xff]
        %v1174 = vmul.f32 %v1171, %v1171
        %1175 = vadd.xlane.f32.xlu0 %v1174
        %v1176 = vpop.xlane.xlu0 %1175
        %v1177 = vsub.f32 %v1173, %v1176
        %v1178 = vrsqrt.pop %v1177
        %s1179 = scalar_lea.vmem %s113, 16 [#allocation0]
        %v1180 = vld [vmem:[%s1179] sm:$0xff]
        %s1181 = scalar_lea.vmem %s121, 16 [#allocation1]
        %v1182 = vld [vmem:[%s1181] sm:$0xff]
        %v1183 = vmul.f32 %v1182, %v1171
        %1184 = vadd.xlane.f32.xlu0 %v1183
        %v1185 = vpop.xlane.xlu0 %1184
        %v1186 = vsub.f32 %v1180, %v1185
        %v1187 = vmul.f32 %v1186, %v1178
        %vm1188 = vcmask 1047556
        %vm1189 = vmand %vm1169, %vm1188
        %v1190 = vsel %vm1189, %v1187, 0.0
        %v1191 = vadd.f32 %v1182, %v1190
        %s1192 = scalar_lea.vmem %s121, 16 [#allocation1]
        %1193 = vst [vmem:[%s1192] sm:$0xff] %v1191
        %s1194 = scalar_lea.vmem %s113, 24 [#allocation0]
        %v1195 = vld [vmem:[%s1194] sm:$0xff]
        %s1196 = scalar_lea.vmem %s121, 24 [#allocation1]
        %v1197 = vld [vmem:[%s1196] sm:$0xff]
        %v1198 = vmul.f32 %v1197, %v1171
        %1199 = vadd.xlane.f32.xlu0 %v1198
        %v1200 = vpop.xlane.xlu0 %1199
        %v1201 = vsub.f32 %v1195, %v1200
        %v1202 = vmul.f32 %v1201, %v1178
        %v1203 = vsel %vm1169, %v1202, 0.0
        %v1204 = vadd.f32 %v1197, %v1203
        %s1205 = scalar_lea.vmem %s121, 24 [#allocation1]
        %1206 = vst [vmem:[%s1205] sm:$0xff] %v1204
        %vm1207 = vcmask 179368
        %s1208 = scalar_lea.vmem %s121, 21 [#allocation1]
        %v1209 = vld [vmem:[%s1208] ss:$0 sm:$0xff]
        %s1210 = scalar_lea.vmem %s113, 21 [#allocation0]
        %v1211 = vld [vmem:[%s1210] ss:$0 sm:$0xff]
        %v1212 = vmul.f32 %v1209, %v1209
        %1213 = vadd.xlane.f32.xlu0 %v1212
        %v1214 = vpop.xlane.xlu0 %1213
        %v1215 = vsub.f32 %v1211, %v1214
        %v1216 = vrsqrt.pop %v1215
        %s1217 = scalar_lea.vmem %s113, 16 [#allocation0]
        %v1218 = vld [vmem:[%s1217] sm:$0xff]
        %s1219 = scalar_lea.vmem %s121, 16 [#allocation1]
        %v1220 = vld [vmem:[%s1219] sm:$0xff]
        %v1221 = vmul.f32 %v1220, %v1209
        %1222 = vadd.xlane.f32.xlu0 %v1221
        %v1223 = vpop.xlane.xlu0 %1222
        %v1224 = vsub.f32 %v1218, %v1223
        %v1225 = vmul.f32 %v1224, %v1216
        %vm1226 = vcmask 1047557
        %vm1227 = vmand %vm1207, %vm1226
        %v1228 = vsel %vm1227, %v1225, 0.0
        %v1229 = vadd.f32 %v1220, %v1228
        %s1230 = scalar_lea.vmem %s121, 16 [#allocation1]
        %1231 = vst [vmem:[%s1230] sm:$0xff] %v1229
        %s1232 = scalar_lea.vmem %s113, 24 [#allocation0]
        %v1233 = vld [vmem:[%s1232] sm:$0xff]
        %s1234 = scalar_lea.vmem %s121, 24 [#allocation1]
        %v1235 = vld [vmem:[%s1234] sm:$0xff]
        %v1236 = vmul.f32 %v1235, %v1209
        %1237 = vadd.xlane.f32.xlu0 %v1236
        %v1238 = vpop.xlane.xlu0 %1237
        %v1239 = vsub.f32 %v1233, %v1238
        %v1240 = vmul.f32 %v1239, %v1216
        %v1241 = vsel %vm1207, %v1240, 0.0
        %v1242 = vadd.f32 %v1235, %v1241
        %s1243 = scalar_lea.vmem %s121, 24 [#allocation1]
        %1244 = vst [vmem:[%s1243] sm:$0xff] %v1242
        %vm1245 = vcmask 187568
        %s1246 = scalar_lea.vmem %s121, 22 [#allocation1]
        %v1247 = vld [vmem:[%s1246] ss:$0 sm:$0xff]
        %s1248 = scalar_lea.vmem %s113, 22 [#allocation0]
        %v1249 = vld [vmem:[%s1248] ss:$0 sm:$0xff]
        %v1250 = vmul.f32 %v1247, %v1247
        %1251 = vadd.xlane.f32.xlu0 %v1250
        %v1252 = vpop.xlane.xlu0 %1251
        %v1253 = vsub.f32 %v1249, %v1252
        %v1254 = vrsqrt.pop %v1253
        %s1255 = scalar_lea.vmem %s113, 16 [#allocation0]
        %v1256 = vld [vmem:[%s1255] sm:$0xff]
        %s1257 = scalar_lea.vmem %s121, 16 [#allocation1]
        %v1258 = vld [vmem:[%s1257] sm:$0xff]
        %v1259 = vmul.f32 %v1258, %v1247
        %1260 = vadd.xlane.f32.xlu0 %v1259
        %v1261 = vpop.xlane.xlu0 %1260
        %v1262 = vsub.f32 %v1256, %v1261
        %v1263 = vmul.f32 %v1262, %v1254
        %vm1264 = vcmask 1047558
        %vm1265 = vmand %vm1245, %vm1264
        %v1266 = vsel %vm1265, %v1263, 0.0
        %v1267 = vadd.f32 %v1258, %v1266
        %s1268 = scalar_lea.vmem %s121, 16 [#allocation1]
        %1269 = vst [vmem:[%s1268] sm:$0xff] %v1267
        %s1270 = scalar_lea.vmem %s113, 24 [#allocation0]
        %v1271 = vld [vmem:[%s1270] sm:$0xff]
        %s1272 = scalar_lea.vmem %s121, 24 [#allocation1]
        %v1273 = vld [vmem:[%s1272] sm:$0xff]
        %v1274 = vmul.f32 %v1273, %v1247
        %1275 = vadd.xlane.f32.xlu0 %v1274
        %v1276 = vpop.xlane.xlu0 %1275
        %v1277 = vsub.f32 %v1271, %v1276
        %v1278 = vmul.f32 %v1277, %v1254
        %v1279 = vsel %vm1245, %v1278, 0.0
        %v1280 = vadd.f32 %v1273, %v1279
        %s1281 = scalar_lea.vmem %s121, 24 [#allocation1]
        %1282 = vst [vmem:[%s1281] sm:$0xff] %v1280
        %vm1283 = vcmask 195768
        %s1284 = scalar_lea.vmem %s121, 23 [#allocation1]
        %v1285 = vld [vmem:[%s1284] ss:$0 sm:$0xff]
        %s1286 = scalar_lea.vmem %s113, 23 [#allocation0]
        %v1287 = vld [vmem:[%s1286] ss:$0 sm:$0xff]
        %v1288 = vmul.f32 %v1285, %v1285
        %1289 = vadd.xlane.f32.xlu0 %v1288
        %v1290 = vpop.xlane.xlu0 %1289
        %v1291 = vsub.f32 %v1287, %v1290
        %v1292 = vrsqrt.pop %v1291
        %s1293 = scalar_lea.vmem %s113, 16 [#allocation0]
        %v1294 = vld [vmem:[%s1293] sm:$0xff]
        %s1295 = scalar_lea.vmem %s121, 16 [#allocation1]
        %v1296 = vld [vmem:[%s1295] sm:$0xff]
        %v1297 = vmul.f32 %v1296, %v1285
        %1298 = vadd.xlane.f32.xlu0 %v1297
        %v1299 = vpop.xlane.xlu0 %1298
        %v1300 = vsub.f32 %v1294, %v1299
        %v1301 = vmul.f32 %v1300, %v1292
        %vm1302 = vcmask 1047559
        %vm1303 = vmand %vm1283, %vm1302
        %v1304 = vsel %vm1303, %v1301, 0.0
        %v1305 = vadd.f32 %v1296, %v1304
        %s1306 = scalar_lea.vmem %s121, 16 [#allocation1]
        %1307 = vst [vmem:[%s1306] sm:$0xff] %v1305
        %s1308 = scalar_lea.vmem %s113, 24 [#allocation0]
        %v1309 = vld [vmem:[%s1308] sm:$0xff]
        %s1310 = scalar_lea.vmem %s121, 24 [#allocation1]
        %v1311 = vld [vmem:[%s1310] sm:$0xff]
        %v1312 = vmul.f32 %v1311, %v1285
        %1313 = vadd.xlane.f32.xlu0 %v1312
        %v1314 = vpop.xlane.xlu0 %1313
        %v1315 = vsub.f32 %v1309, %v1314
        %v1316 = vmul.f32 %v1315, %v1292
        %v1317 = vsel %vm1283, %v1316, 0.0
        %v1318 = vadd.f32 %v1311, %v1317
        %s1319 = scalar_lea.vmem %s121, 24 [#allocation1]
        %1320 = vst [vmem:[%s1319] sm:$0xff] %v1318
        %vm1321 = vcmask 203968
        %s1322 = scalar_lea.vmem %s121, 24 [#allocation1]
        %v1323 = vld [vmem:[%s1322] ss:$0 sm:$0xff]
        %s1324 = scalar_lea.vmem %s113, 24 [#allocation0]
        %v1325 = vld [vmem:[%s1324] ss:$0 sm:$0xff]
        %v1326 = vmul.f32 %v1323, %v1323
        %1327 = vadd.xlane.f32.xlu0 %v1326
        %v1328 = vpop.xlane.xlu0 %1327
        %v1329 = vsub.f32 %v1325, %v1328
        %v1330 = vrsqrt.pop %v1329
        %s1331 = scalar_lea.vmem %s113, 24 [#allocation0]
        %v1332 = vld [vmem:[%s1331] sm:$0xff]
        %s1333 = scalar_lea.vmem %s121, 24 [#allocation1]
        %v1334 = vld [vmem:[%s1333] sm:$0xff]
        %v1335 = vmul.f32 %v1334, %v1323
        %1336 = vadd.xlane.f32.xlu0 %v1335
        %v1337 = vpop.xlane.xlu0 %1336
        %v1338 = vsub.f32 %v1332, %v1337
        %v1339 = vmul.f32 %v1338, %v1330
        %v1340 = vsel %vm1321, %v1339, 0.0
        %v1341 = vadd.f32 %v1334, %v1340
        %s1342 = scalar_lea.vmem %s121, 24 [#allocation1]
        %1343 = vst [vmem:[%s1342] sm:$0xff] %v1341
        %vm1344 = vcmask 212168
        %s1345 = scalar_lea.vmem %s121, 25 [#allocation1]
        %v1346 = vld [vmem:[%s1345] ss:$0 sm:$0xff]
        %s1347 = scalar_lea.vmem %s113, 25 [#allocation0]
        %v1348 = vld [vmem:[%s1347] ss:$0 sm:$0xff]
        %v1349 = vmul.f32 %v1346, %v1346
        %1350 = vadd.xlane.f32.xlu0 %v1349
        %v1351 = vpop.xlane.xlu0 %1350
        %v1352 = vsub.f32 %v1348, %v1351
        %v1353 = vrsqrt.pop %v1352
        %s1354 = scalar_lea.vmem %s113, 24 [#allocation0]
        %v1355 = vld [vmem:[%s1354] sm:$0xff]
        %s1356 = scalar_lea.vmem %s121, 24 [#allocation1]
        %v1357 = vld [vmem:[%s1356] sm:$0xff]
        %v1358 = vmul.f32 %v1357, %v1346
        %1359 = vadd.xlane.f32.xlu0 %v1358
        %v1360 = vpop.xlane.xlu0 %1359
        %v1361 = vsub.f32 %v1355, %v1360
        %v1362 = vmul.f32 %v1361, %v1353
        %vm1363 = vcmask 1047553
        %vm1364 = vmand %vm1344, %vm1363
        %v1365 = vsel %vm1364, %v1362, 0.0
        %v1366 = vadd.f32 %v1357, %v1365
        %s1367 = scalar_lea.vmem %s121, 24 [#allocation1]
        %1368 = vst [vmem:[%s1367] sm:$0xff] %v1366
        %vm1369 = vcmask 220368
        %s1370 = scalar_lea.vmem %s121, 26 [#allocation1]
        %v1371 = vld [vmem:[%s1370] ss:$0 sm:$0xff]
        %s1372 = scalar_lea.vmem %s113, 26 [#allocation0]
        %v1373 = vld [vmem:[%s1372] ss:$0 sm:$0xff]
        %v1374 = vmul.f32 %v1371, %v1371
        %1375 = vadd.xlane.f32.xlu0 %v1374
        %v1376 = vpop.xlane.xlu0 %1375
        %v1377 = vsub.f32 %v1373, %v1376
        %v1378 = vrsqrt.pop %v1377
        %s1379 = scalar_lea.vmem %s113, 24 [#allocation0]
        %v1380 = vld [vmem:[%s1379] sm:$0xff]
        %s1381 = scalar_lea.vmem %s121, 24 [#allocation1]
        %v1382 = vld [vmem:[%s1381] sm:$0xff]
        %v1383 = vmul.f32 %v1382, %v1371
        %1384 = vadd.xlane.f32.xlu0 %v1383
        %v1385 = vpop.xlane.xlu0 %1384
        %v1386 = vsub.f32 %v1380, %v1385
        %v1387 = vmul.f32 %v1386, %v1378
        %vm1388 = vcmask 1047554
        %vm1389 = vmand %vm1369, %vm1388
        %v1390 = vsel %vm1389, %v1387, 0.0
        %v1391 = vadd.f32 %v1382, %v1390
        %s1392 = scalar_lea.vmem %s121, 24 [#allocation1]
        %1393 = vst [vmem:[%s1392] sm:$0xff] %v1391
        %s1394 = sand.u32 %s8, 1
        %s1395 = sand.u32 %s8, 1
        %s1396 = smul.addr %s1395, 32
        %s1397 = scalar_lea.vmem [#allocation1], %s1396
        %s1398 = sadd.s32 %s17, %s16
        %s1399 = smul.addr %s15, 4
        %s1400 = sadd.s32 %s1398, %s1399
        %s1401 = smul.addr %s14, 8
        %s1402 = sadd.s32 %s1400, %s1401
        %s1403 = smul.addr %s1402, 8
        %s1404 = scalar_lea.vmem %s1, %s1403
        // Predicated region
        $region55: #{custom-call.13} parent=53 // pred_check
          _
        $region56: #{custom-call.13} parent=53 // pred_check_branch
          %1406 = sbr.rel (0) target = $region58
        $region57: #{custom-call.13} parent=53 // pred_region
          // Predicated region
          $region59: #{custom-call.13} parent=57 // pred_check
            _
          $region60: #{custom-call.13} parent=57 // pred_check_branch
            %1408 = sbr.rel (0) target = $region62
          $region61: #{custom-call.13} parent=57 // pred_region
            // Predicated region
            $region74: #{custom-call.13} parent=61 // pred_check
              _
            $region75: #{custom-call.13} parent=61 // pred_check_branch
              %1429 = sbr.rel (0) target = $region77
            $region76: #{custom-call.13} parent=61 // pred_region
              loop: start=0, step=1, limit=1
              $region78: #{custom-call.13} parent=76 // loop_pre_header
                _
              $region79: #{custom-call.13} parent=76 // loop_header
                %s1431 = sphi 0, %s1435
                %p1432 = scmp.ge.s32.totalorder %s1431, 1
                %s1436 = sphi %s1397, %s1397
                %s1437 = sphi %s1404, %s1404
              $region80: #{custom-call.13} parent=76 // loop_header_branch
                %1434 = sbr.rel (%p1432) target = $region84
              $region81: #{custom-call.13} parent=76 // loop_body
                %v1438 = vld [vmem:[%s1436] sm:$0xff]
                %1439 = vst [vmem:[%s1437] sm:$0xff] %v1438
                %v1440 = vld [vmem:[%s1436 + $0x8] sm:$0xff]
                %1441 = vst [vmem:[%s1437 + $0x8] sm:$0xff] %v1440
                %v1442 = vld [vmem:[%s1436 + $0x10] sm:$0xff]
                %1443 = vst [vmem:[%s1437 + $0x10] sm:$0xff] %v1442
                %v1444 = vld [vmem:[%s1436 + $0x18] sm:$0xff]
                %1445 = vst [vmem:[%s1437 + $0x18] sm:$0xff] %v1444
              $region82: #{custom-call.13} parent=76 // loop_footer
                %s1435 = sadd.s32 1, %s1431
              $region83: #{custom-call.13} parent=76 // loop_footer_branch
                %1430 = sbr.rel target = $region79
              $region84: #{custom-call.13} parent=76 // loop_exit
                _
            $region77: #{custom-call.13} parent=61 // pred_fallthru
              _
            // Predicated region
            $region85: #{custom-call.13} parent=61 // pred_check
              _
            $region86: #{custom-call.13} parent=61 // pred_check_branch
              %1447 = sbr.rel target = $region88
            $region87: #{custom-call.13} parent=61 // pred_region
              _
            $region88: #{custom-call.13} parent=61 // pred_fallthru
              _
          $region62: #{custom-call.13} parent=57 // pred_fallthru
            _
          // Predicated region
          $region63: #{custom-call.13} parent=57 // pred_check
            _
          $region64: #{custom-call.13} parent=57 // pred_check_branch
            %1410 = sbr.rel target = $region66
          $region65: #{custom-call.13} parent=57 // pred_region
            loop: start=0, step=1, limit=1
            $region67: #{custom-call.13} parent=65 // loop_pre_header
              _
            $region68: #{custom-call.13} parent=65 // loop_header
              %s1413 = sphi 0, %s1417
              %p1414 = scmp.ge.s32.totalorder %s1413, 1
              %s1418 = sphi %s1397, %s1397
              %s1419 = sphi %s1404, %s1404
            $region69: #{custom-call.13} parent=65 // loop_header_branch
              %1416 = sbr.rel (%p1414) target = $region73
            $region70: #{custom-call.13} parent=65 // loop_body
              %v1420 = vld [vmem:[%s1418] sm:$0xff]
              %1421 = vst [vmem:[%s1419] sm:$0xff] %v1420
              %v1422 = vld [vmem:[%s1418 + $0x8] sm:$0xff]
              %1423 = vst [vmem:[%s1419 + $0x8] sm:$0xff] %v1422
              %v1424 = vld [vmem:[%s1418 + $0x10] sm:$0xff]
              %1425 = vst [vmem:[%s1419 + $0x10] sm:$0xff] %v1424
              %v1426 = vld [vmem:[%s1418 + $0x18] sm:$0xff]
              %1427 = vst [vmem:[%s1419 + $0x18] sm:$0xff] %v1426
            $region71: #{custom-call.13} parent=65 // loop_footer
              %s1417 = sadd.s32 1, %s1413
            $region72: #{custom-call.13} parent=65 // loop_footer_branch
              %1412 = sbr.rel target = $region68
            $region73: #{custom-call.13} parent=65 // loop_exit
              _
          $region66: #{custom-call.13} parent=57 // pred_fallthru
            _
        $region58: #{custom-call.13} parent=53 // pred_fallthru
          _
        %1448 = vnop
      $region54: #{custom-call.13} parent=5 // pred_fallthru
        _
      %p1449 = scmp.le.s32.totalorder 2, %s3
      // Predicated region
      $region89: #{custom-call.13} parent=5 // pred_check
        %p1450 = pneg %p1449
      $region90: #{custom-call.13} parent=5 // pred_check_branch
        %1452 = sbr.rel (%p1450) target = $region92
      $region91: #{custom-call.13} parent=5 // pred_region
        %s1453 = ssub.s32 %s3, 2
        %s1454 = sand.u32 %s9, 1
        %s1455 = sand.u32 %s9, 1
        %s1456 = smul.addr %s1455, 32
        %s1457 = scalar_lea.vmem [#allocation1], %s1456
      $region92: #{custom-call.13} parent=5 // pred_fallthru
        _
    $region6: #{custom-call.13} parent=1 // loop_footer
      %s7 = sadd.s32 1, %s3
    $region7: #{custom-call.13} parent=1 // loop_footer_branch
      %2 = sbr.rel target = $region3
    $region8: #{custom-call.13} parent=1 // loop_exit
      _

</llo_original>
